<compile_context>
chip_gen: v7x
topology: tpu7x:2x2x1
jax: 0.10.0
libtpu: 0.0.40
codegen_flags: <defaults>
</compile_context>

<pallas_src>
import functools

import jax
import jax.numpy as jnp
from jax import lax
from jax.experimental import pallas as pl
from jax.experimental.pallas import tpu as pltpu

EPS = 1e-5
LANES = 128


# ---------------------------------------------------------------------------
# Fused Pallas kernel: one grid step == one image of the batch.
#   p1_ref  : (1, M2, 9*Cin)  conv1 im2col patches over the padded "virtual" grid
#   xid_ref : (1, Mi, Cin)    strided 1x1-downsample input
#   w1_ref  : (9*Cin, Cpad)   conv1 weights, BN1 scale folded, Cout zero-padded
#   w2_ref  : (9, Cpad, Cpad) conv2 per-tap weights, BN2 scale folded
#   wd_ref  : (Cin, Cpad)     downsample 1x1 weights, BN scale folded
#   b1_ref  : (1, Cpad)       BN1 bias
#   b2d_ref : (1, Cpad)       BN2 bias + downsample-BN bias
#   o_ref   : (1, Mi, Cpad)   relu(conv2 + residual) output (lane-dense)
#   y1p_ref : (Hv, Wv, Cpad)  VMEM scratch holding zero-padded y1 (never in HBM)
# ---------------------------------------------------------------------------
def _basic_block_kernel(p1_ref, xid_ref, w1_ref, w2_ref, wd_ref, b1_ref,
                        b2d_ref, o_ref, y1p_ref, *, ho, wo, hv, wv, log2_wv):
    cpad = w1_ref.shape[1]
    m2 = hv * wv

    # ---- conv1 (+BN1 folded) + ReLU over the virtual (padded) output grid ----
    y1 = jnp.dot(p1_ref[0], w1_ref[...], preferred_element_type=jnp.float32)
    y1 = jnp.maximum(y1 + b1_ref[...], 0.0)

    # Zero the halo border / lane-alignment overhang: these rows become conv2's
    # zero padding.  wv is a power of two, so row -> (ip, jp) is shift/and only.
    row = lax.broadcasted_iota(jnp.int32, (m2, 1), 0)
    ip = row >> log2_wv
    jp = row & (wv - 1)
    interior = (ip >= 1) & (ip <= ho) & (jp >= 1) & (jp <= wo)
    y1 = jnp.where(interior, y1, 0.0)

    # y1 stays resident in VMEM; (M2, Cpad) -> (Hv, Wv, Cpad) is a free
    # leading-dim split (Wv is a multiple of 8).
    y1p_ref[...] = y1.reshape(hv, wv, cpad)

    # ---- residual: 1x1 downsample conv (+BN folded) as its own small dot ----
    acc = jnp.dot(xid_ref[0], wd_ref[...], preferred_element_type=jnp.float32)

    # ---- conv2 (+BN2 folded): nine shifted-tap dots on the VMEM-resident y1 ----
    for t in range(9):
        kh, kw = divmod(t, 3)
        tap = y1p_ref[kh:kh + ho, kw:kw + wo, :].reshape(ho * wo, cpad)
        acc = acc + jnp.dot(tap, w2_ref[t], preferred_element_type=jnp.float32)

    # ---- add biases + final ReLU, lane-dense store ----
    o_ref[0] = jnp.maximum(acc + b2d_ref[...], 0.0)


# ---------------------------------------------------------------------------
# Glue: padding, im2col over the virtual grid, BN folding (plain JAX / Python)
# ---------------------------------------------------------------------------
def _round_up(x, m):
    return (x + m - 1) // m * m


def _pad_axis(x, axis, size):
    pad = size - x.shape[axis]
    if pad <= 0:
        return x
    widths = [(0, 0)] * x.ndim
    widths[axis] = (0, pad)
    return jnp.pad(x, widths)


def _fold_bn(gamma, beta, mean, var):
    scale = gamma * lax.rsqrt(var + EPS)
    bias = beta - mean * scale
    return scale.astype(jnp.float32), bias.astype(jnp.float32)


def _im2col_virtual(x_nhwc, stride, hv, wv):
    """3x3 (pad=1) conv patches for a 'virtual' output grid of (hv, wv).

    Virtual position (ip, jp) corresponds to conv output (ip-1, jp-1); positions
    outside the real output grid produce garbage rows which the kernel masks to
    zero (they become conv2's zero padding).  Patch channel order is (kh,kw,cin),
    matching the (KH,KW,Cin,Cout) weight reshape.
    """
    n, h, w, c = x_nhwc.shape
    s = stride
    pad_b = (hv - 1) * s + 3 - (h + s + 1)
    pad_r = (wv - 1) * s + 3 - (w + s + 1)
    xp = jnp.pad(x_nhwc, ((0, 0), (s + 1, pad_b), (s + 1, pad_r), (0, 0)))
    cols = []
    for kh in range(3):
        for kw in range(3):
            cols.append(xp[:, kh:kh + (hv - 1) * s + 1:s,
                           kw:kw + (wv - 1) * s + 1:s, :])
    patches = jnp.concatenate(cols, axis=-1)          # (N, hv, wv, 9*C)
    return patches.reshape(n, hv * wv, 9 * c)


@functools.partial(jax.jit, static_argnames=("stride",))
def basic_block_forward(x_nchw,
                        conv1_w, bn1_w, bn1_b, bn1_m, bn1_v,
                        conv2_w, bn2_w, bn2_b, bn2_m, bn2_v,
                        ds_w, dsbn_w, dsbn_b, dsbn_m, dsbn_v,
                        stride=1):
    n, cin, h, w = x_nchw.shape
    cout = conv1_w.shape[0]
    cpad = _round_up(cout, LANES)
    s = stride

    ho = (h + 2 - 3) // s + 1
    wo = (w + 2 - 3) // s + 1
    hv = ho + 2
    wv = 8
    while wv < wo + 2:                     # power-of-two width of padded grid
        wv *= 2
    mi = ho * wo
    m2 = hv * wv

    x = jnp.transpose(x_nchw, (0, 2, 3, 1)).astype(jnp.float32)   # NHWC

    # ---- fold BN (running stats) into per-channel scale/bias ----
    s1, b1 = _fold_bn(bn1_w, bn1_b, bn1_m, bn1_v)
    s2, b2 = _fold_bn(bn2_w, bn2_b, bn2_m, bn2_v)
    sd, bd = _fold_bn(dsbn_w, dsbn_b, dsbn_m, dsbn_v)

    # conv1 weights (KH,KW,Cin,Cout), BN1 scale folded, Cout zero-padded to 128.
    w1 = jnp.transpose(conv1_w, (2, 3, 1, 0)).reshape(9 * cin, cout) * s1[None, :]
    w1 = _pad_axis(w1, 1, cpad).astype(jnp.float32)
    b1p = _pad_axis(b1.reshape(1, cout), 1, cpad)

    # conv2 per-tap weights (9, Cin2, Cout), BN2 scale folded, both dims padded.
    w2 = jnp.transpose(conv2_w, (2, 3, 1, 0)).reshape(9, cout, cout) * s2[None, None, :]
    w2 = _pad_axis(_pad_axis(w2, 1, cpad), 2, cpad).astype(jnp.float32)

    # downsample 1x1 weights, BN scale folded; combined bias b2 + bd.
    wd = jnp.transpose(ds_w[:, :, 0, 0], (1, 0)) * sd[None, :]
    wd = _pad_axis(wd, 1, cpad).astype(jnp.float32)
    b2d = _pad_axis((b2 + bd).reshape(1, cout), 1, cpad)

    # Small XLA-side inputs (scale with Cin=3, not Cout).
    p1 = _im2col_virtual(x, s, hv, wv)                          # (N, M2, 9*Cin)
    xid = x[:, ::s, ::s, :][:, :ho, :wo, :].reshape(n, mi, cin)  # (N, Mi, Cin)

    kernel = functools.partial(_basic_block_kernel, ho=ho, wo=wo, hv=hv, wv=wv,
                               log2_wv=wv.bit_length() - 1)

    out = pl.pallas_call(
        kernel,
        out_shape=jax.ShapeDtypeStruct((n, mi, cpad), jnp.float32),
        grid=(n,),
        in_specs=[
            pl.BlockSpec((1, m2, 9 * cin), lambda i: (i, 0, 0)),   # p1
            pl.BlockSpec((1, mi, cin), lambda i: (i, 0, 0)),       # xid
            pl.BlockSpec((9 * cin, cpad), lambda i: (0, 0)),       # w1 (resident)
            pl.BlockSpec((9, cpad, cpad), lambda i: (0, 0, 0)),    # w2 (resident)
            pl.BlockSpec((cin, cpad), lambda i: (0, 0)),           # wd (resident)
            pl.BlockSpec((1, cpad), lambda i: (0, 0)),             # b1 (resident)
            pl.BlockSpec((1, cpad), lambda i: (0, 0)),             # b2+bd
        ],
        out_specs=pl.BlockSpec((1, mi, cpad), lambda i: (i, 0, 0)),
        scratch_shapes=[pltpu.VMEM((hv, wv, cpad), jnp.float32)],
        compiler_params=pltpu.CompilerParams(
            dimension_semantics=("parallel",),
            vmem_limit_bytes=48 * 1024 * 1024),
    )(p1, xid, w1, w2, wd, b1p, b2d)

    # Single final pass: strip channel padding + NCHW transpose (required format).
    out = out[:, :, :cout].reshape(n, ho, wo, cout)
    return jnp.transpose(out, (0, 3, 1, 2))


# ---------------------------------------------------------------------------
# Pure-JAX reference (independent of the kernel path)
# ---------------------------------------------------------------------------
def _reference(x, conv1_w, bn1, conv2_w, bn2, ds_w, dsbn, stride):
    def conv(x, w, s, p):
        return lax.conv_general_dilated(
            x, w, (s, s), [(p, p), (p, p)],
            dimension_numbers=("NCHW", "OIHW", "NCHW"))

    def bn(y, params):
        g, b, m, v = params
        return ((y - m[None, :, None, None])
                * lax.rsqrt(v[None, :, None, None] + EPS)
                * g[None, :, None, None] + b[None, :, None, None])

    out = jax.nn.relu(bn(conv(x, conv1_w, stride, 1), bn1))
    out = bn(conv(out, conv2_w, 1, 1), bn2)
    ident = bn(conv(x, ds_w, stride, 0), dsbn)
    return jax.nn.relu(out + ident)


# ---------------------------------------------------------------------------
if __name__ == "__main__":
    in_channels, out_channels, stride = 3, 64, 1
    N, H, W = 2, 16, 16

    keys = jax.random.split(jax.random.PRNGKey(0), 8)
    f32 = jnp.float32

    x = jax.random.normal(keys[0], (N, in_channels, H, W), f32)

    conv1_w = 0.10 * jax.random.normal(keys[1], (out_channels, in_channels, 3, 3), f32)
    conv2_w = 0.05 * jax.random.normal(keys[2], (out_channels, out_channels, 3, 3), f32)
    ds_w    = 0.10 * jax.random.normal(keys[3], (out_channels, in_channels, 1, 1), f32)

    def bn_params(k):
        ka, kb, kc, kd = jax.random.split(k, 4)
        gamma = 1.0 + 0.1 * jax.random.normal(ka, (out_channels,), f32)
        beta = 0.1 * jax.random.normal(kb, (out_channels,), f32)
        mean = 0.05 * jax.random.normal(kc, (out_channels,), f32)
        var = jax.random.uniform(kd, (out_channels,), f32, 0.5, 1.5)
        return gamma, beta, mean, var

    bn1 = bn_params(keys[4])
    bn2 = bn_params(keys[5])
    dsbn = bn_params(keys[6])

    out = basic_block_forward(
        x,
        conv1_w, *bn1,
        conv2_w, *bn2,
        ds_w, *dsbn,
        stride=stride)
    out = jax.block_until_ready(out)

    ref = _reference(x, conv1_w, bn1, conv2_w, bn2, ds_w, dsbn, stride)
    ref = jax.block_until_ready(ref)

    assert out.shape == (N, out_channels, H // stride, W // stride), out.shape
    err = float(jnp.max(jnp.abs(out - ref)))
    assert jnp.allclose(out, ref, atol=2e-3, rtol=2e-3), err
    print("KERNEL_OK")
</pallas_src>

<mosaic_0001>
module attributes {stable_mosaic.version = 11 : i64} {
  func.func @_basic_block_kernel(%arg0: i32, %arg1: memref<1x576x27xf32, #tpu.memory_space<vmem>>, %arg2: memref<1x256x3xf32, #tpu.memory_space<vmem>>, %arg3: memref<27x128xf32, #tpu.memory_space<vmem>>, %arg4: memref<9x128x128xf32, #tpu.memory_space<vmem>>, %arg5: memref<3x128xf32, #tpu.memory_space<vmem>>, %arg6: memref<1x128xf32, #tpu.memory_space<vmem>>, %arg7: memref<1x128xf32, #tpu.memory_space<vmem>>, %arg8: memref<1x256x128xf32, #tpu.memory_space<vmem>>, %arg9: memref<18x32x128xf32, #tpu.memory_space<vmem>>) attributes {dimension_semantics = [#tpu.dimension_semantics<parallel>], iteration_bounds = array<i64: 2>, scalar_prefetch = 0 : i64, scratch_operands = 1 : i64, tpu.core_type = #tpu.core_type<tc>, window_params = [{transform_indices = @transform_0, window_bounds = array<i64: 1, 576, 27>}, {transform_indices = @transform_1, window_bounds = array<i64: 1, 256, 3>}, {pipeline_mode = #tpu.pipeline_mode<synchronous>, transform_indices = @transform_2, window_bounds = array<i64: 27, 128>}, {pipeline_mode = #tpu.pipeline_mode<synchronous>, transform_indices = @transform_3, window_bounds = array<i64: 9, 128, 128>}, {pipeline_mode = #tpu.pipeline_mode<synchronous>, transform_indices = @transform_4, window_bounds = array<i64: 3, 128>}, {pipeline_mode = #tpu.pipeline_mode<synchronous>, transform_indices = @transform_5, window_bounds = array<i64: 1, 128>}, {pipeline_mode = #tpu.pipeline_mode<synchronous>, transform_indices = @transform_6, window_bounds = array<i64: 1, 128>}, {transform_indices = @transform_7, window_bounds = array<i64: 1, 256, 128>}]} {
    %c0 = arith.constant 0 : index
    %c0_0 = arith.constant 0 : index
    %c0_1 = arith.constant 0 : index
    %0 = vector.load %arg1[%c0, %c0_0, %c0_1] : memref<1x576x27xf32, #tpu.memory_space<vmem>>, vector<1x576x27xf32>
    %1 = vector.shape_cast %0 : vector<1x576x27xf32> to vector<576x27xf32>
    %c0_2 = arith.constant 0 : index
    %c0_3 = arith.constant 0 : index
    %2 = vector.load %arg3[%c0_2, %c0_3] : memref<27x128xf32, #tpu.memory_space<vmem>>, vector<27x128xf32>
    %cst = arith.constant dense<0.000000e+00> : vector<576x128xf32>
    %3 = tpu.matmul %1, %2, %cst {dimension_numbers = #tpu.dot_dimension_numbers<[1], [0], [0], [1], [0, 0, 1, 1], [], []>} : vector<576x27xf32>, vector<27x128xf32>, vector<576x128xf32> -> vector<576x128xf32>
    %c0_4 = arith.constant 0 : index
    %c0_5 = arith.constant 0 : index
    %4 = vector.load %arg6[%c0_4, %c0_5] : memref<1x128xf32, #tpu.memory_space<vmem>>, vector<1x128xf32>
    %5 = vector.broadcast %4 : vector<1x128xf32> to vector<576x128xf32>
    %6 = arith.addf %3, %5 : vector<576x128xf32>
    %cst_6 = arith.constant 0.000000e+00 : f32
    %7 = vector.broadcast %cst_6 : f32 to vector<576x128xf32>
    %8 = arith.maximumf %6, %7 : vector<576x128xf32>
    %9 = tpu.iota {dimensions = array<i32: 0>} : vector<576x1xi32>
    %c5_i32 = arith.constant 5 : i32
    %10 = vector.broadcast %c5_i32 : i32 to vector<576x1xi32>
    %11 = arith.shrsi %9, %10 : vector<576x1xi32>
    %c31_i32 = arith.constant 31 : i32
    %12 = vector.broadcast %c31_i32 : i32 to vector<576x1xi32>
    %13 = arith.andi %9, %12 : vector<576x1xi32>
    %c1_i32 = arith.constant 1 : i32
    %14 = vector.broadcast %c1_i32 : i32 to vector<576x1xi32>
    %15 = arith.cmpi sge, %11, %14 : vector<576x1xi32>
    %c16_i32 = arith.constant 16 : i32
    %16 = vector.broadcast %c16_i32 : i32 to vector<576x1xi32>
    %17 = arith.cmpi sle, %11, %16 : vector<576x1xi32>
    %18 = arith.andi %15, %17 : vector<576x1xi1>
    %c1_i32_7 = arith.constant 1 : i32
    %19 = vector.broadcast %c1_i32_7 : i32 to vector<576x1xi32>
    %20 = arith.cmpi sge, %13, %19 : vector<576x1xi32>
    %21 = arith.andi %18, %20 : vector<576x1xi1>
    %c16_i32_8 = arith.constant 16 : i32
    %22 = vector.broadcast %c16_i32_8 : i32 to vector<576x1xi32>
    %23 = arith.cmpi sle, %13, %22 : vector<576x1xi32>
    %24 = arith.andi %21, %23 : vector<576x1xi1>
    %cst_9 = arith.constant 0.000000e+00 : f32
    %25 = vector.shape_cast %24 : vector<576x1xi1> to vector<576x1xi1>
    %26 = vector.broadcast %25 : vector<576x1xi1> to vector<576x128xi1>
    %27 = vector.broadcast %cst_9 : f32 to vector<576x128xf32>
    %28 = arith.select %26, %8, %27 : vector<576x128xi1>, vector<576x128xf32>
    %29 = vector.shape_cast %28 : vector<576x128xf32> to vector<18x32x128xf32>
    %c0_10 = arith.constant 0 : index
    %c0_11 = arith.constant 0 : index
    %c0_12 = arith.constant 0 : index
    %30 = vector.load %arg9[%c0_10, %c0_11, %c0_12] : memref<18x32x128xf32, #tpu.memory_space<vmem>>, vector<18x32x128xf32>
    tpu.vector_store %arg9[%c0_10, %c0_11, %c0_12], %29 {strides = array<i32>} : memref<18x32x128xf32, #tpu.memory_space<vmem>>, vector<18x32x128xf32>,
    %c0_13 = arith.constant 0 : index
    %c0_14 = arith.constant 0 : index
    %c0_15 = arith.constant 0 : index
    %31 = vector.load %arg2[%c0_13, %c0_14, %c0_15] : memref<1x256x3xf32, #tpu.memory_space<vmem>>, vector<1x256x3xf32>
    %32 = vector.shape_cast %31 : vector<1x256x3xf32> to vector<256x3xf32>
    %c0_16 = arith.constant 0 : index
    %c0_17 = arith.constant 0 : index
    %33 = vector.load %arg5[%c0_16, %c0_17] : memref<3x128xf32, #tpu.memory_space<vmem>>, vector<3x128xf32>
    %cst_18 = arith.constant dense<0.000000e+00> : vector<256x128xf32>
    %34 = tpu.matmul %32, %33, %cst_18 {dimension_numbers = #tpu.dot_dimension_numbers<[1], [0], [0], [1], [0, 0, 1, 1], [], []>} : vector<256x3xf32>, vector<3x128xf32>, vector<256x128xf32> -> vector<256x128xf32>
    %c0_19 = arith.constant 0 : index
    %c0_20 = arith.constant 0 : index
    %c0_21 = arith.constant 0 : index
    %35 = vector.load %arg9[%c0_19, %c0_20, %c0_21] : memref<18x32x128xf32, #tpu.memory_space<vmem>>, vector<16x16x128xf32>
    %36 = vector.shape_cast %35 : vector<16x16x128xf32> to vector<256x128xf32>
    %c0_22 = arith.constant 0 : index
    %c0_23 = arith.constant 0 : index
    %c0_24 = arith.constant 0 : index
    %37 = vector.load %arg4[%c0_22, %c0_23, %c0_24] : memref<9x128x128xf32, #tpu.memory_space<vmem>>, vector<1x128x128xf32>
    %38 = vector.shape_cast %37 : vector<1x128x128xf32> to vector<128x128xf32>
    %cst_25 = arith.constant dense<0.000000e+00> : vector<256x128xf32>
    %39 = tpu.matmul %36, %38, %cst_25 {dimension_numbers = #tpu.dot_dimension_numbers<[1], [0], [0], [1], [0, 0, 1, 1], [], []>} : vector<256x128xf32>, vector<128x128xf32>, vector<256x128xf32> -> vector<256x128xf32>
    %40 = arith.addf %34, %39 : vector<256x128xf32>
    %c0_26 = arith.constant 0 : index
    %c1 = arith.constant 1 : index
    %c0_27 = arith.constant 0 : index
    %41 = vector.load %arg9[%c0_26, %c1, %c0_27] : memref<18x32x128xf32, #tpu.memory_space<vmem>>, vector<16x16x128xf32>
    %42 = vector.shape_cast %41 : vector<16x16x128xf32> to vector<256x128xf32>
    %c1_28 = arith.constant 1 : index
    %c0_29 = arith.constant 0 : index
    %c0_30 = arith.constant 0 : index
    %43 = vector.load %arg4[%c1_28, %c0_29, %c0_30] : memref<9x128x128xf32, #tpu.memory_space<vmem>>, vector<1x128x128xf32>
    %44 = vector.shape_cast %43 : vector<1x128x128xf32> to vector<128x128xf32>
    %cst_31 = arith.constant dense<0.000000e+00> : vector<256x128xf32>
    %45 = tpu.matmul %42, %44, %cst_31 {dimension_numbers = #tpu.dot_dimension_numbers<[1], [0], [0], [1], [0, 0, 1, 1], [], []>} : vector<256x128xf32>, vector<128x128xf32>, vector<256x128xf32> -> vector<256x128xf32>
    %46 = arith.addf %40, %45 : vector<256x128xf32>
    %c0_32 = arith.constant 0 : index
    %c2 = arith.constant 2 : index
    %c0_33 = arith.constant 0 : index
    %47 = vector.load %arg9[%c0_32, %c2, %c0_33] : memref<18x32x128xf32, #tpu.memory_space<vmem>>, vector<16x16x128xf32>
    %48 = vector.shape_cast %47 : vector<16x16x128xf32> to vector<256x128xf32>
    %c2_34 = arith.constant 2 : index
    %c0_35 = arith.constant 0 : index
    %c0_36 = arith.constant 0 : index
    %49 = vector.load %arg4[%c2_34, %c0_35, %c0_36] : memref<9x128x128xf32, #tpu.memory_space<vmem>>, vector<1x128x128xf32>
    %50 = vector.shape_cast %49 : vector<1x128x128xf32> to vector<128x128xf32>
    %cst_37 = arith.constant dense<0.000000e+00> : vector<256x128xf32>
    %51 = tpu.matmul %48, %50, %cst_37 {dimension_numbers = #tpu.dot_dimension_numbers<[1], [0], [0], [1], [0, 0, 1, 1], [], []>} : vector<256x128xf32>, vector<128x128xf32>, vector<256x128xf32> -> vector<256x128xf32>
    %52 = arith.addf %46, %51 : vector<256x128xf32>
    %c1_38 = arith.constant 1 : index
    %c0_39 = arith.constant 0 : index
    %c0_40 = arith.constant 0 : index
    %53 = vector.load %arg9[%c1_38, %c0_39, %c0_40] : memref<18x32x128xf32, #tpu.memory_space<vmem>>, vector<16x16x128xf32>
    %54 = vector.shape_cast %53 : vector<16x16x128xf32> to vector<256x128xf32>
    %c3 = arith.constant 3 : index
    %c0_41 = arith.constant 0 : index
    %c0_42 = arith.constant 0 : index
    %55 = vector.load %arg4[%c3, %c0_41, %c0_42] : memref<9x128x128xf32, #tpu.memory_space<vmem>>, vector<1x128x128xf32>
    %56 = vector.shape_cast %55 : vector<1x128x128xf32> to vector<128x128xf32>
    %cst_43 = arith.constant dense<0.000000e+00> : vector<256x128xf32>
    %57 = tpu.matmul %54, %56, %cst_43 {dimension_numbers = #tpu.dot_dimension_numbers<[1], [0], [0], [1], [0, 0, 1, 1], [], []>} : vector<256x128xf32>, vector<128x128xf32>, vector<256x128xf32> -> vector<256x128xf32>
    %58 = arith.addf %52, %57 : vector<256x128xf32>
    %c1_44 = arith.constant 1 : index
    %c1_45 = arith.constant 1 : index
    %c0_46 = arith.constant 0 : index
    %59 = vector.load %arg9[%c1_44, %c1_45, %c0_46] : memref<18x32x128xf32, #tpu.memory_space<vmem>>, vector<16x16x128xf32>
    %60 = vector.shape_cast %59 : vector<16x16x128xf32> to vector<256x128xf32>
    %c4 = arith.constant 4 : index
    %c0_47 = arith.constant 0 : index
    %c0_48 = arith.constant 0 : index
    %61 = vector.load %arg4[%c4, %c0_47, %c0_48] : memref<9x128x128xf32, #tpu.memory_space<vmem>>, vector<1x128x128xf32>
    %62 = vector.shape_cast %61 : vector<1x128x128xf32> to vector<128x128xf32>
    %cst_49 = arith.constant dense<0.000000e+00> : vector<256x128xf32>
    %63 = tpu.matmul %60, %62, %cst_49 {dimension_numbers = #tpu.dot_dimension_numbers<[1], [0], [0], [1], [0, 0, 1, 1], [], []>} : vector<256x128xf32>, vector<128x128xf32>, vector<256x128xf32> -> vector<256x128xf32>
    %64 = arith.addf %58, %63 : vector<256x128xf32>
    %c1_50 = arith.constant 1 : index
    %c2_51 = arith.constant 2 : index
    %c0_52 = arith.constant 0 : index
    %65 = vector.load %arg9[%c1_50, %c2_51, %c0_52] : memref<18x32x128xf32, #tpu.memory_space<vmem>>, vector<16x16x128xf32>
    %66 = vector.shape_cast %65 : vector<16x16x128xf32> to vector<256x128xf32>
    %c5 = arith.constant 5 : index
    %c0_53 = arith.constant 0 : index
    %c0_54 = arith.constant 0 : index
    %67 = vector.load %arg4[%c5, %c0_53, %c0_54] : memref<9x128x128xf32, #tpu.memory_space<vmem>>, vector<1x128x128xf32>
    %68 = vector.shape_cast %67 : vector<1x128x128xf32> to vector<128x128xf32>
    %cst_55 = arith.constant dense<0.000000e+00> : vector<256x128xf32>
    %69 = tpu.matmul %66, %68, %cst_55 {dimension_numbers = #tpu.dot_dimension_numbers<[1], [0], [0], [1], [0, 0, 1, 1], [], []>} : vector<256x128xf32>, vector<128x128xf32>, vector<256x128xf32> -> vector<256x128xf32>
    %70 = arith.addf %64, %69 : vector<256x128xf32>
    %c2_56 = arith.constant 2 : index
    %c0_57 = arith.constant 0 : index
    %c0_58 = arith.constant 0 : index
    %71 = vector.load %arg9[%c2_56, %c0_57, %c0_58] : memref<18x32x128xf32, #tpu.memory_space<vmem>>, vector<16x16x128xf32>
    %72 = vector.shape_cast %71 : vector<16x16x128xf32> to vector<256x128xf32>
    %c6 = arith.constant 6 : index
    %c0_59 = arith.constant 0 : index
    %c0_60 = arith.constant 0 : index
    %73 = vector.load %arg4[%c6, %c0_59, %c0_60] : memref<9x128x128xf32, #tpu.memory_space<vmem>>, vector<1x128x128xf32>
    %74 = vector.shape_cast %73 : vector<1x128x128xf32> to vector<128x128xf32>
    %cst_61 = arith.constant dense<0.000000e+00> : vector<256x128xf32>
    %75 = tpu.matmul %72, %74, %cst_61 {dimension_numbers = #tpu.dot_dimension_numbers<[1], [0], [0], [1], [0, 0, 1, 1], [], []>} : vector<256x128xf32>, vector<128x128xf32>, vector<256x128xf32> -> vector<256x128xf32>
    %76 = arith.addf %70, %75 : vector<256x128xf32>
    %c2_62 = arith.constant 2 : index
    %c1_63 = arith.constant 1 : index
    %c0_64 = arith.constant 0 : index
    %77 = vector.load %arg9[%c2_62, %c1_63, %c0_64] : memref<18x32x128xf32, #tpu.memory_space<vmem>>, vector<16x16x128xf32>
    %78 = vector.shape_cast %77 : vector<16x16x128xf32> to vector<256x128xf32>
    %c7 = arith.constant 7 : index
    %c0_65 = arith.constant 0 : index
    %c0_66 = arith.constant 0 : index
    %79 = vector.load %arg4[%c7, %c0_65, %c0_66] : memref<9x128x128xf32, #tpu.memory_space<vmem>>, vector<1x128x128xf32>
    %80 = vector.shape_cast %79 : vector<1x128x128xf32> to vector<128x128xf32>
    %cst_67 = arith.constant dense<0.000000e+00> : vector<256x128xf32>
    %81 = tpu.matmul %78, %80, %cst_67 {dimension_numbers = #tpu.dot_dimension_numbers<[1], [0], [0], [1], [0, 0, 1, 1], [], []>} : vector<256x128xf32>, vector<128x128xf32>, vector<256x128xf32> -> vector<256x128xf32>
    %82 = arith.addf %76, %81 : vector<256x128xf32>
    %c2_68 = arith.constant 2 : index
    %c2_69 = arith.constant 2 : index
    %c0_70 = arith.constant 0 : index
    %83 = vector.load %arg9[%c2_68, %c2_69, %c0_70] : memref<18x32x128xf32, #tpu.memory_space<vmem>>, vector<16x16x128xf32>
    %84 = vector.shape_cast %83 : vector<16x16x128xf32> to vector<256x128xf32>
    %c8 = arith.constant 8 : index
    %c0_71 = arith.constant 0 : index
    %c0_72 = arith.constant 0 : index
    %85 = vector.load %arg4[%c8, %c0_71, %c0_72] : memref<9x128x128xf32, #tpu.memory_space<vmem>>, vector<1x128x128xf32>
    %86 = vector.shape_cast %85 : vector<1x128x128xf32> to vector<128x128xf32>
    %cst_73 = arith.constant dense<0.000000e+00> : vector<256x128xf32>
    %87 = tpu.matmul %84, %86, %cst_73 {dimension_numbers = #tpu.dot_dimension_numbers<[1], [0], [0], [1], [0, 0, 1, 1], [], []>} : vector<256x128xf32>, vector<128x128xf32>, vector<256x128xf32> -> vector<256x128xf32>
    %88 = arith.addf %82, %87 : vector<256x128xf32>
    %c0_74 = arith.constant 0 : index
    %c0_75 = arith.constant 0 : index
    %89 = vector.load %arg7[%c0_74, %c0_75] : memref<1x128xf32, #tpu.memory_space<vmem>>, vector<1x128xf32>
    %90 = vector.broadcast %89 : vector<1x128xf32> to vector<256x128xf32>
    %91 = arith.addf %88, %90 : vector<256x128xf32>
    %cst_76 = arith.constant 0.000000e+00 : f32
    %92 = vector.broadcast %cst_76 : f32 to vector<256x128xf32>
    %93 = arith.maximumf %91, %92 : vector<256x128xf32>
    %c0_77 = arith.constant 0 : index
    %c0_78 = arith.constant 0 : index
    %c0_79 = arith.constant 0 : index
    %94 = vector.load %arg8[%c0_77, %c0_78, %c0_79] : memref<1x256x128xf32, #tpu.memory_space<vmem>>, vector<1x256x128xf32>
    %95 = vector.shape_cast %94 : vector<1x256x128xf32> to vector<256x128xf32>
    %96 = vector.shape_cast %93 : vector<256x128xf32> to vector<1x256x128xf32>
    tpu.vector_store %arg8[%c0_77, %c0_78, %c0_79], %96 {strides = array<i32>} : memref<1x256x128xf32, #tpu.memory_space<vmem>>, vector<1x256x128xf32>,
    return
  }
  func.func @transform_0(%arg0: i32) -> (i32, i32, i32) {
    %c0_i32 = arith.constant 0 : i32
    %c0_i32_0 = arith.constant 0 : i32
    %c0_i32_1 = arith.constant 0 : i32
    return %arg0, %c0_i32, %c0_i32_0 : i32, i32, i32
  }
  func.func @transform_1(%arg0: i32) -> (i32, i32, i32) {
    %c0_i32 = arith.constant 0 : i32
    %c0_i32_0 = arith.constant 0 : i32
    %c0_i32_1 = arith.constant 0 : i32
    return %arg0, %c0_i32, %c0_i32_0 : i32, i32, i32
  }
  func.func @transform_2(%arg0: i32) -> (i32, i32) {
    %c0_i32 = arith.constant 0 : i32
    %c0_i32_0 = arith.constant 0 : i32
    %c0_i32_1 = arith.constant 0 : i32
    return %c0_i32, %c0_i32_0 : i32, i32
  }
  func.func @transform_3(%arg0: i32) -> (i32, i32, i32) {
    %c0_i32 = arith.constant 0 : i32
    %c0_i32_0 = arith.constant 0 : i32
    %c0_i32_1 = arith.constant 0 : i32
    %c0_i32_2 = arith.constant 0 : i32
    return %c0_i32, %c0_i32_0, %c0_i32_1 : i32, i32, i32
  }
  func.func @transform_4(%arg0: i32) -> (i32, i32) {
    %c0_i32 = arith.constant 0 : i32
    %c0_i32_0 = arith.constant 0 : i32
    %c0_i32_1 = arith.constant 0 : i32
    return %c0_i32, %c0_i32_0 : i32, i32
  }
  func.func @transform_5(%arg0: i32) -> (i32, i32) {
    %c0_i32 = arith.constant 0 : i32
    %c0_i32_0 = arith.constant 0 : i32
    %c0_i32_1 = arith.constant 0 : i32
    return %c0_i32, %c0_i32_0 : i32, i32
  }
  func.func @transform_6(%arg0: i32) -> (i32, i32) {
    %c0_i32 = arith.constant 0 : i32
    %c0_i32_0 = arith.constant 0 : i32
    %c0_i32_1 = arith.constant 0 : i32
    return %c0_i32, %c0_i32_0 : i32, i32
  }
  func.func @transform_7(%arg0: i32) -> (i32, i32, i32) {
    %c0_i32 = arith.constant 0 : i32
    %c0_i32_0 = arith.constant 0 : i32
    %c0_i32_1 = arith.constant 0 : i32
    return %arg0, %c0_i32, %c0_i32_0 : i32, i32, i32
  }
}

</mosaic_0001>

<llo_original>
// kernel: basic_block_forward.1
$region0: #{basic_block_forward.1}
  #allocation0 [shape = 'u32[]', space=smem, size = 0x4, offset = 0x4, fixed_abs, tag = 'smem constant byte address 0x4 - core index']
  #allocation1 [shape = 'u32[144,128]{1,0:T(1,128)}', space=vmem, size = 0x12000, scoped, tag = 'internal scratch']
  #allocation2 [shape = 'f32[18,32,128]{2,1,0:T(8,128)}', space=vmem, size = 0x48000, scoped, tag = 'scratch operand']
  %s0 = inlined_call_operand.vmem [shape: f32[2,576,27], index: 0, kind: input, shape index: {}]
  %s1 = inlined_call_operand.vmem [shape: f32[2,256,3], index: 1, kind: input, shape index: {}]
  %s2 = inlined_call_operand.vmem [shape: f32[27,128], index: 2, kind: input, shape index: {}]
  %s3 = inlined_call_operand.vmem [shape: f32[9,128,128], index: 3, kind: input, shape index: {}]
  %s4 = inlined_call_operand.vmem [shape: f32[3,128], index: 4, kind: input, shape index: {}]
  %s5 = inlined_call_operand.vmem [shape: f32[1,128], index: 5, kind: input, shape index: {}]
  %s6 = inlined_call_operand.vmem [shape: f32[1,128], index: 6, kind: input, shape index: {}]
  %s7 = inlined_call_operand.hbm [shape: f32[2,256,128], index: 7, kind: output, shape index: {}]
  %s8 = sld [smem:[#allocation0]]
  $region61: #{basic_block_forward.1} parent=0
    _
  %s10 = ssub.s32 1, %s8
  %s11 = scalar_select 0, %s10, %s8
  $region1: #{basic_block_forward.1} parent=0
    #allocation3 [shape = 'u8[262144]{0}', space=vmem, size = 0x40000, scoped, tag = 'output window, operand 0']
    #allocation4 [shape = 's32[2]{0}', space=sflag, size = 0x8, scoped, tag = 'scoped memory for basic_block_forward.1']
    %12 = vsyncpa [#allocation4], 0
    %s13 = scalar_lea.sflag [#allocation4], 1
    %14 = vsyncpa %s13, 0
    loop: start=0, step=1, limit=4
    $region2: #{basic_block_forward.1} parent=1 // loop_pre_header
      _
    $region3: #{basic_block_forward.1} parent=1 // loop_header
      %s16 = sphi 0, %s20
      %p17 = scmp.ge.s32.totalorder %s16, 4
      %s26 = sphi 0, %s28
      %s29 = sphi 0, %s26
      %s30 = sphi 0, %s29
      %s46 = sphi 0, %s30
      %s52 = sphi 0, %s54
      %s55 = sphi 0, %s52
      %s56 = sphi 0, %s55
      %s72 = sphi 0, %s56
      %s76 = sphi 0, %s76
      %s78 = sphi 0, %s76
      %s79 = sphi 0, %s78
      %s93 = sphi 0, %s79
      %s97 = sphi 0, %s97
      %s99 = sphi 0, %s97
      %s100 = sphi 0, %s99
      %s114 = sphi 0, %s100
      %s118 = sphi 0, %s118
      %s120 = sphi 0, %s118
      %s121 = sphi 0, %s120
      %s135 = sphi 0, %s121
      %s139 = sphi 0, %s139
      %s141 = sphi 0, %s139
      %s142 = sphi 0, %s141
      %s156 = sphi 0, %s142
      %s160 = sphi 0, %s160
      %s162 = sphi 0, %s160
      %s163 = sphi 0, %s162
      %s177 = sphi 0, %s163
      %s183 = sphi 0, %s185
      %s186 = sphi 0, %s183
      %s187 = sphi 0, %s186
      %s203 = sphi 0, %s187
    $region4: #{basic_block_forward.1} parent=1 // loop_header_branch
      %19 = sbr.rel (%p17) target = $region8
    $region5: #{basic_block_forward.1} parent=1 // loop_body
      %s21 = ssub.s32 %s16, 1
      %s22 = ssub.s32 %s16, 2
      %s23 = sadd.s32 %s16, 1
      %s24 = ssub.s32 %s16, %s23
      %p25 = scmp.eq.s32.totalorder %s24, 0
      %s27 = sadd.s32 %s26, 1
      %s28 = scalar_select %p25, %s26, %s27
      %p31 = pneg %p25
      %p32 = scmp.eq.s32.totalorder %s16, 1
      %p33 = por %p31, %p32
      %p34 = scmp.ne.s32.totalorder %s26, %s29
      %p35 = scmp.eq.s32.totalorder %s16, 0
      %p36 = por %p34, %p35
      %p37 = scmp.ne.s32.totalorder %s26, %s29
      %p38 = scmp.eq.s32.totalorder %s21, 1
      %p39 = por %p37, %p38
      %p40 = scmp.ne.s32.totalorder %s29, %s30
      %p41 = scmp.eq.s32.totalorder %s21, 0
      %p42 = por %p40, %p41
      %p43 = scmp.ne.s32.totalorder %s29, %s30
      %p44 = scmp.eq.s32.totalorder %s22, 1
      %p45 = por %p43, %p44
      %p47 = scmp.ne.s32.totalorder %s30, %s46
      %p48 = scmp.eq.s32.totalorder %s22, 0
      %p49 = por %p47, %p48
      %s50 = ssub.s32 %s16, %s23
      %p51 = scmp.eq.s32.totalorder %s50, 0
      %s53 = sadd.s32 %s52, 1
      %s54 = scalar_select %p51, %s52, %s53
      %p57 = pneg %p51
      %p58 = scmp.eq.s32.totalorder %s16, 1
      %p59 = por %p57, %p58
      %p60 = scmp.ne.s32.totalorder %s52, %s55
      %p61 = scmp.eq.s32.totalorder %s16, 0
      %p62 = por %p60, %p61
      %p63 = scmp.ne.s32.totalorder %s52, %s55
      %p64 = scmp.eq.s32.totalorder %s21, 1
      %p65 = por %p63, %p64
      %p66 = scmp.ne.s32.totalorder %s55, %s56
      %p67 = scmp.eq.s32.totalorder %s21, 0
      %p68 = por %p66, %p67
      %p69 = scmp.ne.s32.totalorder %s55, %s56
      %p70 = scmp.eq.s32.totalorder %s22, 1
      %p71 = por %p69, %p70
      %p73 = scmp.ne.s32.totalorder %s56, %s72
      %p74 = scmp.eq.s32.totalorder %s22, 0
      %p75 = por %p73, %p74
      %s77 = sadd.s32 %s76, 1
      %p80 = scmp.eq.s32.totalorder %s16, 1
      %p81 = scmp.ne.s32.totalorder %s76, %s78
      %p82 = scmp.eq.s32.totalorder %s16, 0
      %p83 = por %p81, %p82
      %p84 = scmp.ne.s32.totalorder %s76, %s78
      %p85 = scmp.eq.s32.totalorder %s21, 1
      %p86 = por %p84, %p85
      %p87 = scmp.ne.s32.totalorder %s78, %s79
      %p88 = scmp.eq.s32.totalorder %s21, 0
      %p89 = por %p87, %p88
      %p90 = scmp.ne.s32.totalorder %s78, %s79
      %p91 = scmp.eq.s32.totalorder %s22, 1
      %p92 = por %p90, %p91
      %p94 = scmp.ne.s32.totalorder %s79, %s93
      %p95 = scmp.eq.s32.totalorder %s22, 0
      %p96 = por %p94, %p95
      %s98 = sadd.s32 %s97, 1
      %p101 = scmp.eq.s32.totalorder %s16, 1
      %p102 = scmp.ne.s32.totalorder %s97, %s99
      %p103 = scmp.eq.s32.totalorder %s16, 0
      %p104 = por %p102, %p103
      %p105 = scmp.ne.s32.totalorder %s97, %s99
      %p106 = scmp.eq.s32.totalorder %s21, 1
      %p107 = por %p105, %p106
      %p108 = scmp.ne.s32.totalorder %s99, %s100
      %p109 = scmp.eq.s32.totalorder %s21, 0
      %p110 = por %p108, %p109
      %p111 = scmp.ne.s32.totalorder %s99, %s100
      %p112 = scmp.eq.s32.totalorder %s22, 1
      %p113 = por %p111, %p112
      %p115 = scmp.ne.s32.totalorder %s100, %s114
      %p116 = scmp.eq.s32.totalorder %s22, 0
      %p117 = por %p115, %p116
      %s119 = sadd.s32 %s118, 1
      %p122 = scmp.eq.s32.totalorder %s16, 1
      %p123 = scmp.ne.s32.totalorder %s118, %s120
      %p124 = scmp.eq.s32.totalorder %s16, 0
      %p125 = por %p123, %p124
      %p126 = scmp.ne.s32.totalorder %s118, %s120
      %p127 = scmp.eq.s32.totalorder %s21, 1
      %p128 = por %p126, %p127
      %p129 = scmp.ne.s32.totalorder %s120, %s121
      %p130 = scmp.eq.s32.totalorder %s21, 0
      %p131 = por %p129, %p130
      %p132 = scmp.ne.s32.totalorder %s120, %s121
      %p133 = scmp.eq.s32.totalorder %s22, 1
      %p134 = por %p132, %p133
      %p136 = scmp.ne.s32.totalorder %s121, %s135
      %p137 = scmp.eq.s32.totalorder %s22, 0
      %p138 = por %p136, %p137
      %s140 = sadd.s32 %s139, 1
      %p143 = scmp.eq.s32.totalorder %s16, 1
      %p144 = scmp.ne.s32.totalorder %s139, %s141
      %p145 = scmp.eq.s32.totalorder %s16, 0
      %p146 = por %p144, %p145
      %p147 = scmp.ne.s32.totalorder %s139, %s141
      %p148 = scmp.eq.s32.totalorder %s21, 1
      %p149 = por %p147, %p148
      %p150 = scmp.ne.s32.totalorder %s141, %s142
      %p151 = scmp.eq.s32.totalorder %s21, 0
      %p152 = por %p150, %p151
      %p153 = scmp.ne.s32.totalorder %s141, %s142
      %p154 = scmp.eq.s32.totalorder %s22, 1
      %p155 = por %p153, %p154
      %p157 = scmp.ne.s32.totalorder %s142, %s156
      %p158 = scmp.eq.s32.totalorder %s22, 0
      %p159 = por %p157, %p158
      %s161 = sadd.s32 %s160, 1
      %p164 = scmp.eq.s32.totalorder %s16, 1
      %p165 = scmp.ne.s32.totalorder %s160, %s162
      %p166 = scmp.eq.s32.totalorder %s16, 0
      %p167 = por %p165, %p166
      %p168 = scmp.ne.s32.totalorder %s160, %s162
      %p169 = scmp.eq.s32.totalorder %s21, 1
      %p170 = por %p168, %p169
      %p171 = scmp.ne.s32.totalorder %s162, %s163
      %p172 = scmp.eq.s32.totalorder %s21, 0
      %p173 = por %p171, %p172
      %p174 = scmp.ne.s32.totalorder %s162, %s163
      %p175 = scmp.eq.s32.totalorder %s22, 1
      %p176 = por %p174, %p175
      %p178 = scmp.ne.s32.totalorder %s163, %s177
      %p179 = scmp.eq.s32.totalorder %s22, 0
      %p180 = por %p178, %p179
      %s181 = ssub.s32 %s16, %s23
      %p182 = scmp.eq.s32.totalorder %s181, 0
      %s184 = sadd.s32 %s183, 1
      %s185 = scalar_select %p182, %s183, %s184
      %p188 = pneg %p182
      %p189 = scmp.eq.s32.totalorder %s16, 1
      %p190 = por %p188, %p189
      %p191 = scmp.ne.s32.totalorder %s183, %s186
      %p192 = scmp.eq.s32.totalorder %s16, 0
      %p193 = por %p191, %p192
      %p194 = scmp.ne.s32.totalorder %s183, %s186
      %p195 = scmp.eq.s32.totalorder %s21, 1
      %p196 = por %p194, %p195
      %p197 = scmp.ne.s32.totalorder %s186, %s187
      %p198 = scmp.eq.s32.totalorder %s21, 0
      %p199 = por %p197, %p198
      %p200 = scmp.ne.s32.totalorder %s186, %s187
      %p201 = scmp.eq.s32.totalorder %s22, 1
      %p202 = por %p200, %p201
      %p204 = scmp.ne.s32.totalorder %s187, %s203
      %p205 = scmp.eq.s32.totalorder %s22, 0
      %p206 = por %p204, %p205
      %p207 = scmp.le.s32.totalorder 1, %s16
      %p208 = scmp.lt.s32.totalorder %s16, 3
      %p209 = pnand %p207, %p208
      %p210 = pneg %p209
      // Predicated region
      $region9: #{basic_block_forward.1} parent=5 // pred_check
        _
      $region10: #{basic_block_forward.1} parent=5 // pred_check_branch
        %212 = sbr.rel (%p209) target = $region12
      $region11: #{basic_block_forward.1} parent=5 // pred_region
        %s213 = ssub.s32 %s16, 1
        // Predicated region
        $region13: #{basic_block_forward.1} parent=11 // pred_check
          %p214 = pneg %p89
        $region14: #{basic_block_forward.1} parent=11 // pred_check_branch
          %216 = sbr.rel (%p214) target = $region16
        $region15: #{basic_block_forward.1} parent=11 // pred_region
          _
        $region16: #{basic_block_forward.1} parent=11 // pred_fallthru
          _
        // Predicated region
        $region17: #{basic_block_forward.1} parent=11 // pred_check
          %p217 = pneg %p110
        $region18: #{basic_block_forward.1} parent=11 // pred_check_branch
          %219 = sbr.rel (%p217) target = $region20
        $region19: #{basic_block_forward.1} parent=11 // pred_region
          _
        $region20: #{basic_block_forward.1} parent=11 // pred_fallthru
          _
        // Predicated region
        $region21: #{basic_block_forward.1} parent=11 // pred_check
          %p220 = pneg %p131
        $region22: #{basic_block_forward.1} parent=11 // pred_check_branch
          %222 = sbr.rel (%p220) target = $region24
        $region23: #{basic_block_forward.1} parent=11 // pred_region
          _
        $region24: #{basic_block_forward.1} parent=11 // pred_fallthru
          _
        // Predicated region
        $region25: #{basic_block_forward.1} parent=11 // pred_check
          %p223 = pneg %p152
        $region26: #{basic_block_forward.1} parent=11 // pred_check_branch
          %225 = sbr.rel (%p223) target = $region28
        $region27: #{basic_block_forward.1} parent=11 // pred_region
          _
        $region28: #{basic_block_forward.1} parent=11 // pred_fallthru
          _
        // Predicated region
        $region29: #{basic_block_forward.1} parent=11 // pred_check
          %p226 = pneg %p173
        $region30: #{basic_block_forward.1} parent=11 // pred_check_branch
          %228 = sbr.rel (%p226) target = $region32
        $region31: #{basic_block_forward.1} parent=11 // pred_region
          _
        $region32: #{basic_block_forward.1} parent=11 // pred_fallthru
          _
      $region12: #{basic_block_forward.1} parent=5 // pred_fallthru
        _
      %p229 = scmp.lt.s32.totalorder %s16, 2
      // Predicated region
      $region33: #{basic_block_forward.1} parent=5 // pred_check
        %p230 = pneg %p229
      $region34: #{basic_block_forward.1} parent=5 // pred_check_branch
        %232 = sbr.rel (%p230) target = $region36
      $region35: #{basic_block_forward.1} parent=5 // pred_region
        // Predicated region
        $region37: #{basic_block_forward.1} parent=35 // pred_check
          %p233 = pneg %p36
        $region38: #{basic_block_forward.1} parent=35 // pred_check_branch
          %235 = sbr.rel (%p233) target = $region40
        $region39: #{basic_block_forward.1} parent=35 // pred_region
          %p236 = scmp.lt.s32.totalorder %s16, 1
          %s237 = scalar_select %p236, %s16, 1
          %s238 = smul.addr %s237, 72
          %s239 = smul.addr %s238, 8
          %s240 = scalar_lea.vmem %s0, %s239
        $region40: #{basic_block_forward.1} parent=35 // pred_fallthru
          _
        // Predicated region
        $region41: #{basic_block_forward.1} parent=35 // pred_check
          %p241 = pneg %p62
        $region42: #{basic_block_forward.1} parent=35 // pred_check_branch
          %243 = sbr.rel (%p241) target = $region44
        $region43: #{basic_block_forward.1} parent=35 // pred_region
          %p244 = scmp.lt.s32.totalorder %s16, 1
          %s245 = scalar_select %p244, %s16, 1
          %s246 = smul.addr %s245, 32
          %s247 = smul.addr %s246, 8
          %s248 = scalar_lea.vmem %s1, %s247
        $region44: #{basic_block_forward.1} parent=35 // pred_fallthru
          _
      $region36: #{basic_block_forward.1} parent=5 // pred_fallthru
        _
      %p249 = scmp.le.s32.totalorder 1, %s16
      %p250 = scmp.lt.s32.totalorder %s16, 3
      %p251 = pnand %p249, %p250
      %p252 = pneg %p251
      // Predicated region
      $region45: #{basic_block_forward.1} parent=5 // pred_check
        _
      $region46: #{basic_block_forward.1} parent=5 // pred_check_branch
        %254 = sbr.rel (%p251) target = $region48
      $region47: #{basic_block_forward.1} parent=5 // pred_region
        %s255 = ssub.s32 %s16, 1
        %p256 = scmp.lt.s32.totalorder %s21, 1
        %s257 = scalar_select %p256, %s21, 1
        %s258 = smul.addr %s257, 72
        %s259 = smul.addr %s258, 8
        %s260 = scalar_lea.vmem %s0, %s259
        %p261 = pneg %p42
        %p262 = pneg %p39
        %p263 = scmp.lt.s32.totalorder %s21, 1
        %s264 = scalar_select %p263, %s21, 1
        %s265 = smul.addr %s264, 32
        %s266 = smul.addr %s265, 8
        %s267 = scalar_lea.vmem %s1, %s266
        %p268 = pneg %p68
        %p269 = pneg %p65
        %p270 = pneg %p89
        %p271 = pneg %p86
        %p272 = pneg %p110
        %p273 = pneg %p107
        %p274 = pneg %p131
        %p275 = pneg %p128
        %p276 = pneg %p152
        %p277 = pneg %p149
        %p278 = pneg %p173
        %p279 = pneg %p170
        %p280 = pneg %p199
        %p281 = pneg %p196
        %s282 = sand.u32 %s186, 1
        %s283 = scalar_lea.sflag [#allocation4], %s282
        %s284 = sand.u32 %s186, 1
        %s285 = smul.addr %s284, 256
        %s286 = scalar_lea.vmem [#allocation3], %s285
        %p287 = scmp.lt.s32.totalorder %s21, 1
        %s288 = scalar_select %p287, %s21, 1
        %s289 = smul.addr %s288, 72
        %s290 = smul.addr %s289, 8
        %s291 = scalar_lea.vmem %s0, %s290
        %p292 = scmp.lt.s32.totalorder %s21, 1
        %s293 = scalar_select %p292, %s21, 1
        %s294 = smul.addr %s293, 32
        %s295 = smul.addr %s294, 8
        %s296 = scalar_lea.vmem %s1, %s295
        %v297 = vld [vmem:[%s291] sm:$0xff]
        %v298 = vld [vmem:[%s291 + $0x8] sm:$0xff]
        %v299 = vld [vmem:[%s291 + $0x10] sm:$0xff]
        %v300 = vld [vmem:[%s291 + $0x18] sm:$0xff]
        %v301 = vld [vmem:[%s291 + $0x20] sm:$0xff]
        %v302 = vld [vmem:[%s291 + $0x28] sm:$0xff]
        %v303 = vld [vmem:[%s291 + $0x30] sm:$0xff]
        %v304 = vld [vmem:[%s291 + $0x38] sm:$0xff]
        %v305 = vld [vmem:[%s291 + $0x40] sm:$0xff]
        %v306 = vld [vmem:[%s291 + $0x48] sm:$0xff]
        %v307 = vld [vmem:[%s291 + $0x50] sm:$0xff]
        %v308 = vld [vmem:[%s291 + $0x58] sm:$0xff]
        %v309 = vld [vmem:[%s291 + $0x60] sm:$0xff]
        %v310 = vld [vmem:[%s291 + $0x68] sm:$0xff]
        %v311 = vld [vmem:[%s291 + $0x70] sm:$0xff]
        %v312 = vld [vmem:[%s291 + $0x78] sm:$0xff]
        %v313 = vld [vmem:[%s291 + $0x80] sm:$0xff]
        %v314 = vld [vmem:[%s291 + $0x88] sm:$0xff]
        %v315 = vld [vmem:[%s291 + $0x90] sm:$0xff]
        %v316 = vld [vmem:[%s291 + $0x98] sm:$0xff]
        %v317 = vld [vmem:[%s291 + $0xa0] sm:$0xff]
        %v318 = vld [vmem:[%s291 + $0xa8] sm:$0xff]
        %v319 = vld [vmem:[%s291 + $0xb0] sm:$0xff]
        %v320 = vld [vmem:[%s291 + $0xb8] sm:$0xff]
        %v321 = vld [vmem:[%s291 + $0xc0] sm:$0xff]
        %v322 = vld [vmem:[%s291 + $0xc8] sm:$0xff]
        %v323 = vld [vmem:[%s291 + $0xd0] sm:$0xff]
        %v324 = vld [vmem:[%s291 + $0xd8] sm:$0xff]
        %v325 = vld [vmem:[%s291 + $0xe0] sm:$0xff]
        %v326 = vld [vmem:[%s291 + $0xe8] sm:$0xff]
        %v327 = vld [vmem:[%s291 + $0xf0] sm:$0xff]
        %v328 = vld [vmem:[%s291 + $0xf8] sm:$0xff]
        %v329 = vld [vmem:[%s291 + $0x100] sm:$0xff]
        %v330 = vld [vmem:[%s291 + $0x108] sm:$0xff]
        %v331 = vld [vmem:[%s291 + $0x110] sm:$0xff]
        %v332 = vld [vmem:[%s291 + $0x118] sm:$0xff]
        %v333 = vld [vmem:[%s291 + $0x120] sm:$0xff]
        %v334 = vld [vmem:[%s291 + $0x128] sm:$0xff]
        %v335 = vld [vmem:[%s291 + $0x130] sm:$0xff]
        %v336 = vld [vmem:[%s291 + $0x138] sm:$0xff]
        %v337 = vld [vmem:[%s291 + $0x140] sm:$0xff]
        %v338 = vld [vmem:[%s291 + $0x148] sm:$0xff]
        %v339 = vld [vmem:[%s291 + $0x150] sm:$0xff]
        %v340 = vld [vmem:[%s291 + $0x158] sm:$0xff]
        %v341 = vld [vmem:[%s291 + $0x160] sm:$0xff]
        %v342 = vld [vmem:[%s291 + $0x168] sm:$0xff]
        %v343 = vld [vmem:[%s291 + $0x170] sm:$0xff]
        %v344 = vld [vmem:[%s291 + $0x178] sm:$0xff]
        %v345 = vld [vmem:[%s291 + $0x180] sm:$0xff]
        %v346 = vld [vmem:[%s291 + $0x188] sm:$0xff]
        %v347 = vld [vmem:[%s291 + $0x190] sm:$0xff]
        %v348 = vld [vmem:[%s291 + $0x198] sm:$0xff]
        %v349 = vld [vmem:[%s291 + $0x1a0] sm:$0xff]
        %v350 = vld [vmem:[%s291 + $0x1a8] sm:$0xff]
        %v351 = vld [vmem:[%s291 + $0x1b0] sm:$0xff]
        %v352 = vld [vmem:[%s291 + $0x1b8] sm:$0xff]
        %v353 = vld [vmem:[%s291 + $0x1c0] sm:$0xff]
        %v354 = vld [vmem:[%s291 + $0x1c8] sm:$0xff]
        %v355 = vld [vmem:[%s291 + $0x1d0] sm:$0xff]
        %v356 = vld [vmem:[%s291 + $0x1d8] sm:$0xff]
        %v357 = vld [vmem:[%s291 + $0x1e0] sm:$0xff]
        %v358 = vld [vmem:[%s291 + $0x1e8] sm:$0xff]
        %v359 = vld [vmem:[%s291 + $0x1f0] sm:$0xff]
        %v360 = vld [vmem:[%s291 + $0x1f8] sm:$0xff]
        %v361 = vld [vmem:[%s291 + $0x200] sm:$0xff]
        %v362 = vld [vmem:[%s291 + $0x208] sm:$0xff]
        %v363 = vld [vmem:[%s291 + $0x210] sm:$0xff]
        %v364 = vld [vmem:[%s291 + $0x218] sm:$0xff]
        %v365 = vld [vmem:[%s291 + $0x220] sm:$0xff]
        %v366 = vld [vmem:[%s291 + $0x228] sm:$0xff]
        %v367 = vld [vmem:[%s291 + $0x230] sm:$0xff]
        %v368 = vld [vmem:[%s291 + $0x238] sm:$0xff]
        %v369 = vld [vmem:[%s2] sm:$0xff]
        %v370 = vld [vmem:[%s2 + $0x8] sm:$0xff]
        %v371 = vld [vmem:[%s2 + $0x10] sm:$0xff]
        %v372 = vld [vmem:[%s2 + $0x18] sm:$0x7]
        %v373 = vld [vmem:[%s5] sm:$0x1]
        %v375 = vlaneseq
        %v376 = vshrl.u32 %v375, 7
        %v377 = vsub.s32 0, %v376
        %v378 = vrot.slane %v373, %v377
        %vm380 = vcmask 220160
        %v382 = vsel %vm380, %v297, 0
        %v385 = vsel %vm380, %v298, 0
        %v388 = vsel %vm380, %v299, 0
        %v391 = vsel %vm380, %v300, 0
        %v394 = vsel %vm380, %v301, 0
        %v397 = vsel %vm380, %v302, 0
        %v400 = vsel %vm380, %v303, 0
        %v403 = vsel %vm380, %v304, 0
        %v406 = vsel %vm380, %v305, 0
        %v409 = vsel %vm380, %v306, 0
        %v412 = vsel %vm380, %v307, 0
        %v415 = vsel %vm380, %v308, 0
        %v418 = vsel %vm380, %v309, 0
        %v421 = vsel %vm380, %v310, 0
        %v424 = vsel %vm380, %v311, 0
        %v427 = vsel %vm380, %v312, 0
        %v430 = vsel %vm380, %v313, 0
        %v433 = vsel %vm380, %v314, 0
        %v436 = vsel %vm380, %v315, 0
        %v439 = vsel %vm380, %v316, 0
        %v442 = vsel %vm380, %v317, 0
        %v445 = vsel %vm380, %v318, 0
        %v448 = vsel %vm380, %v319, 0
        %v451 = vsel %vm380, %v320, 0
        %v454 = vsel %vm380, %v321, 0
        %v457 = vsel %vm380, %v322, 0
        %v460 = vsel %vm380, %v323, 0
        %v463 = vsel %vm380, %v324, 0
        %v466 = vsel %vm380, %v325, 0
        %v469 = vsel %vm380, %v326, 0
        %v472 = vsel %vm380, %v327, 0
        %v475 = vsel %vm380, %v328, 0
        %v478 = vsel %vm380, %v329, 0
        %v481 = vsel %vm380, %v330, 0
        %v484 = vsel %vm380, %v331, 0
        %v487 = vsel %vm380, %v332, 0
        %v490 = vsel %vm380, %v333, 0
        %v493 = vsel %vm380, %v334, 0
        %v496 = vsel %vm380, %v335, 0
        %v499 = vsel %vm380, %v336, 0
        %v502 = vsel %vm380, %v337, 0
        %v505 = vsel %vm380, %v338, 0
        %v508 = vsel %vm380, %v339, 0
        %v511 = vsel %vm380, %v340, 0
        %v514 = vsel %vm380, %v341, 0
        %v517 = vsel %vm380, %v342, 0
        %v520 = vsel %vm380, %v343, 0
        %v523 = vsel %vm380, %v344, 0
        %v526 = vsel %vm380, %v345, 0
        %v529 = vsel %vm380, %v346, 0
        %v532 = vsel %vm380, %v347, 0
        %v535 = vsel %vm380, %v348, 0
        %v538 = vsel %vm380, %v349, 0
        %v541 = vsel %vm380, %v350, 0
        %v544 = vsel %vm380, %v351, 0
        %v547 = vsel %vm380, %v352, 0
        %v550 = vsel %vm380, %v353, 0
        %v553 = vsel %vm380, %v354, 0
        %v556 = vsel %vm380, %v355, 0
        %v559 = vsel %vm380, %v356, 0
        %v562 = vsel %vm380, %v357, 0
        %v565 = vsel %vm380, %v358, 0
        %v568 = vsel %vm380, %v359, 0
        %v571 = vsel %vm380, %v360, 0
        %v574 = vsel %vm380, %v361, 0
        %v577 = vsel %vm380, %v362, 0
        %v580 = vsel %vm380, %v363, 0
        %v583 = vsel %vm380, %v364, 0
        %v586 = vsel %vm380, %v365, 0
        %v589 = vsel %vm380, %v366, 0
        %v592 = vsel %vm380, %v367, 0
        %v595 = vsel %vm380, %v368, 0
        %vm597 = vcmask 1042432
        %v599 = vsel %vm597, %v372, 0
        %601 = vmatprep.subr.mxu0 0.0
        %602 = vmatpush1.msra.mxu0 %v369
        %603 = vmatprep.subr.mxu0 0.0
        %604 = vmatpush1.msra.mxu0 %v370
        %605 = vmatprep.subr.mxu0 0.0
        %606 = vmatpush1.msra.mxu0 %v371
        %607 = vmatprep.subr.mxu0 0.0
        %608 = vmatpush1.msra.mxu0 %v599
        %609 = vmatprep.subr.mxu0 0.0
        %610 = vmatpush1.msra.mxu0 0.0
        %611 = vmatprep.subr.mxu0 0.0
        %612 = vmatpush1.msra.mxu0 0.0
        %613 = vmatprep.subr.mxu0 0.0
        %614 = vmatpush1.msra.mxu0 0.0
        %615 = vmatprep.subr.mxu0 0.0
        %616 = vmatpush1.msra.mxu0 0.0
        %617 = vmatprep.subr.mxu0 0.0
        %618 = vmatpush1.msra.mxu0 0.0
        %619 = vmatprep.subr.mxu0 0.0
        %620 = vmatpush1.msra.mxu0 0.0
        %621 = vmatprep.subr.mxu0 0.0
        %622 = vmatpush1.msra.mxu0 0.0
        %623 = vmatprep.subr.mxu0 0.0
        %624 = vmatpush1.msra.mxu0 0.0
        %625 = vmatprep.subr.mxu0 0.0
        %626 = vmatpush1.msra.mxu0 0.0
        %627 = vmatprep.subr.mxu0 0.0
        %628 = vmatpush1.msra.mxu0 0.0
        %629 = vmatprep.subr.mxu0 0.0
        %630 = vmatpush1.msra.mxu0 0.0
        %631 = vmatprep.subr.mxu0 0.0
        %632 = vmatpush1.msra.mxu0 0.0
        %633 = vmatprep.subr.mxu0 0.0
        %634 = vmatpush1.msra.mxu0 0.0
        %635 = vmatprep.subr.mxu0 0.0
        %636 = vmatpush1.msra.mxu0 0.0
        %637 = vmatprep.subr.mxu0 0.0
        %638 = vmatpush1.msra.mxu0 0.0
        %639 = vmatprep.subr.mxu0 0.0
        %640 = vmatpush1.msra.mxu0 0.0
        %641 = vmatprep.subr.mxu0 0.0
        %642 = vmatpush1.msra.mxu0 0.0
        %643 = vmatprep.subr.mxu0 0.0
        %644 = vmatpush1.msra.mxu0 0.0
        %645 = vmatprep.subr.mxu0 0.0
        %646 = vmatpush1.msra.mxu0 0.0
        %647 = vmatprep.subr.mxu0 0.0
        %648 = vmatpush1.msra.mxu0 0.0
        %649 = vmatprep.subr.mxu0 0.0
        %650 = vmatpush1.msra.mxu0 0.0
        %651 = vmatprep.subr.mxu0 0.0
        %652 = vmatpush1.msra.mxu0 0.0
        %653 = vmatprep.subr.mxu0 0.0
        %654 = vmatpush1.msra.mxu0 0.0
        %655 = vmatprep.subr.mxu0 0.0
        %656 = vmatpush1.msra.mxu0 0.0
        %657 = vmatprep.subr.mxu0 0.0
        %658 = vmatpush1.msra.mxu0 0.0
        %659 = vmatprep.subr.mxu0 0.0
        %660 = vmatpush1.msra.mxu0 0.0
        %661 = vmatprep.subr.mxu0 0.0
        %662 = vmatpush1.msra.mxu0 0.0
        %663 = vmatprep.subr.mxu0 0.0
        %664 = vmatpush1.msra.mxu0 0.0
        %665 = vmatprep.mubr.f32.mxu0 0.0
        %666 = vmatmul.mubr.f32.gmra.mrb[0].mxu0 %v382
        %v667 = vpop.f32.mrb[0].mxu0
        %v668 = vadd.f32 %v378, %v667
        %v669 = vpop.f32.mrb[0].mxu0
        %670 = vmatprep.mubr.f32.mxu0 0.0
        %671 = vmatmul.mubr.f32.gmra.mrb[0].mxu0 %v385
        %v672 = vpop.f32.mrb[0].mxu0
        %v673 = vadd.f32 %v378, %v672
        %v674 = vpop.f32.mrb[0].mxu0
        %675 = vmatprep.mubr.f32.mxu0 0.0
        %676 = vmatmul.mubr.f32.gmra.mrb[0].mxu0 %v388
        %v677 = vpop.f32.mrb[0].mxu0
        %v678 = vadd.f32 %v378, %v677
        %v679 = vpop.f32.mrb[0].mxu0
        %680 = vmatprep.mubr.f32.mxu0 0.0
        %681 = vmatmul.mubr.f32.gmra.mrb[0].mxu0 %v391
        %v682 = vpop.f32.mrb[0].mxu0
        %v683 = vadd.f32 %v378, %v682
        %v684 = vpop.f32.mrb[0].mxu0
        %685 = vmatprep.mubr.f32.mxu0 0.0
        %686 = vmatmul.mubr.f32.gmra.mrb[0].mxu0 %v394
        %v687 = vpop.f32.mrb[0].mxu0
        %v688 = vadd.f32 %v378, %v687
        %v689 = vpop.f32.mrb[0].mxu0
        %690 = vmatprep.mubr.f32.mxu0 0.0
        %691 = vmatmul.mubr.f32.gmra.mrb[0].mxu0 %v397
        %v692 = vpop.f32.mrb[0].mxu0
        %v693 = vadd.f32 %v378, %v692
        %v694 = vpop.f32.mrb[0].mxu0
        %695 = vmatprep.mubr.f32.mxu0 0.0
        %696 = vmatmul.mubr.f32.gmra.mrb[0].mxu0 %v400
        %v697 = vpop.f32.mrb[0].mxu0
        %v698 = vadd.f32 %v378, %v697
        %v699 = vpop.f32.mrb[0].mxu0
        %700 = vmatprep.mubr.f32.mxu0 0.0
        %701 = vmatmul.mubr.f32.gmra.mrb[0].mxu0 %v403
        %v702 = vpop.f32.mrb[0].mxu0
        %v703 = vadd.f32 %v378, %v702
        %v704 = vpop.f32.mrb[0].mxu0
        %705 = vmatprep.mubr.f32.mxu0 0.0
        %706 = vmatmul.mubr.f32.gmra.mrb[0].mxu0 %v406
        %v707 = vpop.f32.mrb[0].mxu0
        %v708 = vadd.f32 %v378, %v707
        %v709 = vpop.f32.mrb[0].mxu0
        %710 = vmatprep.mubr.f32.mxu0 0.0
        %711 = vmatmul.mubr.f32.gmra.mrb[0].mxu0 %v409
        %v712 = vpop.f32.mrb[0].mxu0
        %v713 = vadd.f32 %v378, %v712
        %v714 = vpop.f32.mrb[0].mxu0
        %715 = vmatprep.mubr.f32.mxu0 0.0
        %716 = vmatmul.mubr.f32.gmra.mrb[0].mxu0 %v412
        %v717 = vpop.f32.mrb[0].mxu0
        %v718 = vadd.f32 %v378, %v717
        %v719 = vpop.f32.mrb[0].mxu0
        %720 = vmatprep.mubr.f32.mxu0 0.0
        %721 = vmatmul.mubr.f32.gmra.mrb[0].mxu0 %v415
        %v722 = vpop.f32.mrb[0].mxu0
        %v723 = vadd.f32 %v378, %v722
        %v724 = vpop.f32.mrb[0].mxu0
        %725 = vmatprep.mubr.f32.mxu0 0.0
        %726 = vmatmul.mubr.f32.gmra.mrb[0].mxu0 %v418
        %v727 = vpop.f32.mrb[0].mxu0
        %v728 = vadd.f32 %v378, %v727
        %v729 = vpop.f32.mrb[0].mxu0
        %730 = vmatprep.mubr.f32.mxu0 0.0
        %731 = vmatmul.mubr.f32.gmra.mrb[0].mxu0 %v421
        %v732 = vpop.f32.mrb[0].mxu0
        %v733 = vadd.f32 %v378, %v732
        %v734 = vpop.f32.mrb[0].mxu0
        %735 = vmatprep.mubr.f32.mxu0 0.0
        %736 = vmatmul.mubr.f32.gmra.mrb[0].mxu0 %v424
        %v737 = vpop.f32.mrb[0].mxu0
        %v738 = vadd.f32 %v378, %v737
        %v739 = vpop.f32.mrb[0].mxu0
        %740 = vmatprep.mubr.f32.mxu0 0.0
        %741 = vmatmul.mubr.f32.gmra.mrb[0].mxu0 %v427
        %v742 = vpop.f32.mrb[0].mxu0
        %v743 = vadd.f32 %v378, %v742
        %v744 = vpop.f32.mrb[0].mxu0
        %745 = vmatprep.mubr.f32.mxu0 0.0
        %746 = vmatmul.mubr.f32.gmra.mrb[0].mxu0 %v430
        %v747 = vpop.f32.mrb[0].mxu0
        %v748 = vadd.f32 %v378, %v747
        %v749 = vpop.f32.mrb[0].mxu0
        %750 = vmatprep.mubr.f32.mxu0 0.0
        %751 = vmatmul.mubr.f32.gmra.mrb[0].mxu0 %v433
        %v752 = vpop.f32.mrb[0].mxu0
        %v753 = vadd.f32 %v378, %v752
        %v754 = vpop.f32.mrb[0].mxu0
        %755 = vmatprep.mubr.f32.mxu0 0.0
        %756 = vmatmul.mubr.f32.gmra.mrb[0].mxu0 %v436
        %v757 = vpop.f32.mrb[0].mxu0
        %v758 = vadd.f32 %v378, %v757
        %v759 = vpop.f32.mrb[0].mxu0
        %760 = vmatprep.mubr.f32.mxu0 0.0
        %761 = vmatmul.mubr.f32.gmra.mrb[0].mxu0 %v439
        %v762 = vpop.f32.mrb[0].mxu0
        %v763 = vadd.f32 %v378, %v762
        %v764 = vpop.f32.mrb[0].mxu0
        %765 = vmatprep.mubr.f32.mxu0 0.0
        %766 = vmatmul.mubr.f32.gmra.mrb[0].mxu0 %v442
        %v767 = vpop.f32.mrb[0].mxu0
        %v768 = vadd.f32 %v378, %v767
        %v769 = vpop.f32.mrb[0].mxu0
        %770 = vmatprep.mubr.f32.mxu0 0.0
        %771 = vmatmul.mubr.f32.gmra.mrb[0].mxu0 %v445
        %v772 = vpop.f32.mrb[0].mxu0
        %v773 = vadd.f32 %v378, %v772
        %v774 = vpop.f32.mrb[0].mxu0
        %775 = vmatprep.mubr.f32.mxu0 0.0
        %776 = vmatmul.mubr.f32.gmra.mrb[0].mxu0 %v448
        %v777 = vpop.f32.mrb[0].mxu0
        %v778 = vadd.f32 %v378, %v777
        %v779 = vpop.f32.mrb[0].mxu0
        %780 = vmatprep.mubr.f32.mxu0 0.0
        %781 = vmatmul.mubr.f32.gmra.mrb[0].mxu0 %v451
        %v782 = vpop.f32.mrb[0].mxu0
        %v783 = vadd.f32 %v378, %v782
        %v784 = vpop.f32.mrb[0].mxu0
        %785 = vmatprep.mubr.f32.mxu0 0.0
        %786 = vmatmul.mubr.f32.gmra.mrb[0].mxu0 %v454
        %v787 = vpop.f32.mrb[0].mxu0
        %v788 = vadd.f32 %v378, %v787
        %v789 = vpop.f32.mrb[0].mxu0
        %790 = vmatprep.mubr.f32.mxu0 0.0
        %791 = vmatmul.mubr.f32.gmra.mrb[0].mxu0 %v457
        %v792 = vpop.f32.mrb[0].mxu0
        %v793 = vadd.f32 %v378, %v792
        %v794 = vpop.f32.mrb[0].mxu0
        %795 = vmatprep.mubr.f32.mxu0 0.0
        %796 = vmatmul.mubr.f32.gmra.mrb[0].mxu0 %v460
        %v797 = vpop.f32.mrb[0].mxu0
        %v798 = vadd.f32 %v378, %v797
        %v799 = vpop.f32.mrb[0].mxu0
        %800 = vmatprep.mubr.f32.mxu0 0.0
        %801 = vmatmul.mubr.f32.gmra.mrb[0].mxu0 %v463
        %v802 = vpop.f32.mrb[0].mxu0
        %v803 = vadd.f32 %v378, %v802
        %v804 = vpop.f32.mrb[0].mxu0
        %805 = vmatprep.mubr.f32.mxu0 0.0
        %806 = vmatmul.mubr.f32.gmra.mrb[0].mxu0 %v466
        %v807 = vpop.f32.mrb[0].mxu0
        %v808 = vadd.f32 %v378, %v807
        %v809 = vpop.f32.mrb[0].mxu0
        %810 = vmatprep.mubr.f32.mxu0 0.0
        %811 = vmatmul.mubr.f32.gmra.mrb[0].mxu0 %v469
        %v812 = vpop.f32.mrb[0].mxu0
        %v813 = vadd.f32 %v378, %v812
        %v814 = vpop.f32.mrb[0].mxu0
        %815 = vmatprep.mubr.f32.mxu0 0.0
        %816 = vmatmul.mubr.f32.gmra.mrb[0].mxu0 %v472
        %v817 = vpop.f32.mrb[0].mxu0
        %v818 = vadd.f32 %v378, %v817
        %v819 = vpop.f32.mrb[0].mxu0
        %820 = vmatprep.mubr.f32.mxu0 0.0
        %821 = vmatmul.mubr.f32.gmra.mrb[0].mxu0 %v475
        %v822 = vpop.f32.mrb[0].mxu0
        %v823 = vadd.f32 %v378, %v822
        %v824 = vpop.f32.mrb[0].mxu0
        %825 = vmatprep.mubr.f32.mxu0 0.0
        %826 = vmatmul.mubr.f32.gmra.mrb[0].mxu0 %v478
        %v827 = vpop.f32.mrb[0].mxu0
        %v828 = vadd.f32 %v378, %v827
        %v829 = vpop.f32.mrb[0].mxu0
        %830 = vmatprep.mubr.f32.mxu0 0.0
        %831 = vmatmul.mubr.f32.gmra.mrb[0].mxu0 %v481
        %v832 = vpop.f32.mrb[0].mxu0
        %v833 = vadd.f32 %v378, %v832
        %v834 = vpop.f32.mrb[0].mxu0
        %835 = vmatprep.mubr.f32.mxu0 0.0
        %836 = vmatmul.mubr.f32.gmra.mrb[0].mxu0 %v484
        %v837 = vpop.f32.mrb[0].mxu0
        %v838 = vadd.f32 %v378, %v837
        %v839 = vpop.f32.mrb[0].mxu0
        %840 = vmatprep.mubr.f32.mxu0 0.0
        %841 = vmatmul.mubr.f32.gmra.mrb[0].mxu0 %v487
        %v842 = vpop.f32.mrb[0].mxu0
        %v843 = vadd.f32 %v378, %v842
        %v844 = vpop.f32.mrb[0].mxu0
        %845 = vmatprep.mubr.f32.mxu0 0.0
        %846 = vmatmul.mubr.f32.gmra.mrb[0].mxu0 %v490
        %v847 = vpop.f32.mrb[0].mxu0
        %v848 = vadd.f32 %v378, %v847
        %v849 = vpop.f32.mrb[0].mxu0
        %850 = vmatprep.mubr.f32.mxu0 0.0
        %851 = vmatmul.mubr.f32.gmra.mrb[0].mxu0 %v493
        %v852 = vpop.f32.mrb[0].mxu0
        %v853 = vadd.f32 %v378, %v852
        %v854 = vpop.f32.mrb[0].mxu0
        %855 = vmatprep.mubr.f32.mxu0 0.0
        %856 = vmatmul.mubr.f32.gmra.mrb[0].mxu0 %v496
        %v857 = vpop.f32.mrb[0].mxu0
        %v858 = vadd.f32 %v378, %v857
        %v859 = vpop.f32.mrb[0].mxu0
        %860 = vmatprep.mubr.f32.mxu0 0.0
        %861 = vmatmul.mubr.f32.gmra.mrb[0].mxu0 %v499
        %v862 = vpop.f32.mrb[0].mxu0
        %v863 = vadd.f32 %v378, %v862
        %v864 = vpop.f32.mrb[0].mxu0
        %865 = vmatprep.mubr.f32.mxu0 0.0
        %866 = vmatmul.mubr.f32.gmra.mrb[0].mxu0 %v502
        %v867 = vpop.f32.mrb[0].mxu0
        %v868 = vadd.f32 %v378, %v867
        %v869 = vpop.f32.mrb[0].mxu0
        %870 = vmatprep.mubr.f32.mxu0 0.0
        %871 = vmatmul.mubr.f32.gmra.mrb[0].mxu0 %v505
        %v872 = vpop.f32.mrb[0].mxu0
        %v873 = vadd.f32 %v378, %v872
        %v874 = vpop.f32.mrb[0].mxu0
        %875 = vmatprep.mubr.f32.mxu0 0.0
        %876 = vmatmul.mubr.f32.gmra.mrb[0].mxu0 %v508
        %v877 = vpop.f32.mrb[0].mxu0
        %v878 = vadd.f32 %v378, %v877
        %v879 = vpop.f32.mrb[0].mxu0
        %880 = vmatprep.mubr.f32.mxu0 0.0
        %881 = vmatmul.mubr.f32.gmra.mrb[0].mxu0 %v511
        %v882 = vpop.f32.mrb[0].mxu0
        %v883 = vadd.f32 %v378, %v882
        %v884 = vpop.f32.mrb[0].mxu0
        %885 = vmatprep.mubr.f32.mxu0 0.0
        %886 = vmatmul.mubr.f32.gmra.mrb[0].mxu0 %v514
        %v887 = vpop.f32.mrb[0].mxu0
        %v888 = vadd.f32 %v378, %v887
        %v889 = vpop.f32.mrb[0].mxu0
        %890 = vmatprep.mubr.f32.mxu0 0.0
        %891 = vmatmul.mubr.f32.gmra.mrb[0].mxu0 %v517
        %v892 = vpop.f32.mrb[0].mxu0
        %v893 = vadd.f32 %v378, %v892
        %v894 = vpop.f32.mrb[0].mxu0
        %895 = vmatprep.mubr.f32.mxu0 0.0
        %896 = vmatmul.mubr.f32.gmra.mrb[0].mxu0 %v520
        %v897 = vpop.f32.mrb[0].mxu0
        %v898 = vadd.f32 %v378, %v897
        %v899 = vpop.f32.mrb[0].mxu0
        %900 = vmatprep.mubr.f32.mxu0 0.0
        %901 = vmatmul.mubr.f32.gmra.mrb[0].mxu0 %v523
        %v902 = vpop.f32.mrb[0].mxu0
        %v903 = vadd.f32 %v378, %v902
        %v904 = vpop.f32.mrb[0].mxu0
        %905 = vmatprep.mubr.f32.mxu0 0.0
        %906 = vmatmul.mubr.f32.gmra.mrb[0].mxu0 %v526
        %v907 = vpop.f32.mrb[0].mxu0
        %v908 = vadd.f32 %v378, %v907
        %v909 = vpop.f32.mrb[0].mxu0
        %910 = vmatprep.mubr.f32.mxu0 0.0
        %911 = vmatmul.mubr.f32.gmra.mrb[0].mxu0 %v529
        %v912 = vpop.f32.mrb[0].mxu0
        %v913 = vadd.f32 %v378, %v912
        %v914 = vpop.f32.mrb[0].mxu0
        %915 = vmatprep.mubr.f32.mxu0 0.0
        %916 = vmatmul.mubr.f32.gmra.mrb[0].mxu0 %v532
        %v917 = vpop.f32.mrb[0].mxu0
        %v918 = vadd.f32 %v378, %v917
        %v919 = vpop.f32.mrb[0].mxu0
        %920 = vmatprep.mubr.f32.mxu0 0.0
        %921 = vmatmul.mubr.f32.gmra.mrb[0].mxu0 %v535
        %v922 = vpop.f32.mrb[0].mxu0
        %v923 = vadd.f32 %v378, %v922
        %v924 = vpop.f32.mrb[0].mxu0
        %925 = vmatprep.mubr.f32.mxu0 0.0
        %926 = vmatmul.mubr.f32.gmra.mrb[0].mxu0 %v538
        %v927 = vpop.f32.mrb[0].mxu0
        %v928 = vadd.f32 %v378, %v927
        %v929 = vpop.f32.mrb[0].mxu0
        %930 = vmatprep.mubr.f32.mxu0 0.0
        %931 = vmatmul.mubr.f32.gmra.mrb[0].mxu0 %v541
        %v932 = vpop.f32.mrb[0].mxu0
        %v933 = vadd.f32 %v378, %v932
        %v934 = vpop.f32.mrb[0].mxu0
        %935 = vmatprep.mubr.f32.mxu0 0.0
        %936 = vmatmul.mubr.f32.gmra.mrb[0].mxu0 %v544
        %v937 = vpop.f32.mrb[0].mxu0
        %v938 = vadd.f32 %v378, %v937
        %v939 = vpop.f32.mrb[0].mxu0
        %940 = vmatprep.mubr.f32.mxu0 0.0
        %941 = vmatmul.mubr.f32.gmra.mrb[0].mxu0 %v547
        %v942 = vpop.f32.mrb[0].mxu0
        %v943 = vadd.f32 %v378, %v942
        %v944 = vpop.f32.mrb[0].mxu0
        %945 = vmatprep.mubr.f32.mxu0 0.0
        %946 = vmatmul.mubr.f32.gmra.mrb[0].mxu0 %v550
        %v947 = vpop.f32.mrb[0].mxu0
        %v948 = vadd.f32 %v378, %v947
        %v949 = vpop.f32.mrb[0].mxu0
        %950 = vmatprep.mubr.f32.mxu0 0.0
        %951 = vmatmul.mubr.f32.gmra.mrb[0].mxu0 %v553
        %v952 = vpop.f32.mrb[0].mxu0
        %v953 = vadd.f32 %v378, %v952
        %v954 = vpop.f32.mrb[0].mxu0
        %955 = vmatprep.mubr.f32.mxu0 0.0
        %956 = vmatmul.mubr.f32.gmra.mrb[0].mxu0 %v556
        %v957 = vpop.f32.mrb[0].mxu0
        %v958 = vadd.f32 %v378, %v957
        %v959 = vpop.f32.mrb[0].mxu0
        %960 = vmatprep.mubr.f32.mxu0 0.0
        %961 = vmatmul.mubr.f32.gmra.mrb[0].mxu0 %v559
        %v962 = vpop.f32.mrb[0].mxu0
        %v963 = vadd.f32 %v378, %v962
        %v964 = vpop.f32.mrb[0].mxu0
        %965 = vmatprep.mubr.f32.mxu0 0.0
        %966 = vmatmul.mubr.f32.gmra.mrb[0].mxu0 %v562
        %v967 = vpop.f32.mrb[0].mxu0
        %v968 = vadd.f32 %v378, %v967
        %v969 = vpop.f32.mrb[0].mxu0
        %970 = vmatprep.mubr.f32.mxu0 0.0
        %971 = vmatmul.mubr.f32.gmra.mrb[0].mxu0 %v565
        %v972 = vpop.f32.mrb[0].mxu0
        %v973 = vadd.f32 %v378, %v972
        %v974 = vpop.f32.mrb[0].mxu0
        %975 = vmatprep.mubr.f32.mxu0 0.0
        %976 = vmatmul.mubr.f32.gmra.mrb[0].mxu0 %v568
        %v977 = vpop.f32.mrb[0].mxu0
        %v978 = vadd.f32 %v378, %v977
        %v979 = vpop.f32.mrb[0].mxu0
        %980 = vmatprep.mubr.f32.mxu0 0.0
        %981 = vmatmul.mubr.f32.gmra.mrb[0].mxu0 %v571
        %v982 = vpop.f32.mrb[0].mxu0
        %v983 = vadd.f32 %v378, %v982
        %v984 = vpop.f32.mrb[0].mxu0
        %985 = vmatprep.mubr.f32.mxu0 0.0
        %986 = vmatmul.mubr.f32.gmra.mrb[0].mxu0 %v574
        %v987 = vpop.f32.mrb[0].mxu0
        %v988 = vadd.f32 %v378, %v987
        %v989 = vpop.f32.mrb[0].mxu0
        %990 = vmatprep.mubr.f32.mxu0 0.0
        %991 = vmatmul.mubr.f32.gmra.mrb[0].mxu0 %v577
        %v992 = vpop.f32.mrb[0].mxu0
        %v993 = vadd.f32 %v378, %v992
        %v994 = vpop.f32.mrb[0].mxu0
        %995 = vmatprep.mubr.f32.mxu0 0.0
        %996 = vmatmul.mubr.f32.gmra.mrb[0].mxu0 %v580
        %v997 = vpop.f32.mrb[0].mxu0
        %v998 = vadd.f32 %v378, %v997
        %v999 = vpop.f32.mrb[0].mxu0
        %1000 = vmatprep.mubr.f32.mxu0 0.0
        %1001 = vmatmul.mubr.f32.gmra.mrb[0].mxu0 %v583
        %v1002 = vpop.f32.mrb[0].mxu0
        %v1003 = vadd.f32 %v378, %v1002
        %v1004 = vpop.f32.mrb[0].mxu0
        %1005 = vmatprep.mubr.f32.mxu0 0.0
        %1006 = vmatmul.mubr.f32.gmra.mrb[0].mxu0 %v586
        %v1007 = vpop.f32.mrb[0].mxu0
        %v1008 = vadd.f32 %v378, %v1007
        %v1009 = vpop.f32.mrb[0].mxu0
        %1010 = vmatprep.mubr.f32.mxu0 0.0
        %1011 = vmatmul.mubr.f32.gmra.mrb[0].mxu0 %v589
        %v1012 = vpop.f32.mrb[0].mxu0
        %v1013 = vadd.f32 %v378, %v1012
        %v1014 = vpop.f32.mrb[0].mxu0
        %1015 = vmatprep.mubr.f32.mxu0 0.0
        %1016 = vmatmul.mubr.f32.gmra.mrb[0].mxu0 %v592
        %v1017 = vpop.f32.mrb[0].mxu0
        %v1018 = vadd.f32 %v378, %v1017
        %v1019 = vpop.f32.mrb[0].mxu0
        %1020 = vmatprep.mubr.f32.mxu0 0.0
        %1021 = vmatmul.mubr.f32.gmra.mrb[0].mxu0 %v595
        %v1022 = vpop.f32.mrb[0].mxu0
        %v1023 = vadd.f32 %v378, %v1022
        %v1024 = vpop.f32.mrb[0].mxu0
        %1025 = vdwg.mxu0
        %v1026 = vmax.f32 %v668, 0.0
        %v1027 = vmax.f32 %v673, 0.0
        %v1028 = vmax.f32 %v678, 0.0
        %v1029 = vmax.f32 %v683, 0.0
        %v1030 = vmax.f32 %v688, 0.0
        %v1031 = vmax.f32 %v693, 0.0
        %v1032 = vmax.f32 %v698, 0.0
        %v1033 = vmax.f32 %v703, 0.0
        %v1034 = vmax.f32 %v708, 0.0
        %v1035 = vmax.f32 %v713, 0.0
        %v1036 = vmax.f32 %v718, 0.0
        %v1037 = vmax.f32 %v723, 0.0
        %v1038 = vmax.f32 %v728, 0.0
        %v1039 = vmax.f32 %v733, 0.0
        %v1040 = vmax.f32 %v738, 0.0
        %v1041 = vmax.f32 %v743, 0.0
        %v1042 = vmax.f32 %v748, 0.0
        %v1043 = vmax.f32 %v753, 0.0
        %v1044 = vmax.f32 %v758, 0.0
        %v1045 = vmax.f32 %v763, 0.0
        %v1046 = vmax.f32 %v768, 0.0
        %v1047 = vmax.f32 %v773, 0.0
        %v1048 = vmax.f32 %v778, 0.0
        %v1049 = vmax.f32 %v783, 0.0
        %v1050 = vmax.f32 %v788, 0.0
        %v1051 = vmax.f32 %v793, 0.0
        %v1052 = vmax.f32 %v798, 0.0
        %v1053 = vmax.f32 %v803, 0.0
        %v1054 = vmax.f32 %v808, 0.0
        %v1055 = vmax.f32 %v813, 0.0
        %v1056 = vmax.f32 %v818, 0.0
        %v1057 = vmax.f32 %v823, 0.0
        %v1058 = vmax.f32 %v828, 0.0
        %v1059 = vmax.f32 %v833, 0.0
        %v1060 = vmax.f32 %v838, 0.0
        %v1061 = vmax.f32 %v843, 0.0
        %v1062 = vmax.f32 %v848, 0.0
        %v1063 = vmax.f32 %v853, 0.0
        %v1064 = vmax.f32 %v858, 0.0
        %v1065 = vmax.f32 %v863, 0.0
        %v1066 = vmax.f32 %v868, 0.0
        %v1067 = vmax.f32 %v873, 0.0
        %v1068 = vmax.f32 %v878, 0.0
        %v1069 = vmax.f32 %v883, 0.0
        %v1070 = vmax.f32 %v888, 0.0
        %v1071 = vmax.f32 %v893, 0.0
        %v1072 = vmax.f32 %v898, 0.0
        %v1073 = vmax.f32 %v903, 0.0
        %v1074 = vmax.f32 %v908, 0.0
        %v1075 = vmax.f32 %v913, 0.0
        %v1076 = vmax.f32 %v918, 0.0
        %v1077 = vmax.f32 %v923, 0.0
        %v1078 = vmax.f32 %v928, 0.0
        %v1079 = vmax.f32 %v933, 0.0
        %v1080 = vmax.f32 %v938, 0.0
        %v1081 = vmax.f32 %v943, 0.0
        %v1082 = vmax.f32 %v948, 0.0
        %v1083 = vmax.f32 %v953, 0.0
        %v1084 = vmax.f32 %v958, 0.0
        %v1085 = vmax.f32 %v963, 0.0
        %v1086 = vmax.f32 %v968, 0.0
        %v1087 = vmax.f32 %v973, 0.0
        %v1088 = vmax.f32 %v978, 0.0
        %v1089 = vmax.f32 %v983, 0.0
        %v1090 = vmax.f32 %v988, 0.0
        %v1091 = vmax.f32 %v993, 0.0
        %v1092 = vmax.f32 %v998, 0.0
        %v1093 = vmax.f32 %v1003, 0.0
        %v1094 = vmax.f32 %v1008, 0.0
        %v1095 = vmax.f32 %v1013, 0.0
        %v1096 = vmax.f32 %v1018, 0.0
        %v1097 = vmax.f32 %v1023, 0.0
        %v1098 = vlaneseq
        %v1099 = vshrl.u32 %v1098, 7
        %v1100 = vadd.s32 %v1099, 8
        %v1101 = vadd.s32 %v1099, 16
        %v1102 = vadd.s32 %v1099, 24
        %v1103 = vadd.s32 %v1099, 32
        %v1104 = vadd.s32 %v1099, 40
        %v1105 = vadd.s32 %v1099, 48
        %v1106 = vadd.s32 %v1099, 56
        %v1107 = vadd.s32 %v1099, 64
        %v1108 = vadd.s32 %v1099, 72
        %v1109 = vadd.s32 %v1099, 80
        %v1110 = vadd.s32 %v1099, 88
        %v1111 = vadd.s32 %v1099, 96
        %v1112 = vadd.s32 %v1099, 104
        %v1113 = vadd.s32 %v1099, 112
        %v1114 = vadd.s32 %v1099, 120
        %v1115 = vadd.s32 %v1099, 128
        %v1116 = vadd.s32 %v1099, 136
        %v1117 = vadd.s32 %v1099, 144
        %v1118 = vadd.s32 %v1099, 152
        %v1119 = vadd.s32 %v1099, 160
        %v1120 = vadd.s32 %v1099, 168
        %v1121 = vadd.s32 %v1099, 176
        %v1122 = vadd.s32 %v1099, 184
        %v1123 = vadd.s32 %v1099, 192
        %v1124 = vadd.s32 %v1099, 200
        %v1125 = vadd.s32 %v1099, 208
        %v1126 = vadd.s32 %v1099, 216
        %v1127 = vadd.s32 %v1099, 224
        %v1128 = vadd.s32 %v1099, 232
        %v1129 = vadd.s32 %v1099, 240
        %v1130 = vadd.s32 %v1099, 248
        %v1131 = vadd.s32 %v1099, 256
        %v1132 = vadd.s32 %v1099, 264
        %v1133 = vadd.s32 %v1099, 272
        %v1134 = vadd.s32 %v1099, 280
        %v1135 = vadd.s32 %v1099, 288
        %v1136 = vadd.s32 %v1099, 296
        %v1137 = vadd.s32 %v1099, 304
        %v1138 = vadd.s32 %v1099, 312
        %v1139 = vadd.s32 %v1099, 320
        %v1140 = vadd.s32 %v1099, 328
        %v1141 = vadd.s32 %v1099, 336
        %v1142 = vadd.s32 %v1099, 344
        %v1143 = vadd.s32 %v1099, 352
        %v1144 = vadd.s32 %v1099, 360
        %v1145 = vadd.s32 %v1099, 368
        %v1146 = vadd.s32 %v1099, 376
        %v1147 = vadd.s32 %v1099, 384
        %v1148 = vadd.s32 %v1099, 392
        %v1149 = vadd.s32 %v1099, 400
        %v1150 = vadd.s32 %v1099, 408
        %v1151 = vadd.s32 %v1099, 416
        %v1152 = vadd.s32 %v1099, 424
        %v1153 = vadd.s32 %v1099, 432
        %v1154 = vadd.s32 %v1099, 440
        %v1155 = vadd.s32 %v1099, 448
        %v1156 = vadd.s32 %v1099, 456
        %v1157 = vadd.s32 %v1099, 464
        %v1158 = vadd.s32 %v1099, 472
        %v1159 = vadd.s32 %v1099, 480
        %v1160 = vadd.s32 %v1099, 488
        %v1161 = vadd.s32 %v1099, 496
        %v1162 = vadd.s32 %v1099, 504
        %v1163 = vadd.s32 %v1099, 512
        %v1164 = vadd.s32 %v1099, 520
        %v1165 = vadd.s32 %v1099, 528
        %v1166 = vadd.s32 %v1099, 536
        %v1167 = vadd.s32 %v1099, 544
        %v1168 = vadd.s32 %v1099, 552
        %v1169 = vadd.s32 %v1099, 560
        %v1170 = vadd.s32 %v1099, 568
        %v1171 = vshra.s32 %v1099, 5
        %v1172 = vshra.s32 %v1100, 5
        %v1173 = vshra.s32 %v1101, 5
        %v1174 = vshra.s32 %v1102, 5
        %v1175 = vshra.s32 %v1103, 5
        %v1176 = vshra.s32 %v1104, 5
        %v1177 = vshra.s32 %v1105, 5
        %v1178 = vshra.s32 %v1106, 5
        %v1179 = vshra.s32 %v1107, 5
        %v1180 = vshra.s32 %v1108, 5
        %v1181 = vshra.s32 %v1109, 5
        %v1182 = vshra.s32 %v1110, 5
        %v1183 = vshra.s32 %v1111, 5
        %v1184 = vshra.s32 %v1112, 5
        %v1185 = vshra.s32 %v1113, 5
        %v1186 = vshra.s32 %v1114, 5
        %v1187 = vshra.s32 %v1115, 5
        %v1188 = vshra.s32 %v1116, 5
        %v1189 = vshra.s32 %v1117, 5
        %v1190 = vshra.s32 %v1118, 5
        %v1191 = vshra.s32 %v1119, 5
        %v1192 = vshra.s32 %v1120, 5
        %v1193 = vshra.s32 %v1121, 5
        %v1194 = vshra.s32 %v1122, 5
        %v1195 = vshra.s32 %v1123, 5
        %v1196 = vshra.s32 %v1124, 5
        %v1197 = vshra.s32 %v1125, 5
        %v1198 = vshra.s32 %v1126, 5
        %v1199 = vshra.s32 %v1127, 5
        %v1200 = vshra.s32 %v1128, 5
        %v1201 = vshra.s32 %v1129, 5
        %v1202 = vshra.s32 %v1130, 5
        %v1203 = vshra.s32 %v1131, 5
        %v1204 = vshra.s32 %v1132, 5
        %v1205 = vshra.s32 %v1133, 5
        %v1206 = vshra.s32 %v1134, 5
        %v1207 = vshra.s32 %v1135, 5
        %v1208 = vshra.s32 %v1136, 5
        %v1209 = vshra.s32 %v1137, 5
        %v1210 = vshra.s32 %v1138, 5
        %v1211 = vshra.s32 %v1139, 5
        %v1212 = vshra.s32 %v1140, 5
        %v1213 = vshra.s32 %v1141, 5
        %v1214 = vshra.s32 %v1142, 5
        %v1215 = vshra.s32 %v1143, 5
        %v1216 = vshra.s32 %v1144, 5
        %v1217 = vshra.s32 %v1145, 5
        %v1218 = vshra.s32 %v1146, 5
        %v1219 = vshra.s32 %v1147, 5
        %v1220 = vshra.s32 %v1148, 5
        %v1221 = vshra.s32 %v1149, 5
        %v1222 = vshra.s32 %v1150, 5
        %v1223 = vshra.s32 %v1151, 5
        %v1224 = vshra.s32 %v1152, 5
        %v1225 = vshra.s32 %v1153, 5
        %v1226 = vshra.s32 %v1154, 5
        %v1227 = vshra.s32 %v1155, 5
        %v1228 = vshra.s32 %v1156, 5
        %v1229 = vshra.s32 %v1157, 5
        %v1230 = vshra.s32 %v1158, 5
        %v1231 = vshra.s32 %v1159, 5
        %v1232 = vshra.s32 %v1160, 5
        %v1233 = vshra.s32 %v1161, 5
        %v1234 = vshra.s32 %v1162, 5
        %v1235 = vshra.s32 %v1163, 5
        %v1236 = vshra.s32 %v1164, 5
        %v1237 = vshra.s32 %v1165, 5
        %v1238 = vshra.s32 %v1166, 5
        %v1239 = vshra.s32 %v1167, 5
        %v1240 = vshra.s32 %v1168, 5
        %v1241 = vshra.s32 %v1169, 5
        %v1242 = vshra.s32 %v1170, 5
        %v1243 = vand.u32 %v1099, 31
        %v1244 = vand.u32 %v1100, 31
        %v1245 = vand.u32 %v1101, 31
        %v1246 = vand.u32 %v1102, 31
        %v1247 = vand.u32 %v1103, 31
        %v1248 = vand.u32 %v1104, 31
        %v1249 = vand.u32 %v1105, 31
        %v1250 = vand.u32 %v1106, 31
        %v1251 = vand.u32 %v1107, 31
        %v1252 = vand.u32 %v1108, 31
        %v1253 = vand.u32 %v1109, 31
        %v1254 = vand.u32 %v1110, 31
        %v1255 = vand.u32 %v1111, 31
        %v1256 = vand.u32 %v1112, 31
        %v1257 = vand.u32 %v1113, 31
        %v1258 = vand.u32 %v1114, 31
        %v1259 = vand.u32 %v1115, 31
        %v1260 = vand.u32 %v1116, 31
        %v1261 = vand.u32 %v1117, 31
        %v1262 = vand.u32 %v1118, 31
        %v1263 = vand.u32 %v1119, 31
        %v1264 = vand.u32 %v1120, 31
        %v1265 = vand.u32 %v1121, 31
        %v1266 = vand.u32 %v1122, 31
        %v1267 = vand.u32 %v1123, 31
        %v1268 = vand.u32 %v1124, 31
        %v1269 = vand.u32 %v1125, 31
        %v1270 = vand.u32 %v1126, 31
        %v1271 = vand.u32 %v1127, 31
        %v1272 = vand.u32 %v1128, 31
        %v1273 = vand.u32 %v1129, 31
        %v1274 = vand.u32 %v1130, 31
        %v1275 = vand.u32 %v1131, 31
        %v1276 = vand.u32 %v1132, 31
        %v1277 = vand.u32 %v1133, 31
        %v1278 = vand.u32 %v1134, 31
        %v1279 = vand.u32 %v1135, 31
        %v1280 = vand.u32 %v1136, 31
        %v1281 = vand.u32 %v1137, 31
        %v1282 = vand.u32 %v1138, 31
        %v1283 = vand.u32 %v1139, 31
        %v1284 = vand.u32 %v1140, 31
        %v1285 = vand.u32 %v1141, 31
        %v1286 = vand.u32 %v1142, 31
        %v1287 = vand.u32 %v1143, 31
        %v1288 = vand.u32 %v1144, 31
        %v1289 = vand.u32 %v1145, 31
        %v1290 = vand.u32 %v1146, 31
        %v1291 = vand.u32 %v1147, 31
        %v1292 = vand.u32 %v1148, 31
        %v1293 = vand.u32 %v1149, 31
        %v1294 = vand.u32 %v1150, 31
        %v1295 = vand.u32 %v1151, 31
        %v1296 = vand.u32 %v1152, 31
        %v1297 = vand.u32 %v1153, 31
        %v1298 = vand.u32 %v1154, 31
        %v1299 = vand.u32 %v1155, 31
        %v1300 = vand.u32 %v1156, 31
        %v1301 = vand.u32 %v1157, 31
        %v1302 = vand.u32 %v1158, 31
        %v1303 = vand.u32 %v1159, 31
        %v1304 = vand.u32 %v1160, 31
        %v1305 = vand.u32 %v1161, 31
        %v1306 = vand.u32 %v1162, 31
        %v1307 = vand.u32 %v1163, 31
        %v1308 = vand.u32 %v1164, 31
        %v1309 = vand.u32 %v1165, 31
        %v1310 = vand.u32 %v1166, 31
        %v1311 = vand.u32 %v1167, 31
        %v1312 = vand.u32 %v1168, 31
        %v1313 = vand.u32 %v1169, 31
        %v1314 = vand.u32 %v1170, 31
        %vm1315 = vcmp.ge.s32.totalorder %v1171, 1
        %vm1316 = vcmp.ge.s32.totalorder %v1172, 1
        %vm1317 = vcmp.ge.s32.totalorder %v1173, 1
        %vm1318 = vcmp.ge.s32.totalorder %v1174, 1
        %vm1319 = vcmp.ge.s32.totalorder %v1175, 1
        %vm1320 = vcmp.ge.s32.totalorder %v1176, 1
        %vm1321 = vcmp.ge.s32.totalorder %v1177, 1
        %vm1322 = vcmp.ge.s32.totalorder %v1178, 1
        %vm1323 = vcmp.ge.s32.totalorder %v1179, 1
        %vm1324 = vcmp.ge.s32.totalorder %v1180, 1
        %vm1325 = vcmp.ge.s32.totalorder %v1181, 1
        %vm1326 = vcmp.ge.s32.totalorder %v1182, 1
        %vm1327 = vcmp.ge.s32.totalorder %v1183, 1
        %vm1328 = vcmp.ge.s32.totalorder %v1184, 1
        %vm1329 = vcmp.ge.s32.totalorder %v1185, 1
        %vm1330 = vcmp.ge.s32.totalorder %v1186, 1
        %vm1331 = vcmp.ge.s32.totalorder %v1187, 1
        %vm1332 = vcmp.ge.s32.totalorder %v1188, 1
        %vm1333 = vcmp.ge.s32.totalorder %v1189, 1
        %vm1334 = vcmp.ge.s32.totalorder %v1190, 1
        %vm1335 = vcmp.ge.s32.totalorder %v1191, 1
        %vm1336 = vcmp.ge.s32.totalorder %v1192, 1
        %vm1337 = vcmp.ge.s32.totalorder %v1193, 1
        %vm1338 = vcmp.ge.s32.totalorder %v1194, 1
        %vm1339 = vcmp.ge.s32.totalorder %v1195, 1
        %vm1340 = vcmp.ge.s32.totalorder %v1196, 1
        %vm1341 = vcmp.ge.s32.totalorder %v1197, 1
        %vm1342 = vcmp.ge.s32.totalorder %v1198, 1
        %vm1343 = vcmp.ge.s32.totalorder %v1199, 1
        %vm1344 = vcmp.ge.s32.totalorder %v1200, 1
        %vm1345 = vcmp.ge.s32.totalorder %v1201, 1
        %vm1346 = vcmp.ge.s32.totalorder %v1202, 1
        %vm1347 = vcmp.ge.s32.totalorder %v1203, 1
        %vm1348 = vcmp.ge.s32.totalorder %v1204, 1
        %vm1349 = vcmp.ge.s32.totalorder %v1205, 1
        %vm1350 = vcmp.ge.s32.totalorder %v1206, 1
        %vm1351 = vcmp.ge.s32.totalorder %v1207, 1
        %vm1352 = vcmp.ge.s32.totalorder %v1208, 1
        %vm1353 = vcmp.ge.s32.totalorder %v1209, 1
        %vm1354 = vcmp.ge.s32.totalorder %v1210, 1
        %vm1355 = vcmp.ge.s32.totalorder %v1211, 1
        %vm1356 = vcmp.ge.s32.totalorder %v1212, 1
        %vm1357 = vcmp.ge.s32.totalorder %v1213, 1
        %vm1358 = vcmp.ge.s32.totalorder %v1214, 1
        %vm1359 = vcmp.ge.s32.totalorder %v1215, 1
        %vm1360 = vcmp.ge.s32.totalorder %v1216, 1
        %vm1361 = vcmp.ge.s32.totalorder %v1217, 1
        %vm1362 = vcmp.ge.s32.totalorder %v1218, 1
        %vm1363 = vcmp.ge.s32.totalorder %v1219, 1
        %vm1364 = vcmp.ge.s32.totalorder %v1220, 1
        %vm1365 = vcmp.ge.s32.totalorder %v1221, 1
        %vm1366 = vcmp.ge.s32.totalorder %v1222, 1
        %vm1367 = vcmp.ge.s32.totalorder %v1223, 1
        %vm1368 = vcmp.ge.s32.totalorder %v1224, 1
        %vm1369 = vcmp.ge.s32.totalorder %v1225, 1
        %vm1370 = vcmp.ge.s32.totalorder %v1226, 1
        %vm1371 = vcmp.ge.s32.totalorder %v1227, 1
        %vm1372 = vcmp.ge.s32.totalorder %v1228, 1
        %vm1373 = vcmp.ge.s32.totalorder %v1229, 1
        %vm1374 = vcmp.ge.s32.totalorder %v1230, 1
        %vm1375 = vcmp.ge.s32.totalorder %v1231, 1
        %vm1376 = vcmp.ge.s32.totalorder %v1232, 1
        %vm1377 = vcmp.ge.s32.totalorder %v1233, 1
        %vm1378 = vcmp.ge.s32.totalorder %v1234, 1
        %vm1379 = vcmp.ge.s32.totalorder %v1235, 1
        %vm1380 = vcmp.ge.s32.totalorder %v1236, 1
        %vm1381 = vcmp.ge.s32.totalorder %v1237, 1
        %vm1382 = vcmp.ge.s32.totalorder %v1238, 1
        %vm1383 = vcmp.ge.s32.totalorder %v1239, 1
        %vm1384 = vcmp.ge.s32.totalorder %v1240, 1
        %vm1385 = vcmp.ge.s32.totalorder %v1241, 1
        %vm1386 = vcmp.ge.s32.totalorder %v1242, 1
        %vm1387 = vcmp.le.s32.totalorder %v1171, 16
        %vm1388 = vcmp.le.s32.totalorder %v1172, 16
        %vm1389 = vcmp.le.s32.totalorder %v1173, 16
        %vm1390 = vcmp.le.s32.totalorder %v1174, 16
        %vm1391 = vcmp.le.s32.totalorder %v1175, 16
        %vm1392 = vcmp.le.s32.totalorder %v1176, 16
        %vm1393 = vcmp.le.s32.totalorder %v1177, 16
        %vm1394 = vcmp.le.s32.totalorder %v1178, 16
        %vm1395 = vcmp.le.s32.totalorder %v1179, 16
        %vm1396 = vcmp.le.s32.totalorder %v1180, 16
        %vm1397 = vcmp.le.s32.totalorder %v1181, 16
        %vm1398 = vcmp.le.s32.totalorder %v1182, 16
        %vm1399 = vcmp.le.s32.totalorder %v1183, 16
        %vm1400 = vcmp.le.s32.totalorder %v1184, 16
        %vm1401 = vcmp.le.s32.totalorder %v1185, 16
        %vm1402 = vcmp.le.s32.totalorder %v1186, 16
        %vm1403 = vcmp.le.s32.totalorder %v1187, 16
        %vm1404 = vcmp.le.s32.totalorder %v1188, 16
        %vm1405 = vcmp.le.s32.totalorder %v1189, 16
        %vm1406 = vcmp.le.s32.totalorder %v1190, 16
        %vm1407 = vcmp.le.s32.totalorder %v1191, 16
        %vm1408 = vcmp.le.s32.totalorder %v1192, 16
        %vm1409 = vcmp.le.s32.totalorder %v1193, 16
        %vm1410 = vcmp.le.s32.totalorder %v1194, 16
        %vm1411 = vcmp.le.s32.totalorder %v1195, 16
        %vm1412 = vcmp.le.s32.totalorder %v1196, 16
        %vm1413 = vcmp.le.s32.totalorder %v1197, 16
        %vm1414 = vcmp.le.s32.totalorder %v1198, 16
        %vm1415 = vcmp.le.s32.totalorder %v1199, 16
        %vm1416 = vcmp.le.s32.totalorder %v1200, 16
        %vm1417 = vcmp.le.s32.totalorder %v1201, 16
        %vm1418 = vcmp.le.s32.totalorder %v1202, 16
        %vm1419 = vcmp.le.s32.totalorder %v1203, 16
        %vm1420 = vcmp.le.s32.totalorder %v1204, 16
        %vm1421 = vcmp.le.s32.totalorder %v1205, 16
        %vm1422 = vcmp.le.s32.totalorder %v1206, 16
        %vm1423 = vcmp.le.s32.totalorder %v1207, 16
        %vm1424 = vcmp.le.s32.totalorder %v1208, 16
        %vm1425 = vcmp.le.s32.totalorder %v1209, 16
        %vm1426 = vcmp.le.s32.totalorder %v1210, 16
        %vm1427 = vcmp.le.s32.totalorder %v1211, 16
        %vm1428 = vcmp.le.s32.totalorder %v1212, 16
        %vm1429 = vcmp.le.s32.totalorder %v1213, 16
        %vm1430 = vcmp.le.s32.totalorder %v1214, 16
        %vm1431 = vcmp.le.s32.totalorder %v1215, 16
        %vm1432 = vcmp.le.s32.totalorder %v1216, 16
        %vm1433 = vcmp.le.s32.totalorder %v1217, 16
        %vm1434 = vcmp.le.s32.totalorder %v1218, 16
        %vm1435 = vcmp.le.s32.totalorder %v1219, 16
        %vm1436 = vcmp.le.s32.totalorder %v1220, 16
        %vm1437 = vcmp.le.s32.totalorder %v1221, 16
        %vm1438 = vcmp.le.s32.totalorder %v1222, 16
        %vm1439 = vcmp.le.s32.totalorder %v1223, 16
        %vm1440 = vcmp.le.s32.totalorder %v1224, 16
        %vm1441 = vcmp.le.s32.totalorder %v1225, 16
        %vm1442 = vcmp.le.s32.totalorder %v1226, 16
        %vm1443 = vcmp.le.s32.totalorder %v1227, 16
        %vm1444 = vcmp.le.s32.totalorder %v1228, 16
        %vm1445 = vcmp.le.s32.totalorder %v1229, 16
        %vm1446 = vcmp.le.s32.totalorder %v1230, 16
        %vm1447 = vcmp.le.s32.totalorder %v1231, 16
        %vm1448 = vcmp.le.s32.totalorder %v1232, 16
        %vm1449 = vcmp.le.s32.totalorder %v1233, 16
        %vm1450 = vcmp.le.s32.totalorder %v1234, 16
        %vm1451 = vcmp.le.s32.totalorder %v1235, 16
        %vm1452 = vcmp.le.s32.totalorder %v1236, 16
        %vm1453 = vcmp.le.s32.totalorder %v1237, 16
        %vm1454 = vcmp.le.s32.totalorder %v1238, 16
        %vm1455 = vcmp.le.s32.totalorder %v1239, 16
        %vm1456 = vcmp.le.s32.totalorder %v1240, 16
        %vm1457 = vcmp.le.s32.totalorder %v1241, 16
        %vm1458 = vcmp.le.s32.totalorder %v1242, 16
        %vm1459 = vmand %vm1315, %vm1387
        %vm1460 = vmand %vm1316, %vm1388
        %vm1461 = vmand %vm1317, %vm1389
        %vm1462 = vmand %vm1318, %vm1390
        %vm1463 = vmand %vm1319, %vm1391
        %vm1464 = vmand %vm1320, %vm1392
        %vm1465 = vmand %vm1321, %vm1393
        %vm1466 = vmand %vm1322, %vm1394
        %vm1467 = vmand %vm1323, %vm1395
        %vm1468 = vmand %vm1324, %vm1396
        %vm1469 = vmand %vm1325, %vm1397
        %vm1470 = vmand %vm1326, %vm1398
        %vm1471 = vmand %vm1327, %vm1399
        %vm1472 = vmand %vm1328, %vm1400
        %vm1473 = vmand %vm1329, %vm1401
        %vm1474 = vmand %vm1330, %vm1402
        %vm1475 = vmand %vm1331, %vm1403
        %vm1476 = vmand %vm1332, %vm1404
        %vm1477 = vmand %vm1333, %vm1405
        %vm1478 = vmand %vm1334, %vm1406
        %vm1479 = vmand %vm1335, %vm1407
        %vm1480 = vmand %vm1336, %vm1408
        %vm1481 = vmand %vm1337, %vm1409
        %vm1482 = vmand %vm1338, %vm1410
        %vm1483 = vmand %vm1339, %vm1411
        %vm1484 = vmand %vm1340, %vm1412
        %vm1485 = vmand %vm1341, %vm1413
        %vm1486 = vmand %vm1342, %vm1414
        %vm1487 = vmand %vm1343, %vm1415
        %vm1488 = vmand %vm1344, %vm1416
        %vm1489 = vmand %vm1345, %vm1417
        %vm1490 = vmand %vm1346, %vm1418
        %vm1491 = vmand %vm1347, %vm1419
        %vm1492 = vmand %vm1348, %vm1420
        %vm1493 = vmand %vm1349, %vm1421
        %vm1494 = vmand %vm1350, %vm1422
        %vm1495 = vmand %vm1351, %vm1423
        %vm1496 = vmand %vm1352, %vm1424
        %vm1497 = vmand %vm1353, %vm1425
        %vm1498 = vmand %vm1354, %vm1426
        %vm1499 = vmand %vm1355, %vm1427
        %vm1500 = vmand %vm1356, %vm1428
        %vm1501 = vmand %vm1357, %vm1429
        %vm1502 = vmand %vm1358, %vm1430
        %vm1503 = vmand %vm1359, %vm1431
        %vm1504 = vmand %vm1360, %vm1432
        %vm1505 = vmand %vm1361, %vm1433
        %vm1506 = vmand %vm1362, %vm1434
        %vm1507 = vmand %vm1363, %vm1435
        %vm1508 = vmand %vm1364, %vm1436
        %vm1509 = vmand %vm1365, %vm1437
        %vm1510 = vmand %vm1366, %vm1438
        %vm1511 = vmand %vm1367, %vm1439
        %vm1512 = vmand %vm1368, %vm1440
        %vm1513 = vmand %vm1369, %vm1441
        %vm1514 = vmand %vm1370, %vm1442
        %vm1515 = vmand %vm1371, %vm1443
        %vm1516 = vmand %vm1372, %vm1444
        %vm1517 = vmand %vm1373, %vm1445
        %vm1518 = vmand %vm1374, %vm1446
        %vm1519 = vmand %vm1375, %vm1447
        %vm1520 = vmand %vm1376, %vm1448
        %vm1521 = vmand %vm1377, %vm1449
        %vm1522 = vmand %vm1378, %vm1450
        %vm1523 = vmand %vm1379, %vm1451
        %vm1524 = vmand %vm1380, %vm1452
        %vm1525 = vmand %vm1381, %vm1453
        %vm1526 = vmand %vm1382, %vm1454
        %vm1527 = vmand %vm1383, %vm1455
        %vm1528 = vmand %vm1384, %vm1456
        %vm1529 = vmand %vm1385, %vm1457
        %vm1530 = vmand %vm1386, %vm1458
        %vm1531 = vcmp.ge.s32.totalorder %v1243, 1
        %vm1532 = vcmp.ge.s32.totalorder %v1244, 1
        %vm1533 = vcmp.ge.s32.totalorder %v1245, 1
        %vm1534 = vcmp.ge.s32.totalorder %v1246, 1
        %vm1535 = vcmp.ge.s32.totalorder %v1247, 1
        %vm1536 = vcmp.ge.s32.totalorder %v1248, 1
        %vm1537 = vcmp.ge.s32.totalorder %v1249, 1
        %vm1538 = vcmp.ge.s32.totalorder %v1250, 1
        %vm1539 = vcmp.ge.s32.totalorder %v1251, 1
        %vm1540 = vcmp.ge.s32.totalorder %v1252, 1
        %vm1541 = vcmp.ge.s32.totalorder %v1253, 1
        %vm1542 = vcmp.ge.s32.totalorder %v1254, 1
        %vm1543 = vcmp.ge.s32.totalorder %v1255, 1
        %vm1544 = vcmp.ge.s32.totalorder %v1256, 1
        %vm1545 = vcmp.ge.s32.totalorder %v1257, 1
        %vm1546 = vcmp.ge.s32.totalorder %v1258, 1
        %vm1547 = vcmp.ge.s32.totalorder %v1259, 1
        %vm1548 = vcmp.ge.s32.totalorder %v1260, 1
        %vm1549 = vcmp.ge.s32.totalorder %v1261, 1
        %vm1550 = vcmp.ge.s32.totalorder %v1262, 1
        %vm1551 = vcmp.ge.s32.totalorder %v1263, 1
        %vm1552 = vcmp.ge.s32.totalorder %v1264, 1
        %vm1553 = vcmp.ge.s32.totalorder %v1265, 1
        %vm1554 = vcmp.ge.s32.totalorder %v1266, 1
        %vm1555 = vcmp.ge.s32.totalorder %v1267, 1
        %vm1556 = vcmp.ge.s32.totalorder %v1268, 1
        %vm1557 = vcmp.ge.s32.totalorder %v1269, 1
        %vm1558 = vcmp.ge.s32.totalorder %v1270, 1
        %vm1559 = vcmp.ge.s32.totalorder %v1271, 1
        %vm1560 = vcmp.ge.s32.totalorder %v1272, 1
        %vm1561 = vcmp.ge.s32.totalorder %v1273, 1
        %vm1562 = vcmp.ge.s32.totalorder %v1274, 1
        %vm1563 = vcmp.ge.s32.totalorder %v1275, 1
        %vm1564 = vcmp.ge.s32.totalorder %v1276, 1
        %vm1565 = vcmp.ge.s32.totalorder %v1277, 1
        %vm1566 = vcmp.ge.s32.totalorder %v1278, 1
        %vm1567 = vcmp.ge.s32.totalorder %v1279, 1
        %vm1568 = vcmp.ge.s32.totalorder %v1280, 1
        %vm1569 = vcmp.ge.s32.totalorder %v1281, 1
        %vm1570 = vcmp.ge.s32.totalorder %v1282, 1
        %vm1571 = vcmp.ge.s32.totalorder %v1283, 1
        %vm1572 = vcmp.ge.s32.totalorder %v1284, 1
        %vm1573 = vcmp.ge.s32.totalorder %v1285, 1
        %vm1574 = vcmp.ge.s32.totalorder %v1286, 1
        %vm1575 = vcmp.ge.s32.totalorder %v1287, 1
        %vm1576 = vcmp.ge.s32.totalorder %v1288, 1
        %vm1577 = vcmp.ge.s32.totalorder %v1289, 1
        %vm1578 = vcmp.ge.s32.totalorder %v1290, 1
        %vm1579 = vcmp.ge.s32.totalorder %v1291, 1
        %vm1580 = vcmp.ge.s32.totalorder %v1292, 1
        %vm1581 = vcmp.ge.s32.totalorder %v1293, 1
        %vm1582 = vcmp.ge.s32.totalorder %v1294, 1
        %vm1583 = vcmp.ge.s32.totalorder %v1295, 1
        %vm1584 = vcmp.ge.s32.totalorder %v1296, 1
        %vm1585 = vcmp.ge.s32.totalorder %v1297, 1
        %vm1586 = vcmp.ge.s32.totalorder %v1298, 1
        %vm1587 = vcmp.ge.s32.totalorder %v1299, 1
        %vm1588 = vcmp.ge.s32.totalorder %v1300, 1
        %vm1589 = vcmp.ge.s32.totalorder %v1301, 1
        %vm1590 = vcmp.ge.s32.totalorder %v1302, 1
        %vm1591 = vcmp.ge.s32.totalorder %v1303, 1
        %vm1592 = vcmp.ge.s32.totalorder %v1304, 1
        %vm1593 = vcmp.ge.s32.totalorder %v1305, 1
        %vm1594 = vcmp.ge.s32.totalorder %v1306, 1
        %vm1595 = vcmp.ge.s32.totalorder %v1307, 1
        %vm1596 = vcmp.ge.s32.totalorder %v1308, 1
        %vm1597 = vcmp.ge.s32.totalorder %v1309, 1
        %vm1598 = vcmp.ge.s32.totalorder %v1310, 1
        %vm1599 = vcmp.ge.s32.totalorder %v1311, 1
        %vm1600 = vcmp.ge.s32.totalorder %v1312, 1
        %vm1601 = vcmp.ge.s32.totalorder %v1313, 1
        %vm1602 = vcmp.ge.s32.totalorder %v1314, 1
        %vm1603 = vmand %vm1459, %vm1531
        %vm1604 = vmand %vm1460, %vm1532
        %vm1605 = vmand %vm1461, %vm1533
        %vm1606 = vmand %vm1462, %vm1534
        %vm1607 = vmand %vm1463, %vm1535
        %vm1608 = vmand %vm1464, %vm1536
        %vm1609 = vmand %vm1465, %vm1537
        %vm1610 = vmand %vm1466, %vm1538
        %vm1611 = vmand %vm1467, %vm1539
        %vm1612 = vmand %vm1468, %vm1540
        %vm1613 = vmand %vm1469, %vm1541
        %vm1614 = vmand %vm1470, %vm1542
        %vm1615 = vmand %vm1471, %vm1543
        %vm1616 = vmand %vm1472, %vm1544
        %vm1617 = vmand %vm1473, %vm1545
        %vm1618 = vmand %vm1474, %vm1546
        %vm1619 = vmand %vm1475, %vm1547
        %vm1620 = vmand %vm1476, %vm1548
        %vm1621 = vmand %vm1477, %vm1549
        %vm1622 = vmand %vm1478, %vm1550
        %vm1623 = vmand %vm1479, %vm1551
        %vm1624 = vmand %vm1480, %vm1552
        %vm1625 = vmand %vm1481, %vm1553
        %vm1626 = vmand %vm1482, %vm1554
        %vm1627 = vmand %vm1483, %vm1555
        %vm1628 = vmand %vm1484, %vm1556
        %vm1629 = vmand %vm1485, %vm1557
        %vm1630 = vmand %vm1486, %vm1558
        %vm1631 = vmand %vm1487, %vm1559
        %vm1632 = vmand %vm1488, %vm1560
        %vm1633 = vmand %vm1489, %vm1561
        %vm1634 = vmand %vm1490, %vm1562
        %vm1635 = vmand %vm1491, %vm1563
        %vm1636 = vmand %vm1492, %vm1564
        %vm1637 = vmand %vm1493, %vm1565
        %vm1638 = vmand %vm1494, %vm1566
        %vm1639 = vmand %vm1495, %vm1567
        %vm1640 = vmand %vm1496, %vm1568
        %vm1641 = vmand %vm1497, %vm1569
        %vm1642 = vmand %vm1498, %vm1570
        %vm1643 = vmand %vm1499, %vm1571
        %vm1644 = vmand %vm1500, %vm1572
        %vm1645 = vmand %vm1501, %vm1573
        %vm1646 = vmand %vm1502, %vm1574
        %vm1647 = vmand %vm1503, %vm1575
        %vm1648 = vmand %vm1504, %vm1576
        %vm1649 = vmand %vm1505, %vm1577
        %vm1650 = vmand %vm1506, %vm1578
        %vm1651 = vmand %vm1507, %vm1579
        %vm1652 = vmand %vm1508, %vm1580
        %vm1653 = vmand %vm1509, %vm1581
        %vm1654 = vmand %vm1510, %vm1582
        %vm1655 = vmand %vm1511, %vm1583
        %vm1656 = vmand %vm1512, %vm1584
        %vm1657 = vmand %vm1513, %vm1585
        %vm1658 = vmand %vm1514, %vm1586
        %vm1659 = vmand %vm1515, %vm1587
        %vm1660 = vmand %vm1516, %vm1588
        %vm1661 = vmand %vm1517, %vm1589
        %vm1662 = vmand %vm1518, %vm1590
        %vm1663 = vmand %vm1519, %vm1591
        %vm1664 = vmand %vm1520, %vm1592
        %vm1665 = vmand %vm1521, %vm1593
        %vm1666 = vmand %vm1522, %vm1594
        %vm1667 = vmand %vm1523, %vm1595
        %vm1668 = vmand %vm1524, %vm1596
        %vm1669 = vmand %vm1525, %vm1597
        %vm1670 = vmand %vm1526, %vm1598
        %vm1671 = vmand %vm1527, %vm1599
        %vm1672 = vmand %vm1528, %vm1600
        %vm1673 = vmand %vm1529, %vm1601
        %vm1674 = vmand %vm1530, %vm1602
        %vm1675 = vcmp.le.s32.totalorder %v1243, 16
        %vm1676 = vcmp.le.s32.totalorder %v1244, 16
        %vm1677 = vcmp.le.s32.totalorder %v1245, 16
        %vm1678 = vcmp.le.s32.totalorder %v1246, 16
        %vm1679 = vcmp.le.s32.totalorder %v1247, 16
        %vm1680 = vcmp.le.s32.totalorder %v1248, 16
        %vm1681 = vcmp.le.s32.totalorder %v1249, 16
        %vm1682 = vcmp.le.s32.totalorder %v1250, 16
        %vm1683 = vcmp.le.s32.totalorder %v1251, 16
        %vm1684 = vcmp.le.s32.totalorder %v1252, 16
        %vm1685 = vcmp.le.s32.totalorder %v1253, 16
        %vm1686 = vcmp.le.s32.totalorder %v1254, 16
        %vm1687 = vcmp.le.s32.totalorder %v1255, 16
        %vm1688 = vcmp.le.s32.totalorder %v1256, 16
        %vm1689 = vcmp.le.s32.totalorder %v1257, 16
        %vm1690 = vcmp.le.s32.totalorder %v1258, 16
        %vm1691 = vcmp.le.s32.totalorder %v1259, 16
        %vm1692 = vcmp.le.s32.totalorder %v1260, 16
        %vm1693 = vcmp.le.s32.totalorder %v1261, 16
        %vm1694 = vcmp.le.s32.totalorder %v1262, 16
        %vm1695 = vcmp.le.s32.totalorder %v1263, 16
        %vm1696 = vcmp.le.s32.totalorder %v1264, 16
        %vm1697 = vcmp.le.s32.totalorder %v1265, 16
        %vm1698 = vcmp.le.s32.totalorder %v1266, 16
        %vm1699 = vcmp.le.s32.totalorder %v1267, 16
        %vm1700 = vcmp.le.s32.totalorder %v1268, 16
        %vm1701 = vcmp.le.s32.totalorder %v1269, 16
        %vm1702 = vcmp.le.s32.totalorder %v1270, 16
        %vm1703 = vcmp.le.s32.totalorder %v1271, 16
        %vm1704 = vcmp.le.s32.totalorder %v1272, 16
        %vm1705 = vcmp.le.s32.totalorder %v1273, 16
        %vm1706 = vcmp.le.s32.totalorder %v1274, 16
        %vm1707 = vcmp.le.s32.totalorder %v1275, 16
        %vm1708 = vcmp.le.s32.totalorder %v1276, 16
        %vm1709 = vcmp.le.s32.totalorder %v1277, 16
        %vm1710 = vcmp.le.s32.totalorder %v1278, 16
        %vm1711 = vcmp.le.s32.totalorder %v1279, 16
        %vm1712 = vcmp.le.s32.totalorder %v1280, 16
        %vm1713 = vcmp.le.s32.totalorder %v1281, 16
        %vm1714 = vcmp.le.s32.totalorder %v1282, 16
        %vm1715 = vcmp.le.s32.totalorder %v1283, 16
        %vm1716 = vcmp.le.s32.totalorder %v1284, 16
        %vm1717 = vcmp.le.s32.totalorder %v1285, 16
        %vm1718 = vcmp.le.s32.totalorder %v1286, 16
        %vm1719 = vcmp.le.s32.totalorder %v1287, 16
        %vm1720 = vcmp.le.s32.totalorder %v1288, 16
        %vm1721 = vcmp.le.s32.totalorder %v1289, 16
        %vm1722 = vcmp.le.s32.totalorder %v1290, 16
        %vm1723 = vcmp.le.s32.totalorder %v1291, 16
        %vm1724 = vcmp.le.s32.totalorder %v1292, 16
        %vm1725 = vcmp.le.s32.totalorder %v1293, 16
        %vm1726 = vcmp.le.s32.totalorder %v1294, 16
        %vm1727 = vcmp.le.s32.totalorder %v1295, 16
        %vm1728 = vcmp.le.s32.totalorder %v1296, 16
        %vm1729 = vcmp.le.s32.totalorder %v1297, 16
        %vm1730 = vcmp.le.s32.totalorder %v1298, 16
        %vm1731 = vcmp.le.s32.totalorder %v1299, 16
        %vm1732 = vcmp.le.s32.totalorder %v1300, 16
        %vm1733 = vcmp.le.s32.totalorder %v1301, 16
        %vm1734 = vcmp.le.s32.totalorder %v1302, 16
        %vm1735 = vcmp.le.s32.totalorder %v1303, 16
        %vm1736 = vcmp.le.s32.totalorder %v1304, 16
        %vm1737 = vcmp.le.s32.totalorder %v1305, 16
        %vm1738 = vcmp.le.s32.totalorder %v1306, 16
        %vm1739 = vcmp.le.s32.totalorder %v1307, 16
        %vm1740 = vcmp.le.s32.totalorder %v1308, 16
        %vm1741 = vcmp.le.s32.totalorder %v1309, 16
        %vm1742 = vcmp.le.s32.totalorder %v1310, 16
        %vm1743 = vcmp.le.s32.totalorder %v1311, 16
        %vm1744 = vcmp.le.s32.totalorder %v1312, 16
        %vm1745 = vcmp.le.s32.totalorder %v1313, 16
        %vm1746 = vcmp.le.s32.totalorder %v1314, 16
        %vm1747 = vmand %vm1603, %vm1675
        %vm1748 = vmand %vm1604, %vm1676
        %vm1749 = vmand %vm1605, %vm1677
        %vm1750 = vmand %vm1606, %vm1678
        %vm1751 = vmand %vm1607, %vm1679
        %vm1752 = vmand %vm1608, %vm1680
        %vm1753 = vmand %vm1609, %vm1681
        %vm1754 = vmand %vm1610, %vm1682
        %vm1755 = vmand %vm1611, %vm1683
        %vm1756 = vmand %vm1612, %vm1684
        %vm1757 = vmand %vm1613, %vm1685
        %vm1758 = vmand %vm1614, %vm1686
        %vm1759 = vmand %vm1615, %vm1687
        %vm1760 = vmand %vm1616, %vm1688
        %vm1761 = vmand %vm1617, %vm1689
        %vm1762 = vmand %vm1618, %vm1690
        %vm1763 = vmand %vm1619, %vm1691
        %vm1764 = vmand %vm1620, %vm1692
        %vm1765 = vmand %vm1621, %vm1693
        %vm1766 = vmand %vm1622, %vm1694
        %vm1767 = vmand %vm1623, %vm1695
        %vm1768 = vmand %vm1624, %vm1696
        %vm1769 = vmand %vm1625, %vm1697
        %vm1770 = vmand %vm1626, %vm1698
        %vm1771 = vmand %vm1627, %vm1699
        %vm1772 = vmand %vm1628, %vm1700
        %vm1773 = vmand %vm1629, %vm1701
        %vm1774 = vmand %vm1630, %vm1702
        %vm1775 = vmand %vm1631, %vm1703
        %vm1776 = vmand %vm1632, %vm1704
        %vm1777 = vmand %vm1633, %vm1705
        %vm1778 = vmand %vm1634, %vm1706
        %vm1779 = vmand %vm1635, %vm1707
        %vm1780 = vmand %vm1636, %vm1708
        %vm1781 = vmand %vm1637, %vm1709
        %vm1782 = vmand %vm1638, %vm1710
        %vm1783 = vmand %vm1639, %vm1711
        %vm1784 = vmand %vm1640, %vm1712
        %vm1785 = vmand %vm1641, %vm1713
        %vm1786 = vmand %vm1642, %vm1714
        %vm1787 = vmand %vm1643, %vm1715
        %vm1788 = vmand %vm1644, %vm1716
        %vm1789 = vmand %vm1645, %vm1717
        %vm1790 = vmand %vm1646, %vm1718
        %vm1791 = vmand %vm1647, %vm1719
        %vm1792 = vmand %vm1648, %vm1720
        %vm1793 = vmand %vm1649, %vm1721
        %vm1794 = vmand %vm1650, %vm1722
        %vm1795 = vmand %vm1651, %vm1723
        %vm1796 = vmand %vm1652, %vm1724
        %vm1797 = vmand %vm1653, %vm1725
        %vm1798 = vmand %vm1654, %vm1726
        %vm1799 = vmand %vm1655, %vm1727
        %vm1800 = vmand %vm1656, %vm1728
        %vm1801 = vmand %vm1657, %vm1729
        %vm1802 = vmand %vm1658, %vm1730
        %vm1803 = vmand %vm1659, %vm1731
        %vm1804 = vmand %vm1660, %vm1732
        %vm1805 = vmand %vm1661, %vm1733
        %vm1806 = vmand %vm1662, %vm1734
        %vm1807 = vmand %vm1663, %vm1735
        %vm1808 = vmand %vm1664, %vm1736
        %vm1809 = vmand %vm1665, %vm1737
        %vm1810 = vmand %vm1666, %vm1738
        %vm1811 = vmand %vm1667, %vm1739
        %vm1812 = vmand %vm1668, %vm1740
        %vm1813 = vmand %vm1669, %vm1741
        %vm1814 = vmand %vm1670, %vm1742
        %vm1815 = vmand %vm1671, %vm1743
        %vm1816 = vmand %vm1672, %vm1744
        %vm1817 = vmand %vm1673, %vm1745
        %vm1818 = vmand %vm1674, %vm1746
        %v1819 = vsel %vm1747, 1, 0
        %v1820 = vsel %vm1748, 1, 0
        %v1821 = vsel %vm1749, 1, 0
        %v1822 = vsel %vm1750, 1, 0
        %v1823 = vsel %vm1751, 1, 0
        %v1824 = vsel %vm1752, 1, 0
        %v1825 = vsel %vm1753, 1, 0
        %v1826 = vsel %vm1754, 1, 0
        %v1827 = vsel %vm1755, 1, 0
        %v1828 = vsel %vm1756, 1, 0
        %v1829 = vsel %vm1757, 1, 0
        %v1830 = vsel %vm1758, 1, 0
        %v1831 = vsel %vm1759, 1, 0
        %v1832 = vsel %vm1760, 1, 0
        %v1833 = vsel %vm1761, 1, 0
        %v1834 = vsel %vm1762, 1, 0
        %v1835 = vsel %vm1763, 1, 0
        %v1836 = vsel %vm1764, 1, 0
        %v1837 = vsel %vm1765, 1, 0
        %v1838 = vsel %vm1766, 1, 0
        %v1839 = vsel %vm1767, 1, 0
        %v1840 = vsel %vm1768, 1, 0
        %v1841 = vsel %vm1769, 1, 0
        %v1842 = vsel %vm1770, 1, 0
        %v1843 = vsel %vm1771, 1, 0
        %v1844 = vsel %vm1772, 1, 0
        %v1845 = vsel %vm1773, 1, 0
        %v1846 = vsel %vm1774, 1, 0
        %v1847 = vsel %vm1775, 1, 0
        %v1848 = vsel %vm1776, 1, 0
        %v1849 = vsel %vm1777, 1, 0
        %v1850 = vsel %vm1778, 1, 0
        %v1851 = vsel %vm1779, 1, 0
        %v1852 = vsel %vm1780, 1, 0
        %v1853 = vsel %vm1781, 1, 0
        %v1854 = vsel %vm1782, 1, 0
        %v1855 = vsel %vm1783, 1, 0
        %v1856 = vsel %vm1784, 1, 0
        %v1857 = vsel %vm1785, 1, 0
        %v1858 = vsel %vm1786, 1, 0
        %v1859 = vsel %vm1787, 1, 0
        %v1860 = vsel %vm1788, 1, 0
        %v1861 = vsel %vm1789, 1, 0
        %v1862 = vsel %vm1790, 1, 0
        %v1863 = vsel %vm1791, 1, 0
        %v1864 = vsel %vm1792, 1, 0
        %v1865 = vsel %vm1793, 1, 0
        %v1866 = vsel %vm1794, 1, 0
        %v1867 = vsel %vm1795, 1, 0
        %v1868 = vsel %vm1796, 1, 0
        %v1869 = vsel %vm1797, 1, 0
        %v1870 = vsel %vm1798, 1, 0
        %v1871 = vsel %vm1799, 1, 0
        %v1872 = vsel %vm1800, 1, 0
        %v1873 = vsel %vm1801, 1, 0
        %v1874 = vsel %vm1802, 1, 0
        %v1875 = vsel %vm1803, 1, 0
        %v1876 = vsel %vm1804, 1, 0
        %v1877 = vsel %vm1805, 1, 0
        %v1878 = vsel %vm1806, 1, 0
        %v1879 = vsel %vm1807, 1, 0
        %v1880 = vsel %vm1808, 1, 0
        %v1881 = vsel %vm1809, 1, 0
        %v1882 = vsel %vm1810, 1, 0
        %v1883 = vsel %vm1811, 1, 0
        %v1884 = vsel %vm1812, 1, 0
        %v1885 = vsel %vm1813, 1, 0
        %v1886 = vsel %vm1814, 1, 0
        %v1887 = vsel %vm1815, 1, 0
        %v1888 = vsel %vm1816, 1, 0
        %v1889 = vsel %vm1817, 1, 0
        %v1890 = vsel %vm1818, 1, 0
        %vm1891 = vcmp.eq.s32.totalorder %v1819, 1
        %vm1892 = vcmp.eq.s32.totalorder %v1820, 1
        %vm1893 = vcmp.eq.s32.totalorder %v1821, 1
        %vm1894 = vcmp.eq.s32.totalorder %v1822, 1
        %vm1895 = vcmp.eq.s32.totalorder %v1823, 1
        %vm1896 = vcmp.eq.s32.totalorder %v1824, 1
        %vm1897 = vcmp.eq.s32.totalorder %v1825, 1
        %vm1898 = vcmp.eq.s32.totalorder %v1826, 1
        %vm1899 = vcmp.eq.s32.totalorder %v1827, 1
        %vm1900 = vcmp.eq.s32.totalorder %v1828, 1
        %vm1901 = vcmp.eq.s32.totalorder %v1829, 1
        %vm1902 = vcmp.eq.s32.totalorder %v1830, 1
        %vm1903 = vcmp.eq.s32.totalorder %v1831, 1
        %vm1904 = vcmp.eq.s32.totalorder %v1832, 1
        %vm1905 = vcmp.eq.s32.totalorder %v1833, 1
        %vm1906 = vcmp.eq.s32.totalorder %v1834, 1
        %vm1907 = vcmp.eq.s32.totalorder %v1835, 1
        %vm1908 = vcmp.eq.s32.totalorder %v1836, 1
        %vm1909 = vcmp.eq.s32.totalorder %v1837, 1
        %vm1910 = vcmp.eq.s32.totalorder %v1838, 1
        %vm1911 = vcmp.eq.s32.totalorder %v1839, 1
        %vm1912 = vcmp.eq.s32.totalorder %v1840, 1
        %vm1913 = vcmp.eq.s32.totalorder %v1841, 1
        %vm1914 = vcmp.eq.s32.totalorder %v1842, 1
        %vm1915 = vcmp.eq.s32.totalorder %v1843, 1
        %vm1916 = vcmp.eq.s32.totalorder %v1844, 1
        %vm1917 = vcmp.eq.s32.totalorder %v1845, 1
        %vm1918 = vcmp.eq.s32.totalorder %v1846, 1
        %vm1919 = vcmp.eq.s32.totalorder %v1847, 1
        %vm1920 = vcmp.eq.s32.totalorder %v1848, 1
        %vm1921 = vcmp.eq.s32.totalorder %v1849, 1
        %vm1922 = vcmp.eq.s32.totalorder %v1850, 1
        %vm1923 = vcmp.eq.s32.totalorder %v1851, 1
        %vm1924 = vcmp.eq.s32.totalorder %v1852, 1
        %vm1925 = vcmp.eq.s32.totalorder %v1853, 1
        %vm1926 = vcmp.eq.s32.totalorder %v1854, 1
        %vm1927 = vcmp.eq.s32.totalorder %v1855, 1
        %vm1928 = vcmp.eq.s32.totalorder %v1856, 1
        %vm1929 = vcmp.eq.s32.totalorder %v1857, 1
        %vm1930 = vcmp.eq.s32.totalorder %v1858, 1
        %vm1931 = vcmp.eq.s32.totalorder %v1859, 1
        %vm1932 = vcmp.eq.s32.totalorder %v1860, 1
        %vm1933 = vcmp.eq.s32.totalorder %v1861, 1
        %vm1934 = vcmp.eq.s32.totalorder %v1862, 1
        %vm1935 = vcmp.eq.s32.totalorder %v1863, 1
        %vm1936 = vcmp.eq.s32.totalorder %v1864, 1
        %vm1937 = vcmp.eq.s32.totalorder %v1865, 1
        %vm1938 = vcmp.eq.s32.totalorder %v1866, 1
        %vm1939 = vcmp.eq.s32.totalorder %v1867, 1
        %vm1940 = vcmp.eq.s32.totalorder %v1868, 1
        %vm1941 = vcmp.eq.s32.totalorder %v1869, 1
        %vm1942 = vcmp.eq.s32.totalorder %v1870, 1
        %vm1943 = vcmp.eq.s32.totalorder %v1871, 1
        %vm1944 = vcmp.eq.s32.totalorder %v1872, 1
        %vm1945 = vcmp.eq.s32.totalorder %v1873, 1
        %vm1946 = vcmp.eq.s32.totalorder %v1874, 1
        %vm1947 = vcmp.eq.s32.totalorder %v1875, 1
        %vm1948 = vcmp.eq.s32.totalorder %v1876, 1
        %vm1949 = vcmp.eq.s32.totalorder %v1877, 1
        %vm1950 = vcmp.eq.s32.totalorder %v1878, 1
        %vm1951 = vcmp.eq.s32.totalorder %v1879, 1
        %vm1952 = vcmp.eq.s32.totalorder %v1880, 1
        %vm1953 = vcmp.eq.s32.totalorder %v1881, 1
        %vm1954 = vcmp.eq.s32.totalorder %v1882, 1
        %vm1955 = vcmp.eq.s32.totalorder %v1883, 1
        %vm1956 = vcmp.eq.s32.totalorder %v1884, 1
        %vm1957 = vcmp.eq.s32.totalorder %v1885, 1
        %vm1958 = vcmp.eq.s32.totalorder %v1886, 1
        %vm1959 = vcmp.eq.s32.totalorder %v1887, 1
        %vm1960 = vcmp.eq.s32.totalorder %v1888, 1
        %vm1961 = vcmp.eq.s32.totalorder %v1889, 1
        %vm1962 = vcmp.eq.s32.totalorder %v1890, 1
        %v1963 = vsel %vm1891, %v1026, 0.0
        %v1964 = vsel %vm1892, %v1027, 0.0
        %v1965 = vsel %vm1893, %v1028, 0.0
        %v1966 = vsel %vm1894, %v1029, 0.0
        %v1967 = vsel %vm1895, %v1030, 0.0
        %v1968 = vsel %vm1896, %v1031, 0.0
        %v1969 = vsel %vm1897, %v1032, 0.0
        %v1970 = vsel %vm1898, %v1033, 0.0
        %v1971 = vsel %vm1899, %v1034, 0.0
        %v1972 = vsel %vm1900, %v1035, 0.0
        %v1973 = vsel %vm1901, %v1036, 0.0
        %v1974 = vsel %vm1902, %v1037, 0.0
        %v1975 = vsel %vm1903, %v1038, 0.0
        %v1976 = vsel %vm1904, %v1039, 0.0
        %v1977 = vsel %vm1905, %v1040, 0.0
        %v1978 = vsel %vm1906, %v1041, 0.0
        %v1979 = vsel %vm1907, %v1042, 0.0
        %v1980 = vsel %vm1908, %v1043, 0.0
        %v1981 = vsel %vm1909, %v1044, 0.0
        %v1982 = vsel %vm1910, %v1045, 0.0
        %v1983 = vsel %vm1911, %v1046, 0.0
        %v1984 = vsel %vm1912, %v1047, 0.0
        %v1985 = vsel %vm1913, %v1048, 0.0
        %v1986 = vsel %vm1914, %v1049, 0.0
        %v1987 = vsel %vm1915, %v1050, 0.0
        %v1988 = vsel %vm1916, %v1051, 0.0
        %v1989 = vsel %vm1917, %v1052, 0.0
        %v1990 = vsel %vm1918, %v1053, 0.0
        %v1991 = vsel %vm1919, %v1054, 0.0
        %v1992 = vsel %vm1920, %v1055, 0.0
        %v1993 = vsel %vm1921, %v1056, 0.0
        %v1994 = vsel %vm1922, %v1057, 0.0
        %v1995 = vsel %vm1923, %v1058, 0.0
        %v1996 = vsel %vm1924, %v1059, 0.0
        %v1997 = vsel %vm1925, %v1060, 0.0
        %v1998 = vsel %vm1926, %v1061, 0.0
        %v1999 = vsel %vm1927, %v1062, 0.0
        %v2000 = vsel %vm1928, %v1063, 0.0
        %v2001 = vsel %vm1929, %v1064, 0.0
        %v2002 = vsel %vm1930, %v1065, 0.0
        %v2003 = vsel %vm1931, %v1066, 0.0
        %v2004 = vsel %vm1932, %v1067, 0.0
        %v2005 = vsel %vm1933, %v1068, 0.0
        %v2006 = vsel %vm1934, %v1069, 0.0
        %v2007 = vsel %vm1935, %v1070, 0.0
        %v2008 = vsel %vm1936, %v1071, 0.0
        %v2009 = vsel %vm1937, %v1072, 0.0
        %v2010 = vsel %vm1938, %v1073, 0.0
        %v2011 = vsel %vm1939, %v1074, 0.0
        %v2012 = vsel %vm1940, %v1075, 0.0
        %v2013 = vsel %vm1941, %v1076, 0.0
        %v2014 = vsel %vm1942, %v1077, 0.0
        %v2015 = vsel %vm1943, %v1078, 0.0
        %v2016 = vsel %vm1944, %v1079, 0.0
        %v2017 = vsel %vm1945, %v1080, 0.0
        %v2018 = vsel %vm1946, %v1081, 0.0
        %v2019 = vsel %vm1947, %v1082, 0.0
        %v2020 = vsel %vm1948, %v1083, 0.0
        %v2021 = vsel %vm1949, %v1084, 0.0
        %v2022 = vsel %vm1950, %v1085, 0.0
        %v2023 = vsel %vm1951, %v1086, 0.0
        %v2024 = vsel %vm1952, %v1087, 0.0
        %v2025 = vsel %vm1953, %v1088, 0.0
        %v2026 = vsel %vm1954, %v1089, 0.0
        %v2027 = vsel %vm1955, %v1090, 0.0
        %v2028 = vsel %vm1956, %v1091, 0.0
        %v2029 = vsel %vm1957, %v1092, 0.0
        %v2030 = vsel %vm1958, %v1093, 0.0
        %v2031 = vsel %vm1959, %v1094, 0.0
        %v2032 = vsel %vm1960, %v1095, 0.0
        %v2033 = vsel %vm1961, %v1096, 0.0
        %v2034 = vsel %vm1962, %v1097, 0.0
        %2035 = vst [vmem:[#allocation2] sm:$0xff] %v1963
        %2036 = vst [vmem:[#allocation2 + $0x8] sm:$0xff] %v1964
        %2037 = vst [vmem:[#allocation2 + $0x10] sm:$0xff] %v1965
        %2038 = vst [vmem:[#allocation2 + $0x18] sm:$0xff] %v1966
        %2039 = vst [vmem:[#allocation2 + $0x20] sm:$0xff] %v1967
        %2040 = vst [vmem:[#allocation2 + $0x28] sm:$0xff] %v1968
        %2041 = vst [vmem:[#allocation2 + $0x30] sm:$0xff] %v1969
        %2042 = vst [vmem:[#allocation2 + $0x38] sm:$0xff] %v1970
        %2043 = vst [vmem:[#allocation2 + $0x40] sm:$0xff] %v1971
        %2044 = vst [vmem:[#allocation2 + $0x48] sm:$0xff] %v1972
        %2045 = vst [vmem:[#allocation2 + $0x50] sm:$0xff] %v1973
        %2046 = vst [vmem:[#allocation2 + $0x58] sm:$0xff] %v1974
        %2047 = vst [vmem:[#allocation2 + $0x60] sm:$0xff] %v1975
        %2048 = vst [vmem:[#allocation2 + $0x68] sm:$0xff] %v1976
        %2049 = vst [vmem:[#allocation2 + $0x70] sm:$0xff] %v1977
        %2050 = vst [vmem:[#allocation2 + $0x78] sm:$0xff] %v1978
        %2051 = vst [vmem:[#allocation2 + $0x80] sm:$0xff] %v1979
        %2052 = vst [vmem:[#allocation2 + $0x88] sm:$0xff] %v1980
        %2053 = vst [vmem:[#allocation2 + $0x90] sm:$0xff] %v1981
        %2054 = vst [vmem:[#allocation2 + $0x98] sm:$0xff] %v1982
        %2055 = vst [vmem:[#allocation2 + $0xa0] sm:$0xff] %v1983
        %2056 = vst [vmem:[#allocation2 + $0xa8] sm:$0xff] %v1984
        %2057 = vst [vmem:[#allocation2 + $0xb0] sm:$0xff] %v1985
        %2058 = vst [vmem:[#allocation2 + $0xb8] sm:$0xff] %v1986
        %2059 = vst [vmem:[#allocation2 + $0xc0] sm:$0xff] %v1987
        %2060 = vst [vmem:[#allocation2 + $0xc8] sm:$0xff] %v1988
        %2061 = vst [vmem:[#allocation2 + $0xd0] sm:$0xff] %v1989
        %2062 = vst [vmem:[#allocation2 + $0xd8] sm:$0xff] %v1990
        %2063 = vst [vmem:[#allocation2 + $0xe0] sm:$0xff] %v1991
        %2064 = vst [vmem:[#allocation2 + $0xe8] sm:$0xff] %v1992
        %2065 = vst [vmem:[#allocation2 + $0xf0] sm:$0xff] %v1993
        %2066 = vst [vmem:[#allocation2 + $0xf8] sm:$0xff] %v1994
        %2067 = vst [vmem:[#allocation2 + $0x100] sm:$0xff] %v1995
        %2068 = vst [vmem:[#allocation2 + $0x108] sm:$0xff] %v1996
        %2069 = vst [vmem:[#allocation2 + $0x110] sm:$0xff] %v1997
        %2070 = vst [vmem:[#allocation2 + $0x118] sm:$0xff] %v1998
        %2071 = vst [vmem:[#allocation2 + $0x120] sm:$0xff] %v1999
        %2072 = vst [vmem:[#allocation2 + $0x128] sm:$0xff] %v2000
        %2073 = vst [vmem:[#allocation2 + $0x130] sm:$0xff] %v2001
        %2074 = vst [vmem:[#allocation2 + $0x138] sm:$0xff] %v2002
        %2075 = vst [vmem:[#allocation2 + $0x140] sm:$0xff] %v2003
        %2076 = vst [vmem:[#allocation2 + $0x148] sm:$0xff] %v2004
        %2077 = vst [vmem:[#allocation2 + $0x150] sm:$0xff] %v2005
        %2078 = vst [vmem:[#allocation2 + $0x158] sm:$0xff] %v2006
        %2079 = vst [vmem:[#allocation2 + $0x160] sm:$0xff] %v2007
        %2080 = vst [vmem:[#allocation2 + $0x168] sm:$0xff] %v2008
        %2081 = vst [vmem:[#allocation2 + $0x170] sm:$0xff] %v2009
        %2082 = vst [vmem:[#allocation2 + $0x178] sm:$0xff] %v2010
        %2083 = vst [vmem:[#allocation2 + $0x180] sm:$0xff] %v2011
        %2084 = vst [vmem:[#allocation2 + $0x188] sm:$0xff] %v2012
        %2085 = vst [vmem:[#allocation2 + $0x190] sm:$0xff] %v2013
        %2086 = vst [vmem:[#allocation2 + $0x198] sm:$0xff] %v2014
        %2087 = vst [vmem:[#allocation2 + $0x1a0] sm:$0xff] %v2015
        %2088 = vst [vmem:[#allocation2 + $0x1a8] sm:$0xff] %v2016
        %2089 = vst [vmem:[#allocation2 + $0x1b0] sm:$0xff] %v2017
        %2090 = vst [vmem:[#allocation2 + $0x1b8] sm:$0xff] %v2018
        %2091 = vst [vmem:[#allocation2 + $0x1c0] sm:$0xff] %v2019
        %2092 = vst [vmem:[#allocation2 + $0x1c8] sm:$0xff] %v2020
        %2093 = vst [vmem:[#allocation2 + $0x1d0] sm:$0xff] %v2021
        %2094 = vst [vmem:[#allocation2 + $0x1d8] sm:$0xff] %v2022
        %2095 = vst [vmem:[#allocation2 + $0x1e0] sm:$0xff] %v2023
        %2096 = vst [vmem:[#allocation2 + $0x1e8] sm:$0xff] %v2024
        %2097 = vst [vmem:[#allocation2 + $0x1f0] sm:$0xff] %v2025
        %2098 = vst [vmem:[#allocation2 + $0x1f8] sm:$0xff] %v2026
        %2099 = vst [vmem:[#allocation2 + $0x200] sm:$0xff] %v2027
        %2100 = vst [vmem:[#allocation2 + $0x208] sm:$0xff] %v2028
        %2101 = vst [vmem:[#allocation2 + $0x210] sm:$0xff] %v2029
        %2102 = vst [vmem:[#allocation2 + $0x218] sm:$0xff] %v2030
        %2103 = vst [vmem:[#allocation2 + $0x220] sm:$0xff] %v2031
        %2104 = vst [vmem:[#allocation2 + $0x228] sm:$0xff] %v2032
        %2105 = vst [vmem:[#allocation2 + $0x230] sm:$0xff] %v2033
        %2106 = vst [vmem:[#allocation2 + $0x238] sm:$0xff] %v2034
        %v2107 = vld [vmem:[%s296] sm:$0xff]
        %v2108 = vld [vmem:[%s296 + $0x8] sm:$0xff]
        %v2109 = vld [vmem:[%s296 + $0x10] sm:$0xff]
        %v2110 = vld [vmem:[%s296 + $0x18] sm:$0xff]
        %v2111 = vld [vmem:[%s296 + $0x20] sm:$0xff]
        %v2112 = vld [vmem:[%s296 + $0x28] sm:$0xff]
        %v2113 = vld [vmem:[%s296 + $0x30] sm:$0xff]
        %v2114 = vld [vmem:[%s296 + $0x38] sm:$0xff]
        %v2115 = vld [vmem:[%s296 + $0x40] sm:$0xff]
        %v2116 = vld [vmem:[%s296 + $0x48] sm:$0xff]
        %v2117 = vld [vmem:[%s296 + $0x50] sm:$0xff]
        %v2118 = vld [vmem:[%s296 + $0x58] sm:$0xff]
        %v2119 = vld [vmem:[%s296 + $0x60] sm:$0xff]
        %v2120 = vld [vmem:[%s296 + $0x68] sm:$0xff]
        %v2121 = vld [vmem:[%s296 + $0x70] sm:$0xff]
        %v2122 = vld [vmem:[%s296 + $0x78] sm:$0xff]
        %v2123 = vld [vmem:[%s296 + $0x80] sm:$0xff]
        %v2124 = vld [vmem:[%s296 + $0x88] sm:$0xff]
        %v2125 = vld [vmem:[%s296 + $0x90] sm:$0xff]
        %v2126 = vld [vmem:[%s296 + $0x98] sm:$0xff]
        %v2127 = vld [vmem:[%s296 + $0xa0] sm:$0xff]
        %v2128 = vld [vmem:[%s296 + $0xa8] sm:$0xff]
        %v2129 = vld [vmem:[%s296 + $0xb0] sm:$0xff]
        %v2130 = vld [vmem:[%s296 + $0xb8] sm:$0xff]
        %v2131 = vld [vmem:[%s296 + $0xc0] sm:$0xff]
        %v2132 = vld [vmem:[%s296 + $0xc8] sm:$0xff]
        %v2133 = vld [vmem:[%s296 + $0xd0] sm:$0xff]
        %v2134 = vld [vmem:[%s296 + $0xd8] sm:$0xff]
        %v2135 = vld [vmem:[%s296 + $0xe0] sm:$0xff]
        %v2136 = vld [vmem:[%s296 + $0xe8] sm:$0xff]
        %v2137 = vld [vmem:[%s296 + $0xf0] sm:$0xff]
        %v2138 = vld [vmem:[%s296 + $0xf8] sm:$0xff]
        %v2139 = vld [vmem:[%s4] sm:$0x7]
        %v2140 = vld [vmem:[#allocation2] sm:$0xff]
        %v2141 = vld [vmem:[#allocation2 + $0x8] sm:$0xff]
        %v2142 = vld [vmem:[#allocation2 + $0x20] sm:$0xff]
        %v2143 = vld [vmem:[#allocation2 + $0x28] sm:$0xff]
        %v2144 = vld [vmem:[#allocation2 + $0x40] sm:$0xff]
        %v2145 = vld [vmem:[#allocation2 + $0x48] sm:$0xff]
        %v2146 = vld [vmem:[#allocation2 + $0x60] sm:$0xff]
        %v2147 = vld [vmem:[#allocation2 + $0x68] sm:$0xff]
        %v2148 = vld [vmem:[#allocation2 + $0x80] sm:$0xff]
        %v2149 = vld [vmem:[#allocation2 + $0x88] sm:$0xff]
        %v2150 = vld [vmem:[#allocation2 + $0xa0] sm:$0xff]
        %v2151 = vld [vmem:[#allocation2 + $0xa8] sm:$0xff]
        %v2152 = vld [vmem:[#allocation2 + $0xc0] sm:$0xff]
        %v2153 = vld [vmem:[#allocation2 + $0xc8] sm:$0xff]
        %v2154 = vld [vmem:[#allocation2 + $0xe0] sm:$0xff]
        %v2155 = vld [vmem:[#allocation2 + $0xe8] sm:$0xff]
        %v2156 = vld [vmem:[#allocation2 + $0x100] sm:$0xff]
        %v2157 = vld [vmem:[#allocation2 + $0x108] sm:$0xff]
        %v2158 = vld [vmem:[#allocation2 + $0x120] sm:$0xff]
        %v2159 = vld [vmem:[#allocation2 + $0x128] sm:$0xff]
        %v2160 = vld [vmem:[#allocation2 + $0x140] sm:$0xff]
        %v2161 = vld [vmem:[#allocation2 + $0x148] sm:$0xff]
        %v2162 = vld [vmem:[#allocation2 + $0x160] sm:$0xff]
        %v2163 = vld [vmem:[#allocation2 + $0x168] sm:$0xff]
        %v2164 = vld [vmem:[#allocation2 + $0x180] sm:$0xff]
        %v2165 = vld [vmem:[#allocation2 + $0x188] sm:$0xff]
        %v2166 = vld [vmem:[#allocation2 + $0x1a0] sm:$0xff]
        %v2167 = vld [vmem:[#allocation2 + $0x1a8] sm:$0xff]
        %v2168 = vld [vmem:[#allocation2 + $0x1c0] sm:$0xff]
        %v2169 = vld [vmem:[#allocation2 + $0x1c8] sm:$0xff]
        %v2170 = vld [vmem:[#allocation2 + $0x1e0] sm:$0xff]
        %v2171 = vld [vmem:[#allocation2 + $0x1e8] sm:$0xff]
        %v2172 = vld [vmem:[%s3] sm:$0xff]
        %v2173 = vld [vmem:[%s3 + $0x8] sm:$0xff]
        %v2174 = vld [vmem:[%s3 + $0x10] sm:$0xff]
        %v2175 = vld [vmem:[%s3 + $0x18] sm:$0xff]
        %v2176 = vld [vmem:[%s3 + $0x20] sm:$0xff]
        %v2177 = vld [vmem:[%s3 + $0x28] sm:$0xff]
        %v2178 = vld [vmem:[%s3 + $0x30] sm:$0xff]
        %v2179 = vld [vmem:[%s3 + $0x38] sm:$0xff]
        %v2180 = vld [vmem:[%s3 + $0x40] sm:$0xff]
        %v2181 = vld [vmem:[%s3 + $0x48] sm:$0xff]
        %v2182 = vld [vmem:[%s3 + $0x50] sm:$0xff]
        %v2183 = vld [vmem:[%s3 + $0x58] sm:$0xff]
        %v2184 = vld [vmem:[%s3 + $0x60] sm:$0xff]
        %v2185 = vld [vmem:[%s3 + $0x68] sm:$0xff]
        %v2186 = vld [vmem:[%s3 + $0x70] sm:$0xff]
        %v2187 = vld [vmem:[%s3 + $0x78] sm:$0xff]
        %2188 = vmatprep.subr.mxu0 0.0
        %2189 = vmatpush1.msra.mxu0 %v2172
        %2190 = vmatprep.subr.mxu0 0.0
        %2191 = vmatpush1.msra.mxu0 %v2173
        %2192 = vmatprep.subr.mxu0 0.0
        %2193 = vmatpush1.msra.mxu0 %v2174
        %2194 = vmatprep.subr.mxu0 0.0
        %2195 = vmatpush1.msra.mxu0 %v2175
        %2196 = vmatprep.subr.mxu0 0.0
        %2197 = vmatpush1.msra.mxu0 %v2176
        %2198 = vmatprep.subr.mxu0 0.0
        %2199 = vmatpush1.msra.mxu0 %v2177
        %2200 = vmatprep.subr.mxu0 0.0
        %2201 = vmatpush1.msra.mxu0 %v2178
        %2202 = vmatprep.subr.mxu0 0.0
        %2203 = vmatpush1.msra.mxu0 %v2179
        %2204 = vmatprep.subr.mxu0 0.0
        %2205 = vmatpush1.msra.mxu0 %v2180
        %2206 = vmatprep.subr.mxu0 0.0
        %2207 = vmatpush1.msra.mxu0 %v2181
        %2208 = vmatprep.subr.mxu0 0.0
        %2209 = vmatpush1.msra.mxu0 %v2182
        %2210 = vmatprep.subr.mxu0 0.0
        %2211 = vmatpush1.msra.mxu0 %v2183
        %2212 = vmatprep.subr.mxu0 0.0
        %2213 = vmatpush1.msra.mxu0 %v2184
        %2214 = vmatprep.subr.mxu0 0.0
        %2215 = vmatpush1.msra.mxu0 %v2185
        %2216 = vmatprep.subr.mxu0 0.0
        %2217 = vmatpush1.msra.mxu0 %v2186
        %2218 = vmatprep.subr.mxu0 0.0
        %2219 = vmatpush1.msra.mxu0 %v2187
        %2220 = vmatprep.subr.mxu0 0.0
        %2221 = vmatpush1.msra.mxu0 0.0
        %2222 = vmatprep.subr.mxu0 0.0
        %2223 = vmatpush1.msra.mxu0 0.0
        %2224 = vmatprep.subr.mxu0 0.0
        %2225 = vmatpush1.msra.mxu0 0.0
        %2226 = vmatprep.subr.mxu0 0.0
        %2227 = vmatpush1.msra.mxu0 0.0
        %2228 = vmatprep.subr.mxu0 0.0
        %2229 = vmatpush1.msra.mxu0 0.0
        %2230 = vmatprep.subr.mxu0 0.0
        %2231 = vmatpush1.msra.mxu0 0.0
        %2232 = vmatprep.subr.mxu0 0.0
        %2233 = vmatpush1.msra.mxu0 0.0
        %2234 = vmatprep.subr.mxu0 0.0
        %2235 = vmatpush1.msra.mxu0 0.0
        %2236 = vmatprep.subr.mxu0 0.0
        %2237 = vmatpush1.msra.mxu0 0.0
        %2238 = vmatprep.subr.mxu0 0.0
        %2239 = vmatpush1.msra.mxu0 0.0
        %2240 = vmatprep.subr.mxu0 0.0
        %2241 = vmatpush1.msra.mxu0 0.0
        %2242 = vmatprep.subr.mxu0 0.0
        %2243 = vmatpush1.msra.mxu0 0.0
        %2244 = vmatprep.subr.mxu0 0.0
        %2245 = vmatpush1.msra.mxu0 0.0
        %2246 = vmatprep.subr.mxu0 0.0
        %2247 = vmatpush1.msra.mxu0 0.0
        %2248 = vmatprep.subr.mxu0 0.0
        %2249 = vmatpush1.msra.mxu0 0.0
        %2250 = vmatprep.subr.mxu0 0.0
        %2251 = vmatpush1.msra.mxu0 0.0
        %2252 = vmatprep.mubr.f32.mxu0 0.0
        %2253 = vmatmul.mubr.f32.gmra.mrb[0].mxu0 %v2140
        %v2254 = vpop.f32.mrb[0].mxu0
        %v2255 = vadd.f32 0.0, %v2254
        %v2256 = vpop.f32.mrb[0].mxu0
        %2257 = vmatprep.mubr.f32.mxu0 0.0
        %2258 = vmatmul.mubr.f32.gmra.mrb[0].mxu0 %v2141
        %v2259 = vpop.f32.mrb[0].mxu0
        %v2260 = vadd.f32 0.0, %v2259
        %v2261 = vpop.f32.mrb[0].mxu0
        %2262 = vmatprep.mubr.f32.mxu0 0.0
        %2263 = vmatmul.mubr.f32.gmra.mrb[0].mxu0 %v2142
        %v2264 = vpop.f32.mrb[0].mxu0
        %v2265 = vadd.f32 0.0, %v2264
        %v2266 = vpop.f32.mrb[0].mxu0
        %2267 = vmatprep.mubr.f32.mxu0 0.0
        %2268 = vmatmul.mubr.f32.gmra.mrb[0].mxu0 %v2143
        %v2269 = vpop.f32.mrb[0].mxu0
        %v2270 = vadd.f32 0.0, %v2269
        %v2271 = vpop.f32.mrb[0].mxu0
        %2272 = vmatprep.mubr.f32.mxu0 0.0
        %2273 = vmatmul.mubr.f32.gmra.mrb[0].mxu0 %v2144
        %v2274 = vpop.f32.mrb[0].mxu0
        %v2275 = vadd.f32 0.0, %v2274
        %v2276 = vpop.f32.mrb[0].mxu0
        %2277 = vmatprep.mubr.f32.mxu0 0.0
        %2278 = vmatmul.mubr.f32.gmra.mrb[0].mxu0 %v2145
        %v2279 = vpop.f32.mrb[0].mxu0
        %v2280 = vadd.f32 0.0, %v2279
        %v2281 = vpop.f32.mrb[0].mxu0
        %2282 = vmatprep.mubr.f32.mxu0 0.0
        %2283 = vmatmul.mubr.f32.gmra.mrb[0].mxu0 %v2146
        %v2284 = vpop.f32.mrb[0].mxu0
        %v2285 = vadd.f32 0.0, %v2284
        %v2286 = vpop.f32.mrb[0].mxu0
        %2287 = vmatprep.mubr.f32.mxu0 0.0
        %2288 = vmatmul.mubr.f32.gmra.mrb[0].mxu0 %v2147
        %v2289 = vpop.f32.mrb[0].mxu0
        %v2290 = vadd.f32 0.0, %v2289
        %v2291 = vpop.f32.mrb[0].mxu0
        %2292 = vmatprep.mubr.f32.mxu0 0.0
        %2293 = vmatmul.mubr.f32.gmra.mrb[0].mxu0 %v2148
        %v2294 = vpop.f32.mrb[0].mxu0
        %v2295 = vadd.f32 0.0, %v2294
        %v2296 = vpop.f32.mrb[0].mxu0
        %2297 = vmatprep.mubr.f32.mxu0 0.0
        %2298 = vmatmul.mubr.f32.gmra.mrb[0].mxu0 %v2149
        %v2299 = vpop.f32.mrb[0].mxu0
        %v2300 = vadd.f32 0.0, %v2299
        %v2301 = vpop.f32.mrb[0].mxu0
        %2302 = vmatprep.mubr.f32.mxu0 0.0
        %2303 = vmatmul.mubr.f32.gmra.mrb[0].mxu0 %v2150
        %v2304 = vpop.f32.mrb[0].mxu0
        %v2305 = vadd.f32 0.0, %v2304
        %v2306 = vpop.f32.mrb[0].mxu0
        %2307 = vmatprep.mubr.f32.mxu0 0.0
        %2308 = vmatmul.mubr.f32.gmra.mrb[0].mxu0 %v2151
        %v2309 = vpop.f32.mrb[0].mxu0
        %v2310 = vadd.f32 0.0, %v2309
        %v2311 = vpop.f32.mrb[0].mxu0
        %2312 = vmatprep.mubr.f32.mxu0 0.0
        %2313 = vmatmul.mubr.f32.gmra.mrb[0].mxu0 %v2152
        %v2314 = vpop.f32.mrb[0].mxu0
        %v2315 = vadd.f32 0.0, %v2314
        %v2316 = vpop.f32.mrb[0].mxu0
        %2317 = vmatprep.mubr.f32.mxu0 0.0
        %2318 = vmatmul.mubr.f32.gmra.mrb[0].mxu0 %v2153
        %v2319 = vpop.f32.mrb[0].mxu0
        %v2320 = vadd.f32 0.0, %v2319
        %v2321 = vpop.f32.mrb[0].mxu0
        %2322 = vmatprep.mubr.f32.mxu0 0.0
        %2323 = vmatmul.mubr.f32.gmra.mrb[0].mxu0 %v2154
        %v2324 = vpop.f32.mrb[0].mxu0
        %v2325 = vadd.f32 0.0, %v2324
        %v2326 = vpop.f32.mrb[0].mxu0
        %2327 = vmatprep.mubr.f32.mxu0 0.0
        %2328 = vmatmul.mubr.f32.gmra.mrb[0].mxu0 %v2155
        %v2329 = vpop.f32.mrb[0].mxu0
        %v2330 = vadd.f32 0.0, %v2329
        %v2331 = vpop.f32.mrb[0].mxu0
        %2332 = vmatprep.mubr.f32.mxu0 0.0
        %2333 = vmatmul.mubr.f32.gmra.mrb[0].mxu0 %v2156
        %v2334 = vpop.f32.mrb[0].mxu0
        %v2335 = vadd.f32 0.0, %v2334
        %v2336 = vpop.f32.mrb[0].mxu0
        %2337 = vmatprep.mubr.f32.mxu0 0.0
        %2338 = vmatmul.mubr.f32.gmra.mrb[0].mxu0 %v2157
        %v2339 = vpop.f32.mrb[0].mxu0
        %v2340 = vadd.f32 0.0, %v2339
        %v2341 = vpop.f32.mrb[0].mxu0
        %2342 = vmatprep.mubr.f32.mxu0 0.0
        %2343 = vmatmul.mubr.f32.gmra.mrb[0].mxu0 %v2158
        %v2344 = vpop.f32.mrb[0].mxu0
        %v2345 = vadd.f32 0.0, %v2344
        %v2346 = vpop.f32.mrb[0].mxu0
        %2347 = vmatprep.mubr.f32.mxu0 0.0
        %2348 = vmatmul.mubr.f32.gmra.mrb[0].mxu0 %v2159
        %v2349 = vpop.f32.mrb[0].mxu0
        %v2350 = vadd.f32 0.0, %v2349
        %v2351 = vpop.f32.mrb[0].mxu0
        %2352 = vmatprep.mubr.f32.mxu0 0.0
        %2353 = vmatmul.mubr.f32.gmra.mrb[0].mxu0 %v2160
        %v2354 = vpop.f32.mrb[0].mxu0
        %v2355 = vadd.f32 0.0, %v2354
        %v2356 = vpop.f32.mrb[0].mxu0
        %2357 = vmatprep.mubr.f32.mxu0 0.0
        %2358 = vmatmul.mubr.f32.gmra.mrb[0].mxu0 %v2161
        %v2359 = vpop.f32.mrb[0].mxu0
        %v2360 = vadd.f32 0.0, %v2359
        %v2361 = vpop.f32.mrb[0].mxu0
        %2362 = vmatprep.mubr.f32.mxu0 0.0
        %2363 = vmatmul.mubr.f32.gmra.mrb[0].mxu0 %v2162
        %v2364 = vpop.f32.mrb[0].mxu0
        %v2365 = vadd.f32 0.0, %v2364
        %v2366 = vpop.f32.mrb[0].mxu0
        %2367 = vmatprep.mubr.f32.mxu0 0.0
        %2368 = vmatmul.mubr.f32.gmra.mrb[0].mxu0 %v2163
        %v2369 = vpop.f32.mrb[0].mxu0
        %v2370 = vadd.f32 0.0, %v2369
        %v2371 = vpop.f32.mrb[0].mxu0
        %2372 = vmatprep.mubr.f32.mxu0 0.0
        %2373 = vmatmul.mubr.f32.gmra.mrb[0].mxu0 %v2164
        %v2374 = vpop.f32.mrb[0].mxu0
        %v2375 = vadd.f32 0.0, %v2374
        %v2376 = vpop.f32.mrb[0].mxu0
        %2377 = vmatprep.mubr.f32.mxu0 0.0
        %2378 = vmatmul.mubr.f32.gmra.mrb[0].mxu0 %v2165
        %v2379 = vpop.f32.mrb[0].mxu0
        %v2380 = vadd.f32 0.0, %v2379
        %v2381 = vpop.f32.mrb[0].mxu0
        %2382 = vmatprep.mubr.f32.mxu0 0.0
        %2383 = vmatmul.mubr.f32.gmra.mrb[0].mxu0 %v2166
        %v2384 = vpop.f32.mrb[0].mxu0
        %v2385 = vadd.f32 0.0, %v2384
        %v2386 = vpop.f32.mrb[0].mxu0
        %2387 = vmatprep.mubr.f32.mxu0 0.0
        %2388 = vmatmul.mubr.f32.gmra.mrb[0].mxu0 %v2167
        %v2389 = vpop.f32.mrb[0].mxu0
        %v2390 = vadd.f32 0.0, %v2389
        %v2391 = vpop.f32.mrb[0].mxu0
        %2392 = vmatprep.mubr.f32.mxu0 0.0
        %2393 = vmatmul.mubr.f32.gmra.mrb[0].mxu0 %v2168
        %v2394 = vpop.f32.mrb[0].mxu0
        %v2395 = vadd.f32 0.0, %v2394
        %v2396 = vpop.f32.mrb[0].mxu0
        %2397 = vmatprep.mubr.f32.mxu0 0.0
        %2398 = vmatmul.mubr.f32.gmra.mrb[0].mxu0 %v2169
        %v2399 = vpop.f32.mrb[0].mxu0
        %v2400 = vadd.f32 0.0, %v2399
        %v2401 = vpop.f32.mrb[0].mxu0
        %2402 = vmatprep.mubr.f32.mxu0 0.0
        %2403 = vmatmul.mubr.f32.gmra.mrb[0].mxu0 %v2170
        %v2404 = vpop.f32.mrb[0].mxu0
        %v2405 = vadd.f32 0.0, %v2404
        %v2406 = vpop.f32.mrb[0].mxu0
        %2407 = vmatprep.mubr.f32.mxu0 0.0
        %2408 = vmatmul.mubr.f32.gmra.mrb[0].mxu0 %v2171
        %v2409 = vpop.f32.mrb[0].mxu0
        %v2410 = vadd.f32 0.0, %v2409
        %v2411 = vpop.f32.mrb[0].mxu0
        %2412 = vdwg.mxu0
        %vm2413 = vcmask 23552
        %v2415 = vsel %vm2413, %v2107, 0
        %v2418 = vsel %vm2413, %v2108, 0
        %v2421 = vsel %vm2413, %v2109, 0
        %v2424 = vsel %vm2413, %v2110, 0
        %v2427 = vsel %vm2413, %v2111, 0
        %v2430 = vsel %vm2413, %v2112, 0
        %v2433 = vsel %vm2413, %v2113, 0
        %v2436 = vsel %vm2413, %v2114, 0
        %v2439 = vsel %vm2413, %v2115, 0
        %v2442 = vsel %vm2413, %v2116, 0
        %v2445 = vsel %vm2413, %v2117, 0
        %v2448 = vsel %vm2413, %v2118, 0
        %v2451 = vsel %vm2413, %v2119, 0
        %v2454 = vsel %vm2413, %v2120, 0
        %v2457 = vsel %vm2413, %v2121, 0
        %v2460 = vsel %vm2413, %v2122, 0
        %v2463 = vsel %vm2413, %v2123, 0
        %v2466 = vsel %vm2413, %v2124, 0
        %v2469 = vsel %vm2413, %v2125, 0
        %v2472 = vsel %vm2413, %v2126, 0
        %v2475 = vsel %vm2413, %v2127, 0
        %v2478 = vsel %vm2413, %v2128, 0
        %v2481 = vsel %vm2413, %v2129, 0
        %v2484 = vsel %vm2413, %v2130, 0
        %v2487 = vsel %vm2413, %v2131, 0
        %v2490 = vsel %vm2413, %v2132, 0
        %v2493 = vsel %vm2413, %v2133, 0
        %v2496 = vsel %vm2413, %v2134, 0
        %v2499 = vsel %vm2413, %v2135, 0
        %v2502 = vsel %vm2413, %v2136, 0
        %v2505 = vsel %vm2413, %v2137, 0
        %v2508 = vsel %vm2413, %v2138, 0
        %v2511 = vsel %vm597, %v2139, 0
        %2513 = vmatprep.subr.mxu0 0.0
        %2514 = vmatpush1.msra.mxu0 %v2511
        %2515 = vmatprep.subr.mxu0 0.0
        %2516 = vmatpush1.msra.mxu0 0.0
        %2517 = vmatprep.subr.mxu0 0.0
        %2518 = vmatpush1.msra.mxu0 0.0
        %2519 = vmatprep.subr.mxu0 0.0
        %2520 = vmatpush1.msra.mxu0 0.0
        %2521 = vmatprep.subr.mxu0 0.0
        %2522 = vmatpush1.msra.mxu0 0.0
        %2523 = vmatprep.subr.mxu0 0.0
        %2524 = vmatpush1.msra.mxu0 0.0
        %2525 = vmatprep.subr.mxu0 0.0
        %2526 = vmatpush1.msra.mxu0 0.0
        %2527 = vmatprep.subr.mxu0 0.0
        %2528 = vmatpush1.msra.mxu0 0.0
        %2529 = vmatprep.subr.mxu0 0.0
        %2530 = vmatpush1.msra.mxu0 0.0
        %2531 = vmatprep.subr.mxu0 0.0
        %2532 = vmatpush1.msra.mxu0 0.0
        %2533 = vmatprep.subr.mxu0 0.0
        %2534 = vmatpush1.msra.mxu0 0.0
        %2535 = vmatprep.subr.mxu0 0.0
        %2536 = vmatpush1.msra.mxu0 0.0
        %2537 = vmatprep.subr.mxu0 0.0
        %2538 = vmatpush1.msra.mxu0 0.0
        %2539 = vmatprep.subr.mxu0 0.0
        %2540 = vmatpush1.msra.mxu0 0.0
        %2541 = vmatprep.subr.mxu0 0.0
        %2542 = vmatpush1.msra.mxu0 0.0
        %2543 = vmatprep.subr.mxu0 0.0
        %2544 = vmatpush1.msra.mxu0 0.0
        %2545 = vmatprep.subr.mxu0 0.0
        %2546 = vmatpush1.msra.mxu0 0.0
        %2547 = vmatprep.subr.mxu0 0.0
        %2548 = vmatpush1.msra.mxu0 0.0
        %2549 = vmatprep.subr.mxu0 0.0
        %2550 = vmatpush1.msra.mxu0 0.0
        %2551 = vmatprep.subr.mxu0 0.0
        %2552 = vmatpush1.msra.mxu0 0.0
        %2553 = vmatprep.subr.mxu0 0.0
        %2554 = vmatpush1.msra.mxu0 0.0
        %2555 = vmatprep.subr.mxu0 0.0
        %2556 = vmatpush1.msra.mxu0 0.0
        %2557 = vmatprep.subr.mxu0 0.0
        %2558 = vmatpush1.msra.mxu0 0.0
        %2559 = vmatprep.subr.mxu0 0.0
        %2560 = vmatpush1.msra.mxu0 0.0
        %2561 = vmatprep.subr.mxu0 0.0
        %2562 = vmatpush1.msra.mxu0 0.0
        %2563 = vmatprep.subr.mxu0 0.0
        %2564 = vmatpush1.msra.mxu0 0.0
        %2565 = vmatprep.subr.mxu0 0.0
        %2566 = vmatpush1.msra.mxu0 0.0
        %2567 = vmatprep.subr.mxu0 0.0
        %2568 = vmatpush1.msra.mxu0 0.0
        %2569 = vmatprep.subr.mxu0 0.0
        %2570 = vmatpush1.msra.mxu0 0.0
        %2571 = vmatprep.subr.mxu0 0.0
        %2572 = vmatpush1.msra.mxu0 0.0
        %2573 = vmatprep.subr.mxu0 0.0
        %2574 = vmatpush1.msra.mxu0 0.0
        %2575 = vmatprep.subr.mxu0 0.0
        %2576 = vmatpush1.msra.mxu0 0.0
        %2577 = vmatprep.mubr.f32.mxu0 0.0
        %2578 = vmatmul.mubr.f32.gmra.mrb[0].mxu0 %v2415
        %v2579 = vpop.f32.mrb[0].mxu0
        %v2580 = vadd.f32 %v2255, %v2579
        %v2581 = vpop.f32.mrb[0].mxu0
        %2582 = vmatprep.mubr.f32.mxu0 0.0
        %2583 = vmatmul.mubr.f32.gmra.mrb[0].mxu0 %v2418
        %v2584 = vpop.f32.mrb[0].mxu0
        %v2585 = vadd.f32 %v2260, %v2584
        %v2586 = vpop.f32.mrb[0].mxu0
        %2587 = vmatprep.mubr.f32.mxu0 0.0
        %2588 = vmatmul.mubr.f32.gmra.mrb[0].mxu0 %v2421
        %v2589 = vpop.f32.mrb[0].mxu0
        %v2590 = vadd.f32 %v2265, %v2589
        %v2591 = vpop.f32.mrb[0].mxu0
        %2592 = vmatprep.mubr.f32.mxu0 0.0
        %2593 = vmatmul.mubr.f32.gmra.mrb[0].mxu0 %v2424
        %v2594 = vpop.f32.mrb[0].mxu0
        %v2595 = vadd.f32 %v2270, %v2594
        %v2596 = vpop.f32.mrb[0].mxu0
        %2597 = vmatprep.mubr.f32.mxu0 0.0
        %2598 = vmatmul.mubr.f32.gmra.mrb[0].mxu0 %v2427
        %v2599 = vpop.f32.mrb[0].mxu0
        %v2600 = vadd.f32 %v2275, %v2599
        %v2601 = vpop.f32.mrb[0].mxu0
        %2602 = vmatprep.mubr.f32.mxu0 0.0
        %2603 = vmatmul.mubr.f32.gmra.mrb[0].mxu0 %v2430
        %v2604 = vpop.f32.mrb[0].mxu0
        %v2605 = vadd.f32 %v2280, %v2604
        %v2606 = vpop.f32.mrb[0].mxu0
        %2607 = vmatprep.mubr.f32.mxu0 0.0
        %2608 = vmatmul.mubr.f32.gmra.mrb[0].mxu0 %v2433
        %v2609 = vpop.f32.mrb[0].mxu0
        %v2610 = vadd.f32 %v2285, %v2609
        %v2611 = vpop.f32.mrb[0].mxu0
        %2612 = vmatprep.mubr.f32.mxu0 0.0
        %2613 = vmatmul.mubr.f32.gmra.mrb[0].mxu0 %v2436
        %v2614 = vpop.f32.mrb[0].mxu0
        %v2615 = vadd.f32 %v2290, %v2614
        %v2616 = vpop.f32.mrb[0].mxu0
        %2617 = vmatprep.mubr.f32.mxu0 0.0
        %2618 = vmatmul.mubr.f32.gmra.mrb[0].mxu0 %v2439
        %v2619 = vpop.f32.mrb[0].mxu0
        %v2620 = vadd.f32 %v2295, %v2619
        %v2621 = vpop.f32.mrb[0].mxu0
        %2622 = vmatprep.mubr.f32.mxu0 0.0
        %2623 = vmatmul.mubr.f32.gmra.mrb[0].mxu0 %v2442
        %v2624 = vpop.f32.mrb[0].mxu0
        %v2625 = vadd.f32 %v2300, %v2624
        %v2626 = vpop.f32.mrb[0].mxu0
        %2627 = vmatprep.mubr.f32.mxu0 0.0
        %2628 = vmatmul.mubr.f32.gmra.mrb[0].mxu0 %v2445
        %v2629 = vpop.f32.mrb[0].mxu0
        %v2630 = vadd.f32 %v2305, %v2629
        %v2631 = vpop.f32.mrb[0].mxu0
        %2632 = vmatprep.mubr.f32.mxu0 0.0
        %2633 = vmatmul.mubr.f32.gmra.mrb[0].mxu0 %v2448
        %v2634 = vpop.f32.mrb[0].mxu0
        %v2635 = vadd.f32 %v2310, %v2634
        %v2636 = vpop.f32.mrb[0].mxu0
        %2637 = vmatprep.mubr.f32.mxu0 0.0
        %2638 = vmatmul.mubr.f32.gmra.mrb[0].mxu0 %v2451
        %v2639 = vpop.f32.mrb[0].mxu0
        %v2640 = vadd.f32 %v2315, %v2639
        %v2641 = vpop.f32.mrb[0].mxu0
        %2642 = vmatprep.mubr.f32.mxu0 0.0
        %2643 = vmatmul.mubr.f32.gmra.mrb[0].mxu0 %v2454
        %v2644 = vpop.f32.mrb[0].mxu0
        %v2645 = vadd.f32 %v2320, %v2644
        %v2646 = vpop.f32.mrb[0].mxu0
        %2647 = vmatprep.mubr.f32.mxu0 0.0
        %2648 = vmatmul.mubr.f32.gmra.mrb[0].mxu0 %v2457
        %v2649 = vpop.f32.mrb[0].mxu0
        %v2650 = vadd.f32 %v2325, %v2649
        %v2651 = vpop.f32.mrb[0].mxu0
        %2652 = vmatprep.mubr.f32.mxu0 0.0
        %2653 = vmatmul.mubr.f32.gmra.mrb[0].mxu0 %v2460
        %v2654 = vpop.f32.mrb[0].mxu0
        %v2655 = vadd.f32 %v2330, %v2654
        %v2656 = vpop.f32.mrb[0].mxu0
        %2657 = vmatprep.mubr.f32.mxu0 0.0
        %2658 = vmatmul.mubr.f32.gmra.mrb[0].mxu0 %v2463
        %v2659 = vpop.f32.mrb[0].mxu0
        %v2660 = vadd.f32 %v2335, %v2659
        %v2661 = vpop.f32.mrb[0].mxu0
        %2662 = vmatprep.mubr.f32.mxu0 0.0
        %2663 = vmatmul.mubr.f32.gmra.mrb[0].mxu0 %v2466
        %v2664 = vpop.f32.mrb[0].mxu0
        %v2665 = vadd.f32 %v2340, %v2664
        %v2666 = vpop.f32.mrb[0].mxu0
        %2667 = vmatprep.mubr.f32.mxu0 0.0
        %2668 = vmatmul.mubr.f32.gmra.mrb[0].mxu0 %v2469
        %v2669 = vpop.f32.mrb[0].mxu0
        %v2670 = vadd.f32 %v2345, %v2669
        %v2671 = vpop.f32.mrb[0].mxu0
        %2672 = vmatprep.mubr.f32.mxu0 0.0
        %2673 = vmatmul.mubr.f32.gmra.mrb[0].mxu0 %v2472
        %v2674 = vpop.f32.mrb[0].mxu0
        %v2675 = vadd.f32 %v2350, %v2674
        %v2676 = vpop.f32.mrb[0].mxu0
        %2677 = vmatprep.mubr.f32.mxu0 0.0
        %2678 = vmatmul.mubr.f32.gmra.mrb[0].mxu0 %v2475
        %v2679 = vpop.f32.mrb[0].mxu0
        %v2680 = vadd.f32 %v2355, %v2679
        %v2681 = vpop.f32.mrb[0].mxu0
        %2682 = vmatprep.mubr.f32.mxu0 0.0
        %2683 = vmatmul.mubr.f32.gmra.mrb[0].mxu0 %v2478
        %v2684 = vpop.f32.mrb[0].mxu0
        %v2685 = vadd.f32 %v2360, %v2684
        %v2686 = vpop.f32.mrb[0].mxu0
        %2687 = vmatprep.mubr.f32.mxu0 0.0
        %2688 = vmatmul.mubr.f32.gmra.mrb[0].mxu0 %v2481
        %v2689 = vpop.f32.mrb[0].mxu0
        %v2690 = vadd.f32 %v2365, %v2689
        %v2691 = vpop.f32.mrb[0].mxu0
        %2692 = vmatprep.mubr.f32.mxu0 0.0
        %2693 = vmatmul.mubr.f32.gmra.mrb[0].mxu0 %v2484
        %v2694 = vpop.f32.mrb[0].mxu0
        %v2695 = vadd.f32 %v2370, %v2694
        %v2696 = vpop.f32.mrb[0].mxu0
        %2697 = vmatprep.mubr.f32.mxu0 0.0
        %2698 = vmatmul.mubr.f32.gmra.mrb[0].mxu0 %v2487
        %v2699 = vpop.f32.mrb[0].mxu0
        %v2700 = vadd.f32 %v2375, %v2699
        %v2701 = vpop.f32.mrb[0].mxu0
        %2702 = vmatprep.mubr.f32.mxu0 0.0
        %2703 = vmatmul.mubr.f32.gmra.mrb[0].mxu0 %v2490
        %v2704 = vpop.f32.mrb[0].mxu0
        %v2705 = vadd.f32 %v2380, %v2704
        %v2706 = vpop.f32.mrb[0].mxu0
        %2707 = vmatprep.mubr.f32.mxu0 0.0
        %2708 = vmatmul.mubr.f32.gmra.mrb[0].mxu0 %v2493
        %v2709 = vpop.f32.mrb[0].mxu0
        %v2710 = vadd.f32 %v2385, %v2709
        %v2711 = vpop.f32.mrb[0].mxu0
        %2712 = vmatprep.mubr.f32.mxu0 0.0
        %2713 = vmatmul.mubr.f32.gmra.mrb[0].mxu0 %v2496
        %v2714 = vpop.f32.mrb[0].mxu0
        %v2715 = vadd.f32 %v2390, %v2714
        %v2716 = vpop.f32.mrb[0].mxu0
        %2717 = vmatprep.mubr.f32.mxu0 0.0
        %2718 = vmatmul.mubr.f32.gmra.mrb[0].mxu0 %v2499
        %v2719 = vpop.f32.mrb[0].mxu0
        %v2720 = vadd.f32 %v2395, %v2719
        %v2721 = vpop.f32.mrb[0].mxu0
        %2722 = vmatprep.mubr.f32.mxu0 0.0
        %2723 = vmatmul.mubr.f32.gmra.mrb[0].mxu0 %v2502
        %v2724 = vpop.f32.mrb[0].mxu0
        %v2725 = vadd.f32 %v2400, %v2724
        %v2726 = vpop.f32.mrb[0].mxu0
        %2727 = vmatprep.mubr.f32.mxu0 0.0
        %2728 = vmatmul.mubr.f32.gmra.mrb[0].mxu0 %v2505
        %v2729 = vpop.f32.mrb[0].mxu0
        %v2730 = vadd.f32 %v2405, %v2729
        %v2731 = vpop.f32.mrb[0].mxu0
        %2732 = vmatprep.mubr.f32.mxu0 0.0
        %2733 = vmatmul.mubr.f32.gmra.mrb[0].mxu0 %v2508
        %v2734 = vpop.f32.mrb[0].mxu0
        %v2735 = vadd.f32 %v2410, %v2734
        %v2736 = vpop.f32.mrb[0].mxu0
        %2737 = vdwg.mxu0
        %v2738 = vld [vmem:[#allocation2 + $0x1] sm:$0xff]
        %v2739 = vld [vmem:[#allocation2 + $0x9] sm:$0xff]
        %v2740 = vld [vmem:[#allocation2 + $0x21] sm:$0xff]
        %v2741 = vld [vmem:[#allocation2 + $0x29] sm:$0xff]
        %v2742 = vld [vmem:[#allocation2 + $0x41] sm:$0xff]
        %v2743 = vld [vmem:[#allocation2 + $0x49] sm:$0xff]
        %v2744 = vld [vmem:[#allocation2 + $0x61] sm:$0xff]
        %v2745 = vld [vmem:[#allocation2 + $0x69] sm:$0xff]
        %v2746 = vld [vmem:[#allocation2 + $0x81] sm:$0xff]
        %v2747 = vld [vmem:[#allocation2 + $0x89] sm:$0xff]
        %v2748 = vld [vmem:[#allocation2 + $0xa1] sm:$0xff]
        %v2749 = vld [vmem:[#allocation2 + $0xa9] sm:$0xff]
        %v2750 = vld [vmem:[#allocation2 + $0xc1] sm:$0xff]
        %v2751 = vld [vmem:[#allocation2 + $0xc9] sm:$0xff]
        %v2752 = vld [vmem:[#allocation2 + $0xe1] sm:$0xff]
        %v2753 = vld [vmem:[#allocation2 + $0xe9] sm:$0xff]
        %v2754 = vld [vmem:[#allocation2 + $0x101] sm:$0xff]
        %v2755 = vld [vmem:[#allocation2 + $0x109] sm:$0xff]
        %v2756 = vld [vmem:[#allocation2 + $0x121] sm:$0xff]
        %v2757 = vld [vmem:[#allocation2 + $0x129] sm:$0xff]
        %v2758 = vld [vmem:[#allocation2 + $0x141] sm:$0xff]
        %v2759 = vld [vmem:[#allocation2 + $0x149] sm:$0xff]
        %v2760 = vld [vmem:[#allocation2 + $0x161] sm:$0xff]
        %v2761 = vld [vmem:[#allocation2 + $0x169] sm:$0xff]
        %v2762 = vld [vmem:[#allocation2 + $0x181] sm:$0xff]
        %v2763 = vld [vmem:[#allocation2 + $0x189] sm:$0xff]
        %v2764 = vld [vmem:[#allocation2 + $0x1a1] sm:$0xff]
        %v2765 = vld [vmem:[#allocation2 + $0x1a9] sm:$0xff]
        %v2766 = vld [vmem:[#allocation2 + $0x1c1] sm:$0xff]
        %v2767 = vld [vmem:[#allocation2 + $0x1c9] sm:$0xff]
        %v2768 = vld [vmem:[#allocation2 + $0x1e1] sm:$0xff]
        %v2769 = vld [vmem:[#allocation2 + $0x1e9] sm:$0xff]
        %s2770 = scalar_lea.vmem %s3, 128
        %v2771 = vld [vmem:[%s2770] sm:$0xff]
        %v2772 = vld [vmem:[%s2770 + $0x8] sm:$0xff]
        %v2773 = vld [vmem:[%s2770 + $0x10] sm:$0xff]
        %v2774 = vld [vmem:[%s2770 + $0x18] sm:$0xff]
        %v2775 = vld [vmem:[%s2770 + $0x20] sm:$0xff]
        %v2776 = vld [vmem:[%s2770 + $0x28] sm:$0xff]
        %v2777 = vld [vmem:[%s2770 + $0x30] sm:$0xff]
        %v2778 = vld [vmem:[%s2770 + $0x38] sm:$0xff]
        %v2779 = vld [vmem:[%s2770 + $0x40] sm:$0xff]
        %v2780 = vld [vmem:[%s2770 + $0x48] sm:$0xff]
        %v2781 = vld [vmem:[%s2770 + $0x50] sm:$0xff]
        %v2782 = vld [vmem:[%s2770 + $0x58] sm:$0xff]
        %v2783 = vld [vmem:[%s2770 + $0x60] sm:$0xff]
        %v2784 = vld [vmem:[%s2770 + $0x68] sm:$0xff]
        %v2785 = vld [vmem:[%s2770 + $0x70] sm:$0xff]
        %v2786 = vld [vmem:[%s2770 + $0x78] sm:$0xff]
        %2787 = vmatprep.subr.mxu0 0.0
        %2788 = vmatpush1.msra.mxu0 %v2771
        %2789 = vmatprep.subr.mxu0 0.0
        %2790 = vmatpush1.msra.mxu0 %v2772
        %2791 = vmatprep.subr.mxu0 0.0
        %2792 = vmatpush1.msra.mxu0 %v2773
        %2793 = vmatprep.subr.mxu0 0.0
        %2794 = vmatpush1.msra.mxu0 %v2774
        %2795 = vmatprep.subr.mxu0 0.0
        %2796 = vmatpush1.msra.mxu0 %v2775
        %2797 = vmatprep.subr.mxu0 0.0
        %2798 = vmatpush1.msra.mxu0 %v2776
        %2799 = vmatprep.subr.mxu0 0.0
        %2800 = vmatpush1.msra.mxu0 %v2777
        %2801 = vmatprep.subr.mxu0 0.0
        %2802 = vmatpush1.msra.mxu0 %v2778
        %2803 = vmatprep.subr.mxu0 0.0
        %2804 = vmatpush1.msra.mxu0 %v2779
        %2805 = vmatprep.subr.mxu0 0.0
        %2806 = vmatpush1.msra.mxu0 %v2780
        %2807 = vmatprep.subr.mxu0 0.0
        %2808 = vmatpush1.msra.mxu0 %v2781
        %2809 = vmatprep.subr.mxu0 0.0
        %2810 = vmatpush1.msra.mxu0 %v2782
        %2811 = vmatprep.subr.mxu0 0.0
        %2812 = vmatpush1.msra.mxu0 %v2783
        %2813 = vmatprep.subr.mxu0 0.0
        %2814 = vmatpush1.msra.mxu0 %v2784
        %2815 = vmatprep.subr.mxu0 0.0
        %2816 = vmatpush1.msra.mxu0 %v2785
        %2817 = vmatprep.subr.mxu0 0.0
        %2818 = vmatpush1.msra.mxu0 %v2786
        %2819 = vmatprep.subr.mxu0 0.0
        %2820 = vmatpush1.msra.mxu0 0.0
        %2821 = vmatprep.subr.mxu0 0.0
        %2822 = vmatpush1.msra.mxu0 0.0
        %2823 = vmatprep.subr.mxu0 0.0
        %2824 = vmatpush1.msra.mxu0 0.0
        %2825 = vmatprep.subr.mxu0 0.0
        %2826 = vmatpush1.msra.mxu0 0.0
        %2827 = vmatprep.subr.mxu0 0.0
        %2828 = vmatpush1.msra.mxu0 0.0
        %2829 = vmatprep.subr.mxu0 0.0
        %2830 = vmatpush1.msra.mxu0 0.0
        %2831 = vmatprep.subr.mxu0 0.0
        %2832 = vmatpush1.msra.mxu0 0.0
        %2833 = vmatprep.subr.mxu0 0.0
        %2834 = vmatpush1.msra.mxu0 0.0
        %2835 = vmatprep.subr.mxu0 0.0
        %2836 = vmatpush1.msra.mxu0 0.0
        %2837 = vmatprep.subr.mxu0 0.0
        %2838 = vmatpush1.msra.mxu0 0.0
        %2839 = vmatprep.subr.mxu0 0.0
        %2840 = vmatpush1.msra.mxu0 0.0
        %2841 = vmatprep.subr.mxu0 0.0
        %2842 = vmatpush1.msra.mxu0 0.0
        %2843 = vmatprep.subr.mxu0 0.0
        %2844 = vmatpush1.msra.mxu0 0.0
        %2845 = vmatprep.subr.mxu0 0.0
        %2846 = vmatpush1.msra.mxu0 0.0
        %2847 = vmatprep.subr.mxu0 0.0
        %2848 = vmatpush1.msra.mxu0 0.0
        %2849 = vmatprep.subr.mxu0 0.0
        %2850 = vmatpush1.msra.mxu0 0.0
        %2851 = vmatprep.mubr.f32.mxu0 0.0
        %2852 = vmatmul.mubr.f32.gmra.mrb[0].mxu0 %v2738
        %v2853 = vpop.f32.mrb[0].mxu0
        %v2854 = vadd.f32 0.0, %v2853
        %v2855 = vpop.f32.mrb[0].mxu0
        %2856 = vmatprep.mubr.f32.mxu0 0.0
        %2857 = vmatmul.mubr.f32.gmra.mrb[0].mxu0 %v2739
        %v2858 = vpop.f32.mrb[0].mxu0
        %v2859 = vadd.f32 0.0, %v2858
        %v2860 = vpop.f32.mrb[0].mxu0
        %2861 = vmatprep.mubr.f32.mxu0 0.0
        %2862 = vmatmul.mubr.f32.gmra.mrb[0].mxu0 %v2740
        %v2863 = vpop.f32.mrb[0].mxu0
        %v2864 = vadd.f32 0.0, %v2863
        %v2865 = vpop.f32.mrb[0].mxu0
        %2866 = vmatprep.mubr.f32.mxu0 0.0
        %2867 = vmatmul.mubr.f32.gmra.mrb[0].mxu0 %v2741
        %v2868 = vpop.f32.mrb[0].mxu0
        %v2869 = vadd.f32 0.0, %v2868
        %v2870 = vpop.f32.mrb[0].mxu0
        %2871 = vmatprep.mubr.f32.mxu0 0.0
        %2872 = vmatmul.mubr.f32.gmra.mrb[0].mxu0 %v2742
        %v2873 = vpop.f32.mrb[0].mxu0
        %v2874 = vadd.f32 0.0, %v2873
        %v2875 = vpop.f32.mrb[0].mxu0
        %2876 = vmatprep.mubr.f32.mxu0 0.0
        %2877 = vmatmul.mubr.f32.gmra.mrb[0].mxu0 %v2743
        %v2878 = vpop.f32.mrb[0].mxu0
        %v2879 = vadd.f32 0.0, %v2878
        %v2880 = vpop.f32.mrb[0].mxu0
        %2881 = vmatprep.mubr.f32.mxu0 0.0
        %2882 = vmatmul.mubr.f32.gmra.mrb[0].mxu0 %v2744
        %v2883 = vpop.f32.mrb[0].mxu0
        %v2884 = vadd.f32 0.0, %v2883
        %v2885 = vpop.f32.mrb[0].mxu0
        %2886 = vmatprep.mubr.f32.mxu0 0.0
        %2887 = vmatmul.mubr.f32.gmra.mrb[0].mxu0 %v2745
        %v2888 = vpop.f32.mrb[0].mxu0
        %v2889 = vadd.f32 0.0, %v2888
        %v2890 = vpop.f32.mrb[0].mxu0
        %2891 = vmatprep.mubr.f32.mxu0 0.0
        %2892 = vmatmul.mubr.f32.gmra.mrb[0].mxu0 %v2746
        %v2893 = vpop.f32.mrb[0].mxu0
        %v2894 = vadd.f32 0.0, %v2893
        %v2895 = vpop.f32.mrb[0].mxu0
        %2896 = vmatprep.mubr.f32.mxu0 0.0
        %2897 = vmatmul.mubr.f32.gmra.mrb[0].mxu0 %v2747
        %v2898 = vpop.f32.mrb[0].mxu0
        %v2899 = vadd.f32 0.0, %v2898
        %v2900 = vpop.f32.mrb[0].mxu0
        %2901 = vmatprep.mubr.f32.mxu0 0.0
        %2902 = vmatmul.mubr.f32.gmra.mrb[0].mxu0 %v2748
        %v2903 = vpop.f32.mrb[0].mxu0
        %v2904 = vadd.f32 0.0, %v2903
        %v2905 = vpop.f32.mrb[0].mxu0
        %2906 = vmatprep.mubr.f32.mxu0 0.0
        %2907 = vmatmul.mubr.f32.gmra.mrb[0].mxu0 %v2749
        %v2908 = vpop.f32.mrb[0].mxu0
        %v2909 = vadd.f32 0.0, %v2908
        %v2910 = vpop.f32.mrb[0].mxu0
        %2911 = vmatprep.mubr.f32.mxu0 0.0
        %2912 = vmatmul.mubr.f32.gmra.mrb[0].mxu0 %v2750
        %v2913 = vpop.f32.mrb[0].mxu0
        %v2914 = vadd.f32 0.0, %v2913
        %v2915 = vpop.f32.mrb[0].mxu0
        %2916 = vmatprep.mubr.f32.mxu0 0.0
        %2917 = vmatmul.mubr.f32.gmra.mrb[0].mxu0 %v2751
        %v2918 = vpop.f32.mrb[0].mxu0
        %v2919 = vadd.f32 0.0, %v2918
        %v2920 = vpop.f32.mrb[0].mxu0
        %2921 = vmatprep.mubr.f32.mxu0 0.0
        %2922 = vmatmul.mubr.f32.gmra.mrb[0].mxu0 %v2752
        %v2923 = vpop.f32.mrb[0].mxu0
        %v2924 = vadd.f32 0.0, %v2923
        %v2925 = vpop.f32.mrb[0].mxu0
        %2926 = vmatprep.mubr.f32.mxu0 0.0
        %2927 = vmatmul.mubr.f32.gmra.mrb[0].mxu0 %v2753
        %v2928 = vpop.f32.mrb[0].mxu0
        %v2929 = vadd.f32 0.0, %v2928
        %v2930 = vpop.f32.mrb[0].mxu0
        %2931 = vmatprep.mubr.f32.mxu0 0.0
        %2932 = vmatmul.mubr.f32.gmra.mrb[0].mxu0 %v2754
        %v2933 = vpop.f32.mrb[0].mxu0
        %v2934 = vadd.f32 0.0, %v2933
        %v2935 = vpop.f32.mrb[0].mxu0
        %2936 = vmatprep.mubr.f32.mxu0 0.0
        %2937 = vmatmul.mubr.f32.gmra.mrb[0].mxu0 %v2755
        %v2938 = vpop.f32.mrb[0].mxu0
        %v2939 = vadd.f32 0.0, %v2938
        %v2940 = vpop.f32.mrb[0].mxu0
        %2941 = vmatprep.mubr.f32.mxu0 0.0
        %2942 = vmatmul.mubr.f32.gmra.mrb[0].mxu0 %v2756
        %v2943 = vpop.f32.mrb[0].mxu0
        %v2944 = vadd.f32 0.0, %v2943
        %v2945 = vpop.f32.mrb[0].mxu0
        %2946 = vmatprep.mubr.f32.mxu0 0.0
        %2947 = vmatmul.mubr.f32.gmra.mrb[0].mxu0 %v2757
        %v2948 = vpop.f32.mrb[0].mxu0
        %v2949 = vadd.f32 0.0, %v2948
        %v2950 = vpop.f32.mrb[0].mxu0
        %2951 = vmatprep.mubr.f32.mxu0 0.0
        %2952 = vmatmul.mubr.f32.gmra.mrb[0].mxu0 %v2758
        %v2953 = vpop.f32.mrb[0].mxu0
        %v2954 = vadd.f32 0.0, %v2953
        %v2955 = vpop.f32.mrb[0].mxu0
        %2956 = vmatprep.mubr.f32.mxu0 0.0
        %2957 = vmatmul.mubr.f32.gmra.mrb[0].mxu0 %v2759
        %v2958 = vpop.f32.mrb[0].mxu0
        %v2959 = vadd.f32 0.0, %v2958
        %v2960 = vpop.f32.mrb[0].mxu0
        %2961 = vmatprep.mubr.f32.mxu0 0.0
        %2962 = vmatmul.mubr.f32.gmra.mrb[0].mxu0 %v2760
        %v2963 = vpop.f32.mrb[0].mxu0
        %v2964 = vadd.f32 0.0, %v2963
        %v2965 = vpop.f32.mrb[0].mxu0
        %2966 = vmatprep.mubr.f32.mxu0 0.0
        %2967 = vmatmul.mubr.f32.gmra.mrb[0].mxu0 %v2761
        %v2968 = vpop.f32.mrb[0].mxu0
        %v2969 = vadd.f32 0.0, %v2968
        %v2970 = vpop.f32.mrb[0].mxu0
        %2971 = vmatprep.mubr.f32.mxu0 0.0
        %2972 = vmatmul.mubr.f32.gmra.mrb[0].mxu0 %v2762
        %v2973 = vpop.f32.mrb[0].mxu0
        %v2974 = vadd.f32 0.0, %v2973
        %v2975 = vpop.f32.mrb[0].mxu0
        %2976 = vmatprep.mubr.f32.mxu0 0.0
        %2977 = vmatmul.mubr.f32.gmra.mrb[0].mxu0 %v2763
        %v2978 = vpop.f32.mrb[0].mxu0
        %v2979 = vadd.f32 0.0, %v2978
        %v2980 = vpop.f32.mrb[0].mxu0
        %2981 = vmatprep.mubr.f32.mxu0 0.0
        %2982 = vmatmul.mubr.f32.gmra.mrb[0].mxu0 %v2764
        %v2983 = vpop.f32.mrb[0].mxu0
        %v2984 = vadd.f32 0.0, %v2983
        %v2985 = vpop.f32.mrb[0].mxu0
        %2986 = vmatprep.mubr.f32.mxu0 0.0
        %2987 = vmatmul.mubr.f32.gmra.mrb[0].mxu0 %v2765
        %v2988 = vpop.f32.mrb[0].mxu0
        %v2989 = vadd.f32 0.0, %v2988
        %v2990 = vpop.f32.mrb[0].mxu0
        %2991 = vmatprep.mubr.f32.mxu0 0.0
        %2992 = vmatmul.mubr.f32.gmra.mrb[0].mxu0 %v2766
        %v2993 = vpop.f32.mrb[0].mxu0
        %v2994 = vadd.f32 0.0, %v2993
        %v2995 = vpop.f32.mrb[0].mxu0
        %2996 = vmatprep.mubr.f32.mxu0 0.0
        %2997 = vmatmul.mubr.f32.gmra.mrb[0].mxu0 %v2767
        %v2998 = vpop.f32.mrb[0].mxu0
        %v2999 = vadd.f32 0.0, %v2998
        %v3000 = vpop.f32.mrb[0].mxu0
        %3001 = vmatprep.mubr.f32.mxu0 0.0
        %3002 = vmatmul.mubr.f32.gmra.mrb[0].mxu0 %v2768
        %v3003 = vpop.f32.mrb[0].mxu0
        %v3004 = vadd.f32 0.0, %v3003
        %v3005 = vpop.f32.mrb[0].mxu0
        %3006 = vmatprep.mubr.f32.mxu0 0.0
        %3007 = vmatmul.mubr.f32.gmra.mrb[0].mxu0 %v2769
        %v3008 = vpop.f32.mrb[0].mxu0
        %v3009 = vadd.f32 0.0, %v3008
        %v3010 = vpop.f32.mrb[0].mxu0
        %3011 = vdwg.mxu0
        %v3012 = vadd.f32 %v2580, %v2854
        %v3013 = vadd.f32 %v2585, %v2859
        %v3014 = vadd.f32 %v2590, %v2864
        %v3015 = vadd.f32 %v2595, %v2869
        %v3016 = vadd.f32 %v2600, %v2874
        %v3017 = vadd.f32 %v2605, %v2879
        %v3018 = vadd.f32 %v2610, %v2884
        %v3019 = vadd.f32 %v2615, %v2889
        %v3020 = vadd.f32 %v2620, %v2894
        %v3021 = vadd.f32 %v2625, %v2899
        %v3022 = vadd.f32 %v2630, %v2904
        %v3023 = vadd.f32 %v2635, %v2909
        %v3024 = vadd.f32 %v2640, %v2914
        %v3025 = vadd.f32 %v2645, %v2919
        %v3026 = vadd.f32 %v2650, %v2924
        %v3027 = vadd.f32 %v2655, %v2929
        %v3028 = vadd.f32 %v2660, %v2934
        %v3029 = vadd.f32 %v2665, %v2939
        %v3030 = vadd.f32 %v2670, %v2944
        %v3031 = vadd.f32 %v2675, %v2949
        %v3032 = vadd.f32 %v2680, %v2954
        %v3033 = vadd.f32 %v2685, %v2959
        %v3034 = vadd.f32 %v2690, %v2964
        %v3035 = vadd.f32 %v2695, %v2969
        %v3036 = vadd.f32 %v2700, %v2974
        %v3037 = vadd.f32 %v2705, %v2979
        %v3038 = vadd.f32 %v2710, %v2984
        %v3039 = vadd.f32 %v2715, %v2989
        %v3040 = vadd.f32 %v2720, %v2994
        %v3041 = vadd.f32 %v2725, %v2999
        %v3042 = vadd.f32 %v2730, %v3004
        %v3043 = vadd.f32 %v2735, %v3009
        %v3044 = vld [vmem:[#allocation2 + $0x2] sm:$0xff]
        %v3045 = vld [vmem:[#allocation2 + $0xa] sm:$0xff]
        %v3046 = vld [vmem:[#allocation2 + $0x22] sm:$0xff]
        %v3047 = vld [vmem:[#allocation2 + $0x2a] sm:$0xff]
        %v3048 = vld [vmem:[#allocation2 + $0x42] sm:$0xff]
        %v3049 = vld [vmem:[#allocation2 + $0x4a] sm:$0xff]
        %v3050 = vld [vmem:[#allocation2 + $0x62] sm:$0xff]
        %v3051 = vld [vmem:[#allocation2 + $0x6a] sm:$0xff]
        %v3052 = vld [vmem:[#allocation2 + $0x82] sm:$0xff]
        %v3053 = vld [vmem:[#allocation2 + $0x8a] sm:$0xff]
        %v3054 = vld [vmem:[#allocation2 + $0xa2] sm:$0xff]
        %v3055 = vld [vmem:[#allocation2 + $0xaa] sm:$0xff]
        %v3056 = vld [vmem:[#allocation2 + $0xc2] sm:$0xff]
        %v3057 = vld [vmem:[#allocation2 + $0xca] sm:$0xff]
        %v3058 = vld [vmem:[#allocation2 + $0xe2] sm:$0xff]
        %v3059 = vld [vmem:[#allocation2 + $0xea] sm:$0xff]
        %v3060 = vld [vmem:[#allocation2 + $0x102] sm:$0xff]
        %v3061 = vld [vmem:[#allocation2 + $0x10a] sm:$0xff]
        %v3062 = vld [vmem:[#allocation2 + $0x122] sm:$0xff]
        %v3063 = vld [vmem:[#allocation2 + $0x12a] sm:$0xff]
        %v3064 = vld [vmem:[#allocation2 + $0x142] sm:$0xff]
        %v3065 = vld [vmem:[#allocation2 + $0x14a] sm:$0xff]
        %v3066 = vld [vmem:[#allocation2 + $0x162] sm:$0xff]
        %v3067 = vld [vmem:[#allocation2 + $0x16a] sm:$0xff]
        %v3068 = vld [vmem:[#allocation2 + $0x182] sm:$0xff]
        %v3069 = vld [vmem:[#allocation2 + $0x18a] sm:$0xff]
        %v3070 = vld [vmem:[#allocation2 + $0x1a2] sm:$0xff]
        %v3071 = vld [vmem:[#allocation2 + $0x1aa] sm:$0xff]
        %v3072 = vld [vmem:[#allocation2 + $0x1c2] sm:$0xff]
        %v3073 = vld [vmem:[#allocation2 + $0x1ca] sm:$0xff]
        %v3074 = vld [vmem:[#allocation2 + $0x1e2] sm:$0xff]
        %v3075 = vld [vmem:[#allocation2 + $0x1ea] sm:$0xff]
        %s3076 = scalar_lea.vmem %s3, 256
        %v3077 = vld [vmem:[%s3076] sm:$0xff]
        %v3078 = vld [vmem:[%s3076 + $0x8] sm:$0xff]
        %v3079 = vld [vmem:[%s3076 + $0x10] sm:$0xff]
        %v3080 = vld [vmem:[%s3076 + $0x18] sm:$0xff]
        %v3081 = vld [vmem:[%s3076 + $0x20] sm:$0xff]
        %v3082 = vld [vmem:[%s3076 + $0x28] sm:$0xff]
        %v3083 = vld [vmem:[%s3076 + $0x30] sm:$0xff]
        %v3084 = vld [vmem:[%s3076 + $0x38] sm:$0xff]
        %v3085 = vld [vmem:[%s3076 + $0x40] sm:$0xff]
        %v3086 = vld [vmem:[%s3076 + $0x48] sm:$0xff]
        %v3087 = vld [vmem:[%s3076 + $0x50] sm:$0xff]
        %v3088 = vld [vmem:[%s3076 + $0x58] sm:$0xff]
        %v3089 = vld [vmem:[%s3076 + $0x60] sm:$0xff]
        %v3090 = vld [vmem:[%s3076 + $0x68] sm:$0xff]
        %v3091 = vld [vmem:[%s3076 + $0x70] sm:$0xff]
        %v3092 = vld [vmem:[%s3076 + $0x78] sm:$0xff]
        %3093 = vmatprep.subr.mxu0 0.0
        %3094 = vmatpush1.msra.mxu0 %v3077
        %3095 = vmatprep.subr.mxu0 0.0
        %3096 = vmatpush1.msra.mxu0 %v3078
        %3097 = vmatprep.subr.mxu0 0.0
        %3098 = vmatpush1.msra.mxu0 %v3079
        %3099 = vmatprep.subr.mxu0 0.0
        %3100 = vmatpush1.msra.mxu0 %v3080
        %3101 = vmatprep.subr.mxu0 0.0
        %3102 = vmatpush1.msra.mxu0 %v3081
        %3103 = vmatprep.subr.mxu0 0.0
        %3104 = vmatpush1.msra.mxu0 %v3082
        %3105 = vmatprep.subr.mxu0 0.0
        %3106 = vmatpush1.msra.mxu0 %v3083
        %3107 = vmatprep.subr.mxu0 0.0
        %3108 = vmatpush1.msra.mxu0 %v3084
        %3109 = vmatprep.subr.mxu0 0.0
        %3110 = vmatpush1.msra.mxu0 %v3085
        %3111 = vmatprep.subr.mxu0 0.0
        %3112 = vmatpush1.msra.mxu0 %v3086
        %3113 = vmatprep.subr.mxu0 0.0
        %3114 = vmatpush1.msra.mxu0 %v3087
        %3115 = vmatprep.subr.mxu0 0.0
        %3116 = vmatpush1.msra.mxu0 %v3088
        %3117 = vmatprep.subr.mxu0 0.0
        %3118 = vmatpush1.msra.mxu0 %v3089
        %3119 = vmatprep.subr.mxu0 0.0
        %3120 = vmatpush1.msra.mxu0 %v3090
        %3121 = vmatprep.subr.mxu0 0.0
        %3122 = vmatpush1.msra.mxu0 %v3091
        %3123 = vmatprep.subr.mxu0 0.0
        %3124 = vmatpush1.msra.mxu0 %v3092
        %3125 = vmatprep.subr.mxu0 0.0
        %3126 = vmatpush1.msra.mxu0 0.0
        %3127 = vmatprep.subr.mxu0 0.0
        %3128 = vmatpush1.msra.mxu0 0.0
        %3129 = vmatprep.subr.mxu0 0.0
        %3130 = vmatpush1.msra.mxu0 0.0
        %3131 = vmatprep.subr.mxu0 0.0
        %3132 = vmatpush1.msra.mxu0 0.0
        %3133 = vmatprep.subr.mxu0 0.0
        %3134 = vmatpush1.msra.mxu0 0.0
        %3135 = vmatprep.subr.mxu0 0.0
        %3136 = vmatpush1.msra.mxu0 0.0
        %3137 = vmatprep.subr.mxu0 0.0
        %3138 = vmatpush1.msra.mxu0 0.0
        %3139 = vmatprep.subr.mxu0 0.0
        %3140 = vmatpush1.msra.mxu0 0.0
        %3141 = vmatprep.subr.mxu0 0.0
        %3142 = vmatpush1.msra.mxu0 0.0
        %3143 = vmatprep.subr.mxu0 0.0
        %3144 = vmatpush1.msra.mxu0 0.0
        %3145 = vmatprep.subr.mxu0 0.0
        %3146 = vmatpush1.msra.mxu0 0.0
        %3147 = vmatprep.subr.mxu0 0.0
        %3148 = vmatpush1.msra.mxu0 0.0
        %3149 = vmatprep.subr.mxu0 0.0
        %3150 = vmatpush1.msra.mxu0 0.0
        %3151 = vmatprep.subr.mxu0 0.0
        %3152 = vmatpush1.msra.mxu0 0.0
        %3153 = vmatprep.subr.mxu0 0.0
        %3154 = vmatpush1.msra.mxu0 0.0
        %3155 = vmatprep.subr.mxu0 0.0
        %3156 = vmatpush1.msra.mxu0 0.0
        %3157 = vmatprep.mubr.f32.mxu0 0.0
        %3158 = vmatmul.mubr.f32.gmra.mrb[0].mxu0 %v3044
        %v3159 = vpop.f32.mrb[0].mxu0
        %v3160 = vadd.f32 0.0, %v3159
        %v3161 = vpop.f32.mrb[0].mxu0
        %3162 = vmatprep.mubr.f32.mxu0 0.0
        %3163 = vmatmul.mubr.f32.gmra.mrb[0].mxu0 %v3045
        %v3164 = vpop.f32.mrb[0].mxu0
        %v3165 = vadd.f32 0.0, %v3164
        %v3166 = vpop.f32.mrb[0].mxu0
        %3167 = vmatprep.mubr.f32.mxu0 0.0
        %3168 = vmatmul.mubr.f32.gmra.mrb[0].mxu0 %v3046
        %v3169 = vpop.f32.mrb[0].mxu0
        %v3170 = vadd.f32 0.0, %v3169
        %v3171 = vpop.f32.mrb[0].mxu0
        %3172 = vmatprep.mubr.f32.mxu0 0.0
        %3173 = vmatmul.mubr.f32.gmra.mrb[0].mxu0 %v3047
        %v3174 = vpop.f32.mrb[0].mxu0
        %v3175 = vadd.f32 0.0, %v3174
        %v3176 = vpop.f32.mrb[0].mxu0
        %3177 = vmatprep.mubr.f32.mxu0 0.0
        %3178 = vmatmul.mubr.f32.gmra.mrb[0].mxu0 %v3048
        %v3179 = vpop.f32.mrb[0].mxu0
        %v3180 = vadd.f32 0.0, %v3179
        %v3181 = vpop.f32.mrb[0].mxu0
        %3182 = vmatprep.mubr.f32.mxu0 0.0
        %3183 = vmatmul.mubr.f32.gmra.mrb[0].mxu0 %v3049
        %v3184 = vpop.f32.mrb[0].mxu0
        %v3185 = vadd.f32 0.0, %v3184
        %v3186 = vpop.f32.mrb[0].mxu0
        %3187 = vmatprep.mubr.f32.mxu0 0.0
        %3188 = vmatmul.mubr.f32.gmra.mrb[0].mxu0 %v3050
        %v3189 = vpop.f32.mrb[0].mxu0
        %v3190 = vadd.f32 0.0, %v3189
        %v3191 = vpop.f32.mrb[0].mxu0
        %3192 = vmatprep.mubr.f32.mxu0 0.0
        %3193 = vmatmul.mubr.f32.gmra.mrb[0].mxu0 %v3051
        %v3194 = vpop.f32.mrb[0].mxu0
        %v3195 = vadd.f32 0.0, %v3194
        %v3196 = vpop.f32.mrb[0].mxu0
        %3197 = vmatprep.mubr.f32.mxu0 0.0
        %3198 = vmatmul.mubr.f32.gmra.mrb[0].mxu0 %v3052
        %v3199 = vpop.f32.mrb[0].mxu0
        %v3200 = vadd.f32 0.0, %v3199
        %v3201 = vpop.f32.mrb[0].mxu0
        %3202 = vmatprep.mubr.f32.mxu0 0.0
        %3203 = vmatmul.mubr.f32.gmra.mrb[0].mxu0 %v3053
        %v3204 = vpop.f32.mrb[0].mxu0
        %v3205 = vadd.f32 0.0, %v3204
        %v3206 = vpop.f32.mrb[0].mxu0
        %3207 = vmatprep.mubr.f32.mxu0 0.0
        %3208 = vmatmul.mubr.f32.gmra.mrb[0].mxu0 %v3054
        %v3209 = vpop.f32.mrb[0].mxu0
        %v3210 = vadd.f32 0.0, %v3209
        %v3211 = vpop.f32.mrb[0].mxu0
        %3212 = vmatprep.mubr.f32.mxu0 0.0
        %3213 = vmatmul.mubr.f32.gmra.mrb[0].mxu0 %v3055
        %v3214 = vpop.f32.mrb[0].mxu0
        %v3215 = vadd.f32 0.0, %v3214
        %v3216 = vpop.f32.mrb[0].mxu0
        %3217 = vmatprep.mubr.f32.mxu0 0.0
        %3218 = vmatmul.mubr.f32.gmra.mrb[0].mxu0 %v3056
        %v3219 = vpop.f32.mrb[0].mxu0
        %v3220 = vadd.f32 0.0, %v3219
        %v3221 = vpop.f32.mrb[0].mxu0
        %3222 = vmatprep.mubr.f32.mxu0 0.0
        %3223 = vmatmul.mubr.f32.gmra.mrb[0].mxu0 %v3057
        %v3224 = vpop.f32.mrb[0].mxu0
        %v3225 = vadd.f32 0.0, %v3224
        %v3226 = vpop.f32.mrb[0].mxu0
        %3227 = vmatprep.mubr.f32.mxu0 0.0
        %3228 = vmatmul.mubr.f32.gmra.mrb[0].mxu0 %v3058
        %v3229 = vpop.f32.mrb[0].mxu0
        %v3230 = vadd.f32 0.0, %v3229
        %v3231 = vpop.f32.mrb[0].mxu0
        %3232 = vmatprep.mubr.f32.mxu0 0.0
        %3233 = vmatmul.mubr.f32.gmra.mrb[0].mxu0 %v3059
        %v3234 = vpop.f32.mrb[0].mxu0
        %v3235 = vadd.f32 0.0, %v3234
        %v3236 = vpop.f32.mrb[0].mxu0
        %3237 = vmatprep.mubr.f32.mxu0 0.0
        %3238 = vmatmul.mubr.f32.gmra.mrb[0].mxu0 %v3060
        %v3239 = vpop.f32.mrb[0].mxu0
        %v3240 = vadd.f32 0.0, %v3239
        %v3241 = vpop.f32.mrb[0].mxu0
        %3242 = vmatprep.mubr.f32.mxu0 0.0
        %3243 = vmatmul.mubr.f32.gmra.mrb[0].mxu0 %v3061
        %v3244 = vpop.f32.mrb[0].mxu0
        %v3245 = vadd.f32 0.0, %v3244
        %v3246 = vpop.f32.mrb[0].mxu0
        %3247 = vmatprep.mubr.f32.mxu0 0.0
        %3248 = vmatmul.mubr.f32.gmra.mrb[0].mxu0 %v3062
        %v3249 = vpop.f32.mrb[0].mxu0
        %v3250 = vadd.f32 0.0, %v3249
        %v3251 = vpop.f32.mrb[0].mxu0
        %3252 = vmatprep.mubr.f32.mxu0 0.0
        %3253 = vmatmul.mubr.f32.gmra.mrb[0].mxu0 %v3063
        %v3254 = vpop.f32.mrb[0].mxu0
        %v3255 = vadd.f32 0.0, %v3254
        %v3256 = vpop.f32.mrb[0].mxu0
        %3257 = vmatprep.mubr.f32.mxu0 0.0
        %3258 = vmatmul.mubr.f32.gmra.mrb[0].mxu0 %v3064
        %v3259 = vpop.f32.mrb[0].mxu0
        %v3260 = vadd.f32 0.0, %v3259
        %v3261 = vpop.f32.mrb[0].mxu0
        %3262 = vmatprep.mubr.f32.mxu0 0.0
        %3263 = vmatmul.mubr.f32.gmra.mrb[0].mxu0 %v3065
        %v3264 = vpop.f32.mrb[0].mxu0
        %v3265 = vadd.f32 0.0, %v3264
        %v3266 = vpop.f32.mrb[0].mxu0
        %3267 = vmatprep.mubr.f32.mxu0 0.0
        %3268 = vmatmul.mubr.f32.gmra.mrb[0].mxu0 %v3066
        %v3269 = vpop.f32.mrb[0].mxu0
        %v3270 = vadd.f32 0.0, %v3269
        %v3271 = vpop.f32.mrb[0].mxu0
        %3272 = vmatprep.mubr.f32.mxu0 0.0
        %3273 = vmatmul.mubr.f32.gmra.mrb[0].mxu0 %v3067
        %v3274 = vpop.f32.mrb[0].mxu0
        %v3275 = vadd.f32 0.0, %v3274
        %v3276 = vpop.f32.mrb[0].mxu0
        %3277 = vmatprep.mubr.f32.mxu0 0.0
        %3278 = vmatmul.mubr.f32.gmra.mrb[0].mxu0 %v3068
        %v3279 = vpop.f32.mrb[0].mxu0
        %v3280 = vadd.f32 0.0, %v3279
        %v3281 = vpop.f32.mrb[0].mxu0
        %3282 = vmatprep.mubr.f32.mxu0 0.0
        %3283 = vmatmul.mubr.f32.gmra.mrb[0].mxu0 %v3069
        %v3284 = vpop.f32.mrb[0].mxu0
        %v3285 = vadd.f32 0.0, %v3284
        %v3286 = vpop.f32.mrb[0].mxu0
        %3287 = vmatprep.mubr.f32.mxu0 0.0
        %3288 = vmatmul.mubr.f32.gmra.mrb[0].mxu0 %v3070
        %v3289 = vpop.f32.mrb[0].mxu0
        %v3290 = vadd.f32 0.0, %v3289
        %v3291 = vpop.f32.mrb[0].mxu0
        %3292 = vmatprep.mubr.f32.mxu0 0.0
        %3293 = vmatmul.mubr.f32.gmra.mrb[0].mxu0 %v3071
        %v3294 = vpop.f32.mrb[0].mxu0
        %v3295 = vadd.f32 0.0, %v3294
        %v3296 = vpop.f32.mrb[0].mxu0
        %3297 = vmatprep.mubr.f32.mxu0 0.0
        %3298 = vmatmul.mubr.f32.gmra.mrb[0].mxu0 %v3072
        %v3299 = vpop.f32.mrb[0].mxu0
        %v3300 = vadd.f32 0.0, %v3299
        %v3301 = vpop.f32.mrb[0].mxu0
        %3302 = vmatprep.mubr.f32.mxu0 0.0
        %3303 = vmatmul.mubr.f32.gmra.mrb[0].mxu0 %v3073
        %v3304 = vpop.f32.mrb[0].mxu0
        %v3305 = vadd.f32 0.0, %v3304
        %v3306 = vpop.f32.mrb[0].mxu0
        %3307 = vmatprep.mubr.f32.mxu0 0.0
        %3308 = vmatmul.mubr.f32.gmra.mrb[0].mxu0 %v3074
        %v3309 = vpop.f32.mrb[0].mxu0
        %v3310 = vadd.f32 0.0, %v3309
        %v3311 = vpop.f32.mrb[0].mxu0
        %3312 = vmatprep.mubr.f32.mxu0 0.0
        %3313 = vmatmul.mubr.f32.gmra.mrb[0].mxu0 %v3075
        %v3314 = vpop.f32.mrb[0].mxu0
        %v3315 = vadd.f32 0.0, %v3314
        %v3316 = vpop.f32.mrb[0].mxu0
        %3317 = vdwg.mxu0
        %v3318 = vadd.f32 %v3012, %v3160
        %v3319 = vadd.f32 %v3013, %v3165
        %v3320 = vadd.f32 %v3014, %v3170
        %v3321 = vadd.f32 %v3015, %v3175
        %v3322 = vadd.f32 %v3016, %v3180
        %v3323 = vadd.f32 %v3017, %v3185
        %v3324 = vadd.f32 %v3018, %v3190
        %v3325 = vadd.f32 %v3019, %v3195
        %v3326 = vadd.f32 %v3020, %v3200
        %v3327 = vadd.f32 %v3021, %v3205
        %v3328 = vadd.f32 %v3022, %v3210
        %v3329 = vadd.f32 %v3023, %v3215
        %v3330 = vadd.f32 %v3024, %v3220
        %v3331 = vadd.f32 %v3025, %v3225
        %v3332 = vadd.f32 %v3026, %v3230
        %v3333 = vadd.f32 %v3027, %v3235
        %v3334 = vadd.f32 %v3028, %v3240
        %v3335 = vadd.f32 %v3029, %v3245
        %v3336 = vadd.f32 %v3030, %v3250
        %v3337 = vadd.f32 %v3031, %v3255
        %v3338 = vadd.f32 %v3032, %v3260
        %v3339 = vadd.f32 %v3033, %v3265
        %v3340 = vadd.f32 %v3034, %v3270
        %v3341 = vadd.f32 %v3035, %v3275
        %v3342 = vadd.f32 %v3036, %v3280
        %v3343 = vadd.f32 %v3037, %v3285
        %v3344 = vadd.f32 %v3038, %v3290
        %v3345 = vadd.f32 %v3039, %v3295
        %v3346 = vadd.f32 %v3040, %v3300
        %v3347 = vadd.f32 %v3041, %v3305
        %v3348 = vadd.f32 %v3042, %v3310
        %v3349 = vadd.f32 %v3043, %v3315
        %s3350 = scalar_lea.vmem [#allocation2], 32
        %v3351 = vld [vmem:[%s3350] sm:$0xff]
        %v3352 = vld [vmem:[%s3350 + $0x8] sm:$0xff]
        %v3353 = vld [vmem:[%s3350 + $0x20] sm:$0xff]
        %v3354 = vld [vmem:[%s3350 + $0x28] sm:$0xff]
        %v3355 = vld [vmem:[%s3350 + $0x40] sm:$0xff]
        %v3356 = vld [vmem:[%s3350 + $0x48] sm:$0xff]
        %v3357 = vld [vmem:[%s3350 + $0x60] sm:$0xff]
        %v3358 = vld [vmem:[%s3350 + $0x68] sm:$0xff]
        %v3359 = vld [vmem:[%s3350 + $0x80] sm:$0xff]
        %v3360 = vld [vmem:[%s3350 + $0x88] sm:$0xff]
        %v3361 = vld [vmem:[%s3350 + $0xa0] sm:$0xff]
        %v3362 = vld [vmem:[%s3350 + $0xa8] sm:$0xff]
        %v3363 = vld [vmem:[%s3350 + $0xc0] sm:$0xff]
        %v3364 = vld [vmem:[%s3350 + $0xc8] sm:$0xff]
        %v3365 = vld [vmem:[%s3350 + $0xe0] sm:$0xff]
        %v3366 = vld [vmem:[%s3350 + $0xe8] sm:$0xff]
        %v3367 = vld [vmem:[%s3350 + $0x100] sm:$0xff]
        %v3368 = vld [vmem:[%s3350 + $0x108] sm:$0xff]
        %v3369 = vld [vmem:[%s3350 + $0x120] sm:$0xff]
        %v3370 = vld [vmem:[%s3350 + $0x128] sm:$0xff]
        %v3371 = vld [vmem:[%s3350 + $0x140] sm:$0xff]
        %v3372 = vld [vmem:[%s3350 + $0x148] sm:$0xff]
        %v3373 = vld [vmem:[%s3350 + $0x160] sm:$0xff]
        %v3374 = vld [vmem:[%s3350 + $0x168] sm:$0xff]
        %v3375 = vld [vmem:[%s3350 + $0x180] sm:$0xff]
        %v3376 = vld [vmem:[%s3350 + $0x188] sm:$0xff]
        %v3377 = vld [vmem:[%s3350 + $0x1a0] sm:$0xff]
        %v3378 = vld [vmem:[%s3350 + $0x1a8] sm:$0xff]
        %v3379 = vld [vmem:[%s3350 + $0x1c0] sm:$0xff]
        %v3380 = vld [vmem:[%s3350 + $0x1c8] sm:$0xff]
        %v3381 = vld [vmem:[%s3350 + $0x1e0] sm:$0xff]
        %v3382 = vld [vmem:[%s3350 + $0x1e8] sm:$0xff]
        %s3383 = scalar_lea.vmem %s3, 384
        %v3384 = vld [vmem:[%s3383] sm:$0xff]
        %v3385 = vld [vmem:[%s3383 + $0x8] sm:$0xff]
        %v3386 = vld [vmem:[%s3383 + $0x10] sm:$0xff]
        %v3387 = vld [vmem:[%s3383 + $0x18] sm:$0xff]
        %v3388 = vld [vmem:[%s3383 + $0x20] sm:$0xff]
        %v3389 = vld [vmem:[%s3383 + $0x28] sm:$0xff]
        %v3390 = vld [vmem:[%s3383 + $0x30] sm:$0xff]
        %v3391 = vld [vmem:[%s3383 + $0x38] sm:$0xff]
        %v3392 = vld [vmem:[%s3383 + $0x40] sm:$0xff]
        %v3393 = vld [vmem:[%s3383 + $0x48] sm:$0xff]
        %v3394 = vld [vmem:[%s3383 + $0x50] sm:$0xff]
        %v3395 = vld [vmem:[%s3383 + $0x58] sm:$0xff]
        %v3396 = vld [vmem:[%s3383 + $0x60] sm:$0xff]
        %v3397 = vld [vmem:[%s3383 + $0x68] sm:$0xff]
        %v3398 = vld [vmem:[%s3383 + $0x70] sm:$0xff]
        %v3399 = vld [vmem:[%s3383 + $0x78] sm:$0xff]
        %3400 = vmatprep.subr.mxu0 0.0
        %3401 = vmatpush1.msra.mxu0 %v3384
        %3402 = vmatprep.subr.mxu0 0.0
        %3403 = vmatpush1.msra.mxu0 %v3385
        %3404 = vmatprep.subr.mxu0 0.0
        %3405 = vmatpush1.msra.mxu0 %v3386
        %3406 = vmatprep.subr.mxu0 0.0
        %3407 = vmatpush1.msra.mxu0 %v3387
        %3408 = vmatprep.subr.mxu0 0.0
        %3409 = vmatpush1.msra.mxu0 %v3388
        %3410 = vmatprep.subr.mxu0 0.0
        %3411 = vmatpush1.msra.mxu0 %v3389
        %3412 = vmatprep.subr.mxu0 0.0
        %3413 = vmatpush1.msra.mxu0 %v3390
        %3414 = vmatprep.subr.mxu0 0.0
        %3415 = vmatpush1.msra.mxu0 %v3391
        %3416 = vmatprep.subr.mxu0 0.0
        %3417 = vmatpush1.msra.mxu0 %v3392
        %3418 = vmatprep.subr.mxu0 0.0
        %3419 = vmatpush1.msra.mxu0 %v3393
        %3420 = vmatprep.subr.mxu0 0.0
        %3421 = vmatpush1.msra.mxu0 %v3394
        %3422 = vmatprep.subr.mxu0 0.0
        %3423 = vmatpush1.msra.mxu0 %v3395
        %3424 = vmatprep.subr.mxu0 0.0
        %3425 = vmatpush1.msra.mxu0 %v3396
        %3426 = vmatprep.subr.mxu0 0.0
        %3427 = vmatpush1.msra.mxu0 %v3397
        %3428 = vmatprep.subr.mxu0 0.0
        %3429 = vmatpush1.msra.mxu0 %v3398
        %3430 = vmatprep.subr.mxu0 0.0
        %3431 = vmatpush1.msra.mxu0 %v3399
        %3432 = vmatprep.subr.mxu0 0.0
        %3433 = vmatpush1.msra.mxu0 0.0
        %3434 = vmatprep.subr.mxu0 0.0
        %3435 = vmatpush1.msra.mxu0 0.0
        %3436 = vmatprep.subr.mxu0 0.0
        %3437 = vmatpush1.msra.mxu0 0.0
        %3438 = vmatprep.subr.mxu0 0.0
        %3439 = vmatpush1.msra.mxu0 0.0
        %3440 = vmatprep.subr.mxu0 0.0
        %3441 = vmatpush1.msra.mxu0 0.0
        %3442 = vmatprep.subr.mxu0 0.0
        %3443 = vmatpush1.msra.mxu0 0.0
        %3444 = vmatprep.subr.mxu0 0.0
        %3445 = vmatpush1.msra.mxu0 0.0
        %3446 = vmatprep.subr.mxu0 0.0
        %3447 = vmatpush1.msra.mxu0 0.0
        %3448 = vmatprep.subr.mxu0 0.0
        %3449 = vmatpush1.msra.mxu0 0.0
        %3450 = vmatprep.subr.mxu0 0.0
        %3451 = vmatpush1.msra.mxu0 0.0
        %3452 = vmatprep.subr.mxu0 0.0
        %3453 = vmatpush1.msra.mxu0 0.0
        %3454 = vmatprep.subr.mxu0 0.0
        %3455 = vmatpush1.msra.mxu0 0.0
        %3456 = vmatprep.subr.mxu0 0.0
        %3457 = vmatpush1.msra.mxu0 0.0
        %3458 = vmatprep.subr.mxu0 0.0
        %3459 = vmatpush1.msra.mxu0 0.0
        %3460 = vmatprep.subr.mxu0 0.0
        %3461 = vmatpush1.msra.mxu0 0.0
        %3462 = vmatprep.subr.mxu0 0.0
        %3463 = vmatpush1.msra.mxu0 0.0
        %3464 = vmatprep.mubr.f32.mxu0 0.0
        %3465 = vmatmul.mubr.f32.gmra.mrb[0].mxu0 %v3351
        %v3466 = vpop.f32.mrb[0].mxu0
        %v3467 = vadd.f32 0.0, %v3466
        %v3468 = vpop.f32.mrb[0].mxu0
        %3469 = vmatprep.mubr.f32.mxu0 0.0
        %3470 = vmatmul.mubr.f32.gmra.mrb[0].mxu0 %v3352
        %v3471 = vpop.f32.mrb[0].mxu0
        %v3472 = vadd.f32 0.0, %v3471
        %v3473 = vpop.f32.mrb[0].mxu0
        %3474 = vmatprep.mubr.f32.mxu0 0.0
        %3475 = vmatmul.mubr.f32.gmra.mrb[0].mxu0 %v3353
        %v3476 = vpop.f32.mrb[0].mxu0
        %v3477 = vadd.f32 0.0, %v3476
        %v3478 = vpop.f32.mrb[0].mxu0
        %3479 = vmatprep.mubr.f32.mxu0 0.0
        %3480 = vmatmul.mubr.f32.gmra.mrb[0].mxu0 %v3354
        %v3481 = vpop.f32.mrb[0].mxu0
        %v3482 = vadd.f32 0.0, %v3481
        %v3483 = vpop.f32.mrb[0].mxu0
        %3484 = vmatprep.mubr.f32.mxu0 0.0
        %3485 = vmatmul.mubr.f32.gmra.mrb[0].mxu0 %v3355
        %v3486 = vpop.f32.mrb[0].mxu0
        %v3487 = vadd.f32 0.0, %v3486
        %v3488 = vpop.f32.mrb[0].mxu0
        %3489 = vmatprep.mubr.f32.mxu0 0.0
        %3490 = vmatmul.mubr.f32.gmra.mrb[0].mxu0 %v3356
        %v3491 = vpop.f32.mrb[0].mxu0
        %v3492 = vadd.f32 0.0, %v3491
        %v3493 = vpop.f32.mrb[0].mxu0
        %3494 = vmatprep.mubr.f32.mxu0 0.0
        %3495 = vmatmul.mubr.f32.gmra.mrb[0].mxu0 %v3357
        %v3496 = vpop.f32.mrb[0].mxu0
        %v3497 = vadd.f32 0.0, %v3496
        %v3498 = vpop.f32.mrb[0].mxu0
        %3499 = vmatprep.mubr.f32.mxu0 0.0
        %3500 = vmatmul.mubr.f32.gmra.mrb[0].mxu0 %v3358
        %v3501 = vpop.f32.mrb[0].mxu0
        %v3502 = vadd.f32 0.0, %v3501
        %v3503 = vpop.f32.mrb[0].mxu0
        %3504 = vmatprep.mubr.f32.mxu0 0.0
        %3505 = vmatmul.mubr.f32.gmra.mrb[0].mxu0 %v3359
        %v3506 = vpop.f32.mrb[0].mxu0
        %v3507 = vadd.f32 0.0, %v3506
        %v3508 = vpop.f32.mrb[0].mxu0
        %3509 = vmatprep.mubr.f32.mxu0 0.0
        %3510 = vmatmul.mubr.f32.gmra.mrb[0].mxu0 %v3360
        %v3511 = vpop.f32.mrb[0].mxu0
        %v3512 = vadd.f32 0.0, %v3511
        %v3513 = vpop.f32.mrb[0].mxu0
        %3514 = vmatprep.mubr.f32.mxu0 0.0
        %3515 = vmatmul.mubr.f32.gmra.mrb[0].mxu0 %v3361
        %v3516 = vpop.f32.mrb[0].mxu0
        %v3517 = vadd.f32 0.0, %v3516
        %v3518 = vpop.f32.mrb[0].mxu0
        %3519 = vmatprep.mubr.f32.mxu0 0.0
        %3520 = vmatmul.mubr.f32.gmra.mrb[0].mxu0 %v3362
        %v3521 = vpop.f32.mrb[0].mxu0
        %v3522 = vadd.f32 0.0, %v3521
        %v3523 = vpop.f32.mrb[0].mxu0
        %3524 = vmatprep.mubr.f32.mxu0 0.0
        %3525 = vmatmul.mubr.f32.gmra.mrb[0].mxu0 %v3363
        %v3526 = vpop.f32.mrb[0].mxu0
        %v3527 = vadd.f32 0.0, %v3526
        %v3528 = vpop.f32.mrb[0].mxu0
        %3529 = vmatprep.mubr.f32.mxu0 0.0
        %3530 = vmatmul.mubr.f32.gmra.mrb[0].mxu0 %v3364
        %v3531 = vpop.f32.mrb[0].mxu0
        %v3532 = vadd.f32 0.0, %v3531
        %v3533 = vpop.f32.mrb[0].mxu0
        %3534 = vmatprep.mubr.f32.mxu0 0.0
        %3535 = vmatmul.mubr.f32.gmra.mrb[0].mxu0 %v3365
        %v3536 = vpop.f32.mrb[0].mxu0
        %v3537 = vadd.f32 0.0, %v3536
        %v3538 = vpop.f32.mrb[0].mxu0
        %3539 = vmatprep.mubr.f32.mxu0 0.0
        %3540 = vmatmul.mubr.f32.gmra.mrb[0].mxu0 %v3366
        %v3541 = vpop.f32.mrb[0].mxu0
        %v3542 = vadd.f32 0.0, %v3541
        %v3543 = vpop.f32.mrb[0].mxu0
        %3544 = vmatprep.mubr.f32.mxu0 0.0
        %3545 = vmatmul.mubr.f32.gmra.mrb[0].mxu0 %v3367
        %v3546 = vpop.f32.mrb[0].mxu0
        %v3547 = vadd.f32 0.0, %v3546
        %v3548 = vpop.f32.mrb[0].mxu0
        %3549 = vmatprep.mubr.f32.mxu0 0.0
        %3550 = vmatmul.mubr.f32.gmra.mrb[0].mxu0 %v3368
        %v3551 = vpop.f32.mrb[0].mxu0
        %v3552 = vadd.f32 0.0, %v3551
        %v3553 = vpop.f32.mrb[0].mxu0
        %3554 = vmatprep.mubr.f32.mxu0 0.0
        %3555 = vmatmul.mubr.f32.gmra.mrb[0].mxu0 %v3369
        %v3556 = vpop.f32.mrb[0].mxu0
        %v3557 = vadd.f32 0.0, %v3556
        %v3558 = vpop.f32.mrb[0].mxu0
        %3559 = vmatprep.mubr.f32.mxu0 0.0
        %3560 = vmatmul.mubr.f32.gmra.mrb[0].mxu0 %v3370
        %v3561 = vpop.f32.mrb[0].mxu0
        %v3562 = vadd.f32 0.0, %v3561
        %v3563 = vpop.f32.mrb[0].mxu0
        %3564 = vmatprep.mubr.f32.mxu0 0.0
        %3565 = vmatmul.mubr.f32.gmra.mrb[0].mxu0 %v3371
        %v3566 = vpop.f32.mrb[0].mxu0
        %v3567 = vadd.f32 0.0, %v3566
        %v3568 = vpop.f32.mrb[0].mxu0
        %3569 = vmatprep.mubr.f32.mxu0 0.0
        %3570 = vmatmul.mubr.f32.gmra.mrb[0].mxu0 %v3372
        %v3571 = vpop.f32.mrb[0].mxu0
        %v3572 = vadd.f32 0.0, %v3571
        %v3573 = vpop.f32.mrb[0].mxu0
        %3574 = vmatprep.mubr.f32.mxu0 0.0
        %3575 = vmatmul.mubr.f32.gmra.mrb[0].mxu0 %v3373
        %v3576 = vpop.f32.mrb[0].mxu0
        %v3577 = vadd.f32 0.0, %v3576
        %v3578 = vpop.f32.mrb[0].mxu0
        %3579 = vmatprep.mubr.f32.mxu0 0.0
        %3580 = vmatmul.mubr.f32.gmra.mrb[0].mxu0 %v3374
        %v3581 = vpop.f32.mrb[0].mxu0
        %v3582 = vadd.f32 0.0, %v3581
        %v3583 = vpop.f32.mrb[0].mxu0
        %3584 = vmatprep.mubr.f32.mxu0 0.0
        %3585 = vmatmul.mubr.f32.gmra.mrb[0].mxu0 %v3375
        %v3586 = vpop.f32.mrb[0].mxu0
        %v3587 = vadd.f32 0.0, %v3586
        %v3588 = vpop.f32.mrb[0].mxu0
        %3589 = vmatprep.mubr.f32.mxu0 0.0
        %3590 = vmatmul.mubr.f32.gmra.mrb[0].mxu0 %v3376
        %v3591 = vpop.f32.mrb[0].mxu0
        %v3592 = vadd.f32 0.0, %v3591
        %v3593 = vpop.f32.mrb[0].mxu0
        %3594 = vmatprep.mubr.f32.mxu0 0.0
        %3595 = vmatmul.mubr.f32.gmra.mrb[0].mxu0 %v3377
        %v3596 = vpop.f32.mrb[0].mxu0
        %v3597 = vadd.f32 0.0, %v3596
        %v3598 = vpop.f32.mrb[0].mxu0
        %3599 = vmatprep.mubr.f32.mxu0 0.0
        %3600 = vmatmul.mubr.f32.gmra.mrb[0].mxu0 %v3378
        %v3601 = vpop.f32.mrb[0].mxu0
        %v3602 = vadd.f32 0.0, %v3601
        %v3603 = vpop.f32.mrb[0].mxu0
        %3604 = vmatprep.mubr.f32.mxu0 0.0
        %3605 = vmatmul.mubr.f32.gmra.mrb[0].mxu0 %v3379
        %v3606 = vpop.f32.mrb[0].mxu0
        %v3607 = vadd.f32 0.0, %v3606
        %v3608 = vpop.f32.mrb[0].mxu0
        %3609 = vmatprep.mubr.f32.mxu0 0.0
        %3610 = vmatmul.mubr.f32.gmra.mrb[0].mxu0 %v3380
        %v3611 = vpop.f32.mrb[0].mxu0
        %v3612 = vadd.f32 0.0, %v3611
        %v3613 = vpop.f32.mrb[0].mxu0
        %3614 = vmatprep.mubr.f32.mxu0 0.0
        %3615 = vmatmul.mubr.f32.gmra.mrb[0].mxu0 %v3381
        %v3616 = vpop.f32.mrb[0].mxu0
        %v3617 = vadd.f32 0.0, %v3616
        %v3618 = vpop.f32.mrb[0].mxu0
        %3619 = vmatprep.mubr.f32.mxu0 0.0
        %3620 = vmatmul.mubr.f32.gmra.mrb[0].mxu0 %v3382
        %v3621 = vpop.f32.mrb[0].mxu0
        %v3622 = vadd.f32 0.0, %v3621
        %v3623 = vpop.f32.mrb[0].mxu0
        %3624 = vdwg.mxu0
        %v3625 = vadd.f32 %v3318, %v3467
        %v3626 = vadd.f32 %v3319, %v3472
        %v3627 = vadd.f32 %v3320, %v3477
        %v3628 = vadd.f32 %v3321, %v3482
        %v3629 = vadd.f32 %v3322, %v3487
        %v3630 = vadd.f32 %v3323, %v3492
        %v3631 = vadd.f32 %v3324, %v3497
        %v3632 = vadd.f32 %v3325, %v3502
        %v3633 = vadd.f32 %v3326, %v3507
        %v3634 = vadd.f32 %v3327, %v3512
        %v3635 = vadd.f32 %v3328, %v3517
        %v3636 = vadd.f32 %v3329, %v3522
        %v3637 = vadd.f32 %v3330, %v3527
        %v3638 = vadd.f32 %v3331, %v3532
        %v3639 = vadd.f32 %v3332, %v3537
        %v3640 = vadd.f32 %v3333, %v3542
        %v3641 = vadd.f32 %v3334, %v3547
        %v3642 = vadd.f32 %v3335, %v3552
        %v3643 = vadd.f32 %v3336, %v3557
        %v3644 = vadd.f32 %v3337, %v3562
        %v3645 = vadd.f32 %v3338, %v3567
        %v3646 = vadd.f32 %v3339, %v3572
        %v3647 = vadd.f32 %v3340, %v3577
        %v3648 = vadd.f32 %v3341, %v3582
        %v3649 = vadd.f32 %v3342, %v3587
        %v3650 = vadd.f32 %v3343, %v3592
        %v3651 = vadd.f32 %v3344, %v3597
        %v3652 = vadd.f32 %v3345, %v3602
        %v3653 = vadd.f32 %v3346, %v3607
        %v3654 = vadd.f32 %v3347, %v3612
        %v3655 = vadd.f32 %v3348, %v3617
        %v3656 = vadd.f32 %v3349, %v3622
        %v3657 = vld [vmem:[%s3350 + $0x1] sm:$0xff]
        %v3658 = vld [vmem:[%s3350 + $0x9] sm:$0xff]
        %v3659 = vld [vmem:[%s3350 + $0x21] sm:$0xff]
        %v3660 = vld [vmem:[%s3350 + $0x29] sm:$0xff]
        %v3661 = vld [vmem:[%s3350 + $0x41] sm:$0xff]
        %v3662 = vld [vmem:[%s3350 + $0x49] sm:$0xff]
        %v3663 = vld [vmem:[%s3350 + $0x61] sm:$0xff]
        %v3664 = vld [vmem:[%s3350 + $0x69] sm:$0xff]
        %v3665 = vld [vmem:[%s3350 + $0x81] sm:$0xff]
        %v3666 = vld [vmem:[%s3350 + $0x89] sm:$0xff]
        %v3667 = vld [vmem:[%s3350 + $0xa1] sm:$0xff]
        %v3668 = vld [vmem:[%s3350 + $0xa9] sm:$0xff]
        %v3669 = vld [vmem:[%s3350 + $0xc1] sm:$0xff]
        %v3670 = vld [vmem:[%s3350 + $0xc9] sm:$0xff]
        %v3671 = vld [vmem:[%s3350 + $0xe1] sm:$0xff]
        %v3672 = vld [vmem:[%s3350 + $0xe9] sm:$0xff]
        %v3673 = vld [vmem:[%s3350 + $0x101] sm:$0xff]
        %v3674 = vld [vmem:[%s3350 + $0x109] sm:$0xff]
        %v3675 = vld [vmem:[%s3350 + $0x121] sm:$0xff]
        %v3676 = vld [vmem:[%s3350 + $0x129] sm:$0xff]
        %v3677 = vld [vmem:[%s3350 + $0x141] sm:$0xff]
        %v3678 = vld [vmem:[%s3350 + $0x149] sm:$0xff]
        %v3679 = vld [vmem:[%s3350 + $0x161] sm:$0xff]
        %v3680 = vld [vmem:[%s3350 + $0x169] sm:$0xff]
        %v3681 = vld [vmem:[%s3350 + $0x181] sm:$0xff]
        %v3682 = vld [vmem:[%s3350 + $0x189] sm:$0xff]
        %v3683 = vld [vmem:[%s3350 + $0x1a1] sm:$0xff]
        %v3684 = vld [vmem:[%s3350 + $0x1a9] sm:$0xff]
        %v3685 = vld [vmem:[%s3350 + $0x1c1] sm:$0xff]
        %v3686 = vld [vmem:[%s3350 + $0x1c9] sm:$0xff]
        %v3687 = vld [vmem:[%s3350 + $0x1e1] sm:$0xff]
        %v3688 = vld [vmem:[%s3350 + $0x1e9] sm:$0xff]
        %s3689 = scalar_lea.vmem %s3, 512
        %v3690 = vld [vmem:[%s3689] sm:$0xff]
        %v3691 = vld [vmem:[%s3689 + $0x8] sm:$0xff]
        %v3692 = vld [vmem:[%s3689 + $0x10] sm:$0xff]
        %v3693 = vld [vmem:[%s3689 + $0x18] sm:$0xff]
        %v3694 = vld [vmem:[%s3689 + $0x20] sm:$0xff]
        %v3695 = vld [vmem:[%s3689 + $0x28] sm:$0xff]
        %v3696 = vld [vmem:[%s3689 + $0x30] sm:$0xff]
        %v3697 = vld [vmem:[%s3689 + $0x38] sm:$0xff]
        %v3698 = vld [vmem:[%s3689 + $0x40] sm:$0xff]
        %v3699 = vld [vmem:[%s3689 + $0x48] sm:$0xff]
        %v3700 = vld [vmem:[%s3689 + $0x50] sm:$0xff]
        %v3701 = vld [vmem:[%s3689 + $0x58] sm:$0xff]
        %v3702 = vld [vmem:[%s3689 + $0x60] sm:$0xff]
        %v3703 = vld [vmem:[%s3689 + $0x68] sm:$0xff]
        %v3704 = vld [vmem:[%s3689 + $0x70] sm:$0xff]
        %v3705 = vld [vmem:[%s3689 + $0x78] sm:$0xff]
        %3706 = vmatprep.subr.mxu0 0.0
        %3707 = vmatpush1.msra.mxu0 %v3690
        %3708 = vmatprep.subr.mxu0 0.0
        %3709 = vmatpush1.msra.mxu0 %v3691
        %3710 = vmatprep.subr.mxu0 0.0
        %3711 = vmatpush1.msra.mxu0 %v3692
        %3712 = vmatprep.subr.mxu0 0.0
        %3713 = vmatpush1.msra.mxu0 %v3693
        %3714 = vmatprep.subr.mxu0 0.0
        %3715 = vmatpush1.msra.mxu0 %v3694
        %3716 = vmatprep.subr.mxu0 0.0
        %3717 = vmatpush1.msra.mxu0 %v3695
        %3718 = vmatprep.subr.mxu0 0.0
        %3719 = vmatpush1.msra.mxu0 %v3696
        %3720 = vmatprep.subr.mxu0 0.0
        %3721 = vmatpush1.msra.mxu0 %v3697
        %3722 = vmatprep.subr.mxu0 0.0
        %3723 = vmatpush1.msra.mxu0 %v3698
        %3724 = vmatprep.subr.mxu0 0.0
        %3725 = vmatpush1.msra.mxu0 %v3699
        %3726 = vmatprep.subr.mxu0 0.0
        %3727 = vmatpush1.msra.mxu0 %v3700
        %3728 = vmatprep.subr.mxu0 0.0
        %3729 = vmatpush1.msra.mxu0 %v3701
        %3730 = vmatprep.subr.mxu0 0.0
        %3731 = vmatpush1.msra.mxu0 %v3702
        %3732 = vmatprep.subr.mxu0 0.0
        %3733 = vmatpush1.msra.mxu0 %v3703
        %3734 = vmatprep.subr.mxu0 0.0
        %3735 = vmatpush1.msra.mxu0 %v3704
        %3736 = vmatprep.subr.mxu0 0.0
        %3737 = vmatpush1.msra.mxu0 %v3705
        %3738 = vmatprep.subr.mxu0 0.0
        %3739 = vmatpush1.msra.mxu0 0.0
        %3740 = vmatprep.subr.mxu0 0.0
        %3741 = vmatpush1.msra.mxu0 0.0
        %3742 = vmatprep.subr.mxu0 0.0
        %3743 = vmatpush1.msra.mxu0 0.0
        %3744 = vmatprep.subr.mxu0 0.0
        %3745 = vmatpush1.msra.mxu0 0.0
        %3746 = vmatprep.subr.mxu0 0.0
        %3747 = vmatpush1.msra.mxu0 0.0
        %3748 = vmatprep.subr.mxu0 0.0
        %3749 = vmatpush1.msra.mxu0 0.0
        %3750 = vmatprep.subr.mxu0 0.0
        %3751 = vmatpush1.msra.mxu0 0.0
        %3752 = vmatprep.subr.mxu0 0.0
        %3753 = vmatpush1.msra.mxu0 0.0
        %3754 = vmatprep.subr.mxu0 0.0
        %3755 = vmatpush1.msra.mxu0 0.0
        %3756 = vmatprep.subr.mxu0 0.0
        %3757 = vmatpush1.msra.mxu0 0.0
        %3758 = vmatprep.subr.mxu0 0.0
        %3759 = vmatpush1.msra.mxu0 0.0
        %3760 = vmatprep.subr.mxu0 0.0
        %3761 = vmatpush1.msra.mxu0 0.0
        %3762 = vmatprep.subr.mxu0 0.0
        %3763 = vmatpush1.msra.mxu0 0.0
        %3764 = vmatprep.subr.mxu0 0.0
        %3765 = vmatpush1.msra.mxu0 0.0
        %3766 = vmatprep.subr.mxu0 0.0
        %3767 = vmatpush1.msra.mxu0 0.0
        %3768 = vmatprep.subr.mxu0 0.0
        %3769 = vmatpush1.msra.mxu0 0.0
        %3770 = vmatprep.mubr.f32.mxu0 0.0
        %3771 = vmatmul.mubr.f32.gmra.mrb[0].mxu0 %v3657
        %v3772 = vpop.f32.mrb[0].mxu0
        %v3773 = vadd.f32 0.0, %v3772
        %v3774 = vpop.f32.mrb[0].mxu0
        %3775 = vmatprep.mubr.f32.mxu0 0.0
        %3776 = vmatmul.mubr.f32.gmra.mrb[0].mxu0 %v3658
        %v3777 = vpop.f32.mrb[0].mxu0
        %v3778 = vadd.f32 0.0, %v3777
        %v3779 = vpop.f32.mrb[0].mxu0
        %3780 = vmatprep.mubr.f32.mxu0 0.0
        %3781 = vmatmul.mubr.f32.gmra.mrb[0].mxu0 %v3659
        %v3782 = vpop.f32.mrb[0].mxu0
        %v3783 = vadd.f32 0.0, %v3782
        %v3784 = vpop.f32.mrb[0].mxu0
        %3785 = vmatprep.mubr.f32.mxu0 0.0
        %3786 = vmatmul.mubr.f32.gmra.mrb[0].mxu0 %v3660
        %v3787 = vpop.f32.mrb[0].mxu0
        %v3788 = vadd.f32 0.0, %v3787
        %v3789 = vpop.f32.mrb[0].mxu0
        %3790 = vmatprep.mubr.f32.mxu0 0.0
        %3791 = vmatmul.mubr.f32.gmra.mrb[0].mxu0 %v3661
        %v3792 = vpop.f32.mrb[0].mxu0
        %v3793 = vadd.f32 0.0, %v3792
        %v3794 = vpop.f32.mrb[0].mxu0
        %3795 = vmatprep.mubr.f32.mxu0 0.0
        %3796 = vmatmul.mubr.f32.gmra.mrb[0].mxu0 %v3662
        %v3797 = vpop.f32.mrb[0].mxu0
        %v3798 = vadd.f32 0.0, %v3797
        %v3799 = vpop.f32.mrb[0].mxu0
        %3800 = vmatprep.mubr.f32.mxu0 0.0
        %3801 = vmatmul.mubr.f32.gmra.mrb[0].mxu0 %v3663
        %v3802 = vpop.f32.mrb[0].mxu0
        %v3803 = vadd.f32 0.0, %v3802
        %v3804 = vpop.f32.mrb[0].mxu0
        %3805 = vmatprep.mubr.f32.mxu0 0.0
        %3806 = vmatmul.mubr.f32.gmra.mrb[0].mxu0 %v3664
        %v3807 = vpop.f32.mrb[0].mxu0
        %v3808 = vadd.f32 0.0, %v3807
        %v3809 = vpop.f32.mrb[0].mxu0
        %3810 = vmatprep.mubr.f32.mxu0 0.0
        %3811 = vmatmul.mubr.f32.gmra.mrb[0].mxu0 %v3665
        %v3812 = vpop.f32.mrb[0].mxu0
        %v3813 = vadd.f32 0.0, %v3812
        %v3814 = vpop.f32.mrb[0].mxu0
        %3815 = vmatprep.mubr.f32.mxu0 0.0
        %3816 = vmatmul.mubr.f32.gmra.mrb[0].mxu0 %v3666
        %v3817 = vpop.f32.mrb[0].mxu0
        %v3818 = vadd.f32 0.0, %v3817
        %v3819 = vpop.f32.mrb[0].mxu0
        %3820 = vmatprep.mubr.f32.mxu0 0.0
        %3821 = vmatmul.mubr.f32.gmra.mrb[0].mxu0 %v3667
        %v3822 = vpop.f32.mrb[0].mxu0
        %v3823 = vadd.f32 0.0, %v3822
        %v3824 = vpop.f32.mrb[0].mxu0
        %3825 = vmatprep.mubr.f32.mxu0 0.0
        %3826 = vmatmul.mubr.f32.gmra.mrb[0].mxu0 %v3668
        %v3827 = vpop.f32.mrb[0].mxu0
        %v3828 = vadd.f32 0.0, %v3827
        %v3829 = vpop.f32.mrb[0].mxu0
        %3830 = vmatprep.mubr.f32.mxu0 0.0
        %3831 = vmatmul.mubr.f32.gmra.mrb[0].mxu0 %v3669
        %v3832 = vpop.f32.mrb[0].mxu0
        %v3833 = vadd.f32 0.0, %v3832
        %v3834 = vpop.f32.mrb[0].mxu0
        %3835 = vmatprep.mubr.f32.mxu0 0.0
        %3836 = vmatmul.mubr.f32.gmra.mrb[0].mxu0 %v3670
        %v3837 = vpop.f32.mrb[0].mxu0
        %v3838 = vadd.f32 0.0, %v3837
        %v3839 = vpop.f32.mrb[0].mxu0
        %3840 = vmatprep.mubr.f32.mxu0 0.0
        %3841 = vmatmul.mubr.f32.gmra.mrb[0].mxu0 %v3671
        %v3842 = vpop.f32.mrb[0].mxu0
        %v3843 = vadd.f32 0.0, %v3842
        %v3844 = vpop.f32.mrb[0].mxu0
        %3845 = vmatprep.mubr.f32.mxu0 0.0
        %3846 = vmatmul.mubr.f32.gmra.mrb[0].mxu0 %v3672
        %v3847 = vpop.f32.mrb[0].mxu0
        %v3848 = vadd.f32 0.0, %v3847
        %v3849 = vpop.f32.mrb[0].mxu0
        %3850 = vmatprep.mubr.f32.mxu0 0.0
        %3851 = vmatmul.mubr.f32.gmra.mrb[0].mxu0 %v3673
        %v3852 = vpop.f32.mrb[0].mxu0
        %v3853 = vadd.f32 0.0, %v3852
        %v3854 = vpop.f32.mrb[0].mxu0
        %3855 = vmatprep.mubr.f32.mxu0 0.0
        %3856 = vmatmul.mubr.f32.gmra.mrb[0].mxu0 %v3674
        %v3857 = vpop.f32.mrb[0].mxu0
        %v3858 = vadd.f32 0.0, %v3857
        %v3859 = vpop.f32.mrb[0].mxu0
        %3860 = vmatprep.mubr.f32.mxu0 0.0
        %3861 = vmatmul.mubr.f32.gmra.mrb[0].mxu0 %v3675
        %v3862 = vpop.f32.mrb[0].mxu0
        %v3863 = vadd.f32 0.0, %v3862
        %v3864 = vpop.f32.mrb[0].mxu0
        %3865 = vmatprep.mubr.f32.mxu0 0.0
        %3866 = vmatmul.mubr.f32.gmra.mrb[0].mxu0 %v3676
        %v3867 = vpop.f32.mrb[0].mxu0
        %v3868 = vadd.f32 0.0, %v3867
        %v3869 = vpop.f32.mrb[0].mxu0
        %3870 = vmatprep.mubr.f32.mxu0 0.0
        %3871 = vmatmul.mubr.f32.gmra.mrb[0].mxu0 %v3677
        %v3872 = vpop.f32.mrb[0].mxu0
        %v3873 = vadd.f32 0.0, %v3872
        %v3874 = vpop.f32.mrb[0].mxu0
        %3875 = vmatprep.mubr.f32.mxu0 0.0
        %3876 = vmatmul.mubr.f32.gmra.mrb[0].mxu0 %v3678
        %v3877 = vpop.f32.mrb[0].mxu0
        %v3878 = vadd.f32 0.0, %v3877
        %v3879 = vpop.f32.mrb[0].mxu0
        %3880 = vmatprep.mubr.f32.mxu0 0.0
        %3881 = vmatmul.mubr.f32.gmra.mrb[0].mxu0 %v3679
        %v3882 = vpop.f32.mrb[0].mxu0
        %v3883 = vadd.f32 0.0, %v3882
        %v3884 = vpop.f32.mrb[0].mxu0
        %3885 = vmatprep.mubr.f32.mxu0 0.0
        %3886 = vmatmul.mubr.f32.gmra.mrb[0].mxu0 %v3680
        %v3887 = vpop.f32.mrb[0].mxu0
        %v3888 = vadd.f32 0.0, %v3887
        %v3889 = vpop.f32.mrb[0].mxu0
        %3890 = vmatprep.mubr.f32.mxu0 0.0
        %3891 = vmatmul.mubr.f32.gmra.mrb[0].mxu0 %v3681
        %v3892 = vpop.f32.mrb[0].mxu0
        %v3893 = vadd.f32 0.0, %v3892
        %v3894 = vpop.f32.mrb[0].mxu0
        %3895 = vmatprep.mubr.f32.mxu0 0.0
        %3896 = vmatmul.mubr.f32.gmra.mrb[0].mxu0 %v3682
        %v3897 = vpop.f32.mrb[0].mxu0
        %v3898 = vadd.f32 0.0, %v3897
        %v3899 = vpop.f32.mrb[0].mxu0
        %3900 = vmatprep.mubr.f32.mxu0 0.0
        %3901 = vmatmul.mubr.f32.gmra.mrb[0].mxu0 %v3683
        %v3902 = vpop.f32.mrb[0].mxu0
        %v3903 = vadd.f32 0.0, %v3902
        %v3904 = vpop.f32.mrb[0].mxu0
        %3905 = vmatprep.mubr.f32.mxu0 0.0
        %3906 = vmatmul.mubr.f32.gmra.mrb[0].mxu0 %v3684
        %v3907 = vpop.f32.mrb[0].mxu0
        %v3908 = vadd.f32 0.0, %v3907
        %v3909 = vpop.f32.mrb[0].mxu0
        %3910 = vmatprep.mubr.f32.mxu0 0.0
        %3911 = vmatmul.mubr.f32.gmra.mrb[0].mxu0 %v3685
        %v3912 = vpop.f32.mrb[0].mxu0
        %v3913 = vadd.f32 0.0, %v3912
        %v3914 = vpop.f32.mrb[0].mxu0
        %3915 = vmatprep.mubr.f32.mxu0 0.0
        %3916 = vmatmul.mubr.f32.gmra.mrb[0].mxu0 %v3686
        %v3917 = vpop.f32.mrb[0].mxu0
        %v3918 = vadd.f32 0.0, %v3917
        %v3919 = vpop.f32.mrb[0].mxu0
        %3920 = vmatprep.mubr.f32.mxu0 0.0
        %3921 = vmatmul.mubr.f32.gmra.mrb[0].mxu0 %v3687
        %v3922 = vpop.f32.mrb[0].mxu0
        %v3923 = vadd.f32 0.0, %v3922
        %v3924 = vpop.f32.mrb[0].mxu0
        %3925 = vmatprep.mubr.f32.mxu0 0.0
        %3926 = vmatmul.mubr.f32.gmra.mrb[0].mxu0 %v3688
        %v3927 = vpop.f32.mrb[0].mxu0
        %v3928 = vadd.f32 0.0, %v3927
        %v3929 = vpop.f32.mrb[0].mxu0
        %3930 = vdwg.mxu0
        %v3931 = vadd.f32 %v3625, %v3773
        %v3932 = vadd.f32 %v3626, %v3778
        %v3933 = vadd.f32 %v3627, %v3783
        %v3934 = vadd.f32 %v3628, %v3788
        %v3935 = vadd.f32 %v3629, %v3793
        %v3936 = vadd.f32 %v3630, %v3798
        %v3937 = vadd.f32 %v3631, %v3803
        %v3938 = vadd.f32 %v3632, %v3808
        %v3939 = vadd.f32 %v3633, %v3813
        %v3940 = vadd.f32 %v3634, %v3818
        %v3941 = vadd.f32 %v3635, %v3823
        %v3942 = vadd.f32 %v3636, %v3828
        %v3943 = vadd.f32 %v3637, %v3833
        %v3944 = vadd.f32 %v3638, %v3838
        %v3945 = vadd.f32 %v3639, %v3843
        %v3946 = vadd.f32 %v3640, %v3848
        %v3947 = vadd.f32 %v3641, %v3853
        %v3948 = vadd.f32 %v3642, %v3858
        %v3949 = vadd.f32 %v3643, %v3863
        %v3950 = vadd.f32 %v3644, %v3868
        %v3951 = vadd.f32 %v3645, %v3873
        %v3952 = vadd.f32 %v3646, %v3878
        %v3953 = vadd.f32 %v3647, %v3883
        %v3954 = vadd.f32 %v3648, %v3888
        %v3955 = vadd.f32 %v3649, %v3893
        %v3956 = vadd.f32 %v3650, %v3898
        %v3957 = vadd.f32 %v3651, %v3903
        %v3958 = vadd.f32 %v3652, %v3908
        %v3959 = vadd.f32 %v3653, %v3913
        %v3960 = vadd.f32 %v3654, %v3918
        %v3961 = vadd.f32 %v3655, %v3923
        %v3962 = vadd.f32 %v3656, %v3928
        %v3963 = vld [vmem:[%s3350 + $0x2] sm:$0xff]
        %v3964 = vld [vmem:[%s3350 + $0xa] sm:$0xff]
        %v3965 = vld [vmem:[%s3350 + $0x22] sm:$0xff]
        %v3966 = vld [vmem:[%s3350 + $0x2a] sm:$0xff]
        %v3967 = vld [vmem:[%s3350 + $0x42] sm:$0xff]
        %v3968 = vld [vmem:[%s3350 + $0x4a] sm:$0xff]
        %v3969 = vld [vmem:[%s3350 + $0x62] sm:$0xff]
        %v3970 = vld [vmem:[%s3350 + $0x6a] sm:$0xff]
        %v3971 = vld [vmem:[%s3350 + $0x82] sm:$0xff]
        %v3972 = vld [vmem:[%s3350 + $0x8a] sm:$0xff]
        %v3973 = vld [vmem:[%s3350 + $0xa2] sm:$0xff]
        %v3974 = vld [vmem:[%s3350 + $0xaa] sm:$0xff]
        %v3975 = vld [vmem:[%s3350 + $0xc2] sm:$0xff]
        %v3976 = vld [vmem:[%s3350 + $0xca] sm:$0xff]
        %v3977 = vld [vmem:[%s3350 + $0xe2] sm:$0xff]
        %v3978 = vld [vmem:[%s3350 + $0xea] sm:$0xff]
        %v3979 = vld [vmem:[%s3350 + $0x102] sm:$0xff]
        %v3980 = vld [vmem:[%s3350 + $0x10a] sm:$0xff]
        %v3981 = vld [vmem:[%s3350 + $0x122] sm:$0xff]
        %v3982 = vld [vmem:[%s3350 + $0x12a] sm:$0xff]
        %v3983 = vld [vmem:[%s3350 + $0x142] sm:$0xff]
        %v3984 = vld [vmem:[%s3350 + $0x14a] sm:$0xff]
        %v3985 = vld [vmem:[%s3350 + $0x162] sm:$0xff]
        %v3986 = vld [vmem:[%s3350 + $0x16a] sm:$0xff]
        %v3987 = vld [vmem:[%s3350 + $0x182] sm:$0xff]
        %v3988 = vld [vmem:[%s3350 + $0x18a] sm:$0xff]
        %v3989 = vld [vmem:[%s3350 + $0x1a2] sm:$0xff]
        %v3990 = vld [vmem:[%s3350 + $0x1aa] sm:$0xff]
        %v3991 = vld [vmem:[%s3350 + $0x1c2] sm:$0xff]
        %v3992 = vld [vmem:[%s3350 + $0x1ca] sm:$0xff]
        %v3993 = vld [vmem:[%s3350 + $0x1e2] sm:$0xff]
        %v3994 = vld [vmem:[%s3350 + $0x1ea] sm:$0xff]
        %s3995 = scalar_lea.vmem %s3, 640
        %v3996 = vld [vmem:[%s3995] sm:$0xff]
        %v3997 = vld [vmem:[%s3995 + $0x8] sm:$0xff]
        %v3998 = vld [vmem:[%s3995 + $0x10] sm:$0xff]
        %v3999 = vld [vmem:[%s3995 + $0x18] sm:$0xff]
        %v4000 = vld [vmem:[%s3995 + $0x20] sm:$0xff]
        %v4001 = vld [vmem:[%s3995 + $0x28] sm:$0xff]
        %v4002 = vld [vmem:[%s3995 + $0x30] sm:$0xff]
        %v4003 = vld [vmem:[%s3995 + $0x38] sm:$0xff]
        %v4004 = vld [vmem:[%s3995 + $0x40] sm:$0xff]
        %v4005 = vld [vmem:[%s3995 + $0x48] sm:$0xff]
        %v4006 = vld [vmem:[%s3995 + $0x50] sm:$0xff]
        %v4007 = vld [vmem:[%s3995 + $0x58] sm:$0xff]
        %v4008 = vld [vmem:[%s3995 + $0x60] sm:$0xff]
        %v4009 = vld [vmem:[%s3995 + $0x68] sm:$0xff]
        %v4010 = vld [vmem:[%s3995 + $0x70] sm:$0xff]
        %v4011 = vld [vmem:[%s3995 + $0x78] sm:$0xff]
        %4012 = vmatprep.subr.mxu0 0.0
        %4013 = vmatpush1.msra.mxu0 %v3996
        %4014 = vmatprep.subr.mxu0 0.0
        %4015 = vmatpush1.msra.mxu0 %v3997
        %4016 = vmatprep.subr.mxu0 0.0
        %4017 = vmatpush1.msra.mxu0 %v3998
        %4018 = vmatprep.subr.mxu0 0.0
        %4019 = vmatpush1.msra.mxu0 %v3999
        %4020 = vmatprep.subr.mxu0 0.0
        %4021 = vmatpush1.msra.mxu0 %v4000
        %4022 = vmatprep.subr.mxu0 0.0
        %4023 = vmatpush1.msra.mxu0 %v4001
        %4024 = vmatprep.subr.mxu0 0.0
        %4025 = vmatpush1.msra.mxu0 %v4002
        %4026 = vmatprep.subr.mxu0 0.0
        %4027 = vmatpush1.msra.mxu0 %v4003
        %4028 = vmatprep.subr.mxu0 0.0
        %4029 = vmatpush1.msra.mxu0 %v4004
        %4030 = vmatprep.subr.mxu0 0.0
        %4031 = vmatpush1.msra.mxu0 %v4005
        %4032 = vmatprep.subr.mxu0 0.0
        %4033 = vmatpush1.msra.mxu0 %v4006
        %4034 = vmatprep.subr.mxu0 0.0
        %4035 = vmatpush1.msra.mxu0 %v4007
        %4036 = vmatprep.subr.mxu0 0.0
        %4037 = vmatpush1.msra.mxu0 %v4008
        %4038 = vmatprep.subr.mxu0 0.0
        %4039 = vmatpush1.msra.mxu0 %v4009
        %4040 = vmatprep.subr.mxu0 0.0
        %4041 = vmatpush1.msra.mxu0 %v4010
        %4042 = vmatprep.subr.mxu0 0.0
        %4043 = vmatpush1.msra.mxu0 %v4011
        %4044 = vmatprep.subr.mxu0 0.0
        %4045 = vmatpush1.msra.mxu0 0.0
        %4046 = vmatprep.subr.mxu0 0.0
        %4047 = vmatpush1.msra.mxu0 0.0
        %4048 = vmatprep.subr.mxu0 0.0
        %4049 = vmatpush1.msra.mxu0 0.0
        %4050 = vmatprep.subr.mxu0 0.0
        %4051 = vmatpush1.msra.mxu0 0.0
        %4052 = vmatprep.subr.mxu0 0.0
        %4053 = vmatpush1.msra.mxu0 0.0
        %4054 = vmatprep.subr.mxu0 0.0
        %4055 = vmatpush1.msra.mxu0 0.0
        %4056 = vmatprep.subr.mxu0 0.0
        %4057 = vmatpush1.msra.mxu0 0.0
        %4058 = vmatprep.subr.mxu0 0.0
        %4059 = vmatpush1.msra.mxu0 0.0
        %4060 = vmatprep.subr.mxu0 0.0
        %4061 = vmatpush1.msra.mxu0 0.0
        %4062 = vmatprep.subr.mxu0 0.0
        %4063 = vmatpush1.msra.mxu0 0.0
        %4064 = vmatprep.subr.mxu0 0.0
        %4065 = vmatpush1.msra.mxu0 0.0
        %4066 = vmatprep.subr.mxu0 0.0
        %4067 = vmatpush1.msra.mxu0 0.0
        %4068 = vmatprep.subr.mxu0 0.0
        %4069 = vmatpush1.msra.mxu0 0.0
        %4070 = vmatprep.subr.mxu0 0.0
        %4071 = vmatpush1.msra.mxu0 0.0
        %4072 = vmatprep.subr.mxu0 0.0
        %4073 = vmatpush1.msra.mxu0 0.0
        %4074 = vmatprep.subr.mxu0 0.0
        %4075 = vmatpush1.msra.mxu0 0.0
        %4076 = vmatprep.mubr.f32.mxu0 0.0
        %4077 = vmatmul.mubr.f32.gmra.mrb[0].mxu0 %v3963
        %v4078 = vpop.f32.mrb[0].mxu0
        %v4079 = vadd.f32 0.0, %v4078
        %v4080 = vpop.f32.mrb[0].mxu0
        %4081 = vmatprep.mubr.f32.mxu0 0.0
        %4082 = vmatmul.mubr.f32.gmra.mrb[0].mxu0 %v3964
        %v4083 = vpop.f32.mrb[0].mxu0
        %v4084 = vadd.f32 0.0, %v4083
        %v4085 = vpop.f32.mrb[0].mxu0
        %4086 = vmatprep.mubr.f32.mxu0 0.0
        %4087 = vmatmul.mubr.f32.gmra.mrb[0].mxu0 %v3965
        %v4088 = vpop.f32.mrb[0].mxu0
        %v4089 = vadd.f32 0.0, %v4088
        %v4090 = vpop.f32.mrb[0].mxu0
        %4091 = vmatprep.mubr.f32.mxu0 0.0
        %4092 = vmatmul.mubr.f32.gmra.mrb[0].mxu0 %v3966
        %v4093 = vpop.f32.mrb[0].mxu0
        %v4094 = vadd.f32 0.0, %v4093
        %v4095 = vpop.f32.mrb[0].mxu0
        %4096 = vmatprep.mubr.f32.mxu0 0.0
        %4097 = vmatmul.mubr.f32.gmra.mrb[0].mxu0 %v3967
        %v4098 = vpop.f32.mrb[0].mxu0
        %v4099 = vadd.f32 0.0, %v4098
        %v4100 = vpop.f32.mrb[0].mxu0
        %4101 = vmatprep.mubr.f32.mxu0 0.0
        %4102 = vmatmul.mubr.f32.gmra.mrb[0].mxu0 %v3968
        %v4103 = vpop.f32.mrb[0].mxu0
        %v4104 = vadd.f32 0.0, %v4103
        %v4105 = vpop.f32.mrb[0].mxu0
        %4106 = vmatprep.mubr.f32.mxu0 0.0
        %4107 = vmatmul.mubr.f32.gmra.mrb[0].mxu0 %v3969
        %v4108 = vpop.f32.mrb[0].mxu0
        %v4109 = vadd.f32 0.0, %v4108
        %v4110 = vpop.f32.mrb[0].mxu0
        %4111 = vmatprep.mubr.f32.mxu0 0.0
        %4112 = vmatmul.mubr.f32.gmra.mrb[0].mxu0 %v3970
        %v4113 = vpop.f32.mrb[0].mxu0
        %v4114 = vadd.f32 0.0, %v4113
        %v4115 = vpop.f32.mrb[0].mxu0
        %4116 = vmatprep.mubr.f32.mxu0 0.0
        %4117 = vmatmul.mubr.f32.gmra.mrb[0].mxu0 %v3971
        %v4118 = vpop.f32.mrb[0].mxu0
        %v4119 = vadd.f32 0.0, %v4118
        %v4120 = vpop.f32.mrb[0].mxu0
        %4121 = vmatprep.mubr.f32.mxu0 0.0
        %4122 = vmatmul.mubr.f32.gmra.mrb[0].mxu0 %v3972
        %v4123 = vpop.f32.mrb[0].mxu0
        %v4124 = vadd.f32 0.0, %v4123
        %v4125 = vpop.f32.mrb[0].mxu0
        %4126 = vmatprep.mubr.f32.mxu0 0.0
        %4127 = vmatmul.mubr.f32.gmra.mrb[0].mxu0 %v3973
        %v4128 = vpop.f32.mrb[0].mxu0
        %v4129 = vadd.f32 0.0, %v4128
        %v4130 = vpop.f32.mrb[0].mxu0
        %4131 = vmatprep.mubr.f32.mxu0 0.0
        %4132 = vmatmul.mubr.f32.gmra.mrb[0].mxu0 %v3974
        %v4133 = vpop.f32.mrb[0].mxu0
        %v4134 = vadd.f32 0.0, %v4133
        %v4135 = vpop.f32.mrb[0].mxu0
        %4136 = vmatprep.mubr.f32.mxu0 0.0
        %4137 = vmatmul.mubr.f32.gmra.mrb[0].mxu0 %v3975
        %v4138 = vpop.f32.mrb[0].mxu0
        %v4139 = vadd.f32 0.0, %v4138
        %v4140 = vpop.f32.mrb[0].mxu0
        %4141 = vmatprep.mubr.f32.mxu0 0.0
        %4142 = vmatmul.mubr.f32.gmra.mrb[0].mxu0 %v3976
        %v4143 = vpop.f32.mrb[0].mxu0
        %v4144 = vadd.f32 0.0, %v4143
        %v4145 = vpop.f32.mrb[0].mxu0
        %4146 = vmatprep.mubr.f32.mxu0 0.0
        %4147 = vmatmul.mubr.f32.gmra.mrb[0].mxu0 %v3977
        %v4148 = vpop.f32.mrb[0].mxu0
        %v4149 = vadd.f32 0.0, %v4148
        %v4150 = vpop.f32.mrb[0].mxu0
        %4151 = vmatprep.mubr.f32.mxu0 0.0
        %4152 = vmatmul.mubr.f32.gmra.mrb[0].mxu0 %v3978
        %v4153 = vpop.f32.mrb[0].mxu0
        %v4154 = vadd.f32 0.0, %v4153
        %v4155 = vpop.f32.mrb[0].mxu0
        %4156 = vmatprep.mubr.f32.mxu0 0.0
        %4157 = vmatmul.mubr.f32.gmra.mrb[0].mxu0 %v3979
        %v4158 = vpop.f32.mrb[0].mxu0
        %v4159 = vadd.f32 0.0, %v4158
        %v4160 = vpop.f32.mrb[0].mxu0
        %4161 = vmatprep.mubr.f32.mxu0 0.0
        %4162 = vmatmul.mubr.f32.gmra.mrb[0].mxu0 %v3980
        %v4163 = vpop.f32.mrb[0].mxu0
        %v4164 = vadd.f32 0.0, %v4163
        %v4165 = vpop.f32.mrb[0].mxu0
        %4166 = vmatprep.mubr.f32.mxu0 0.0
        %4167 = vmatmul.mubr.f32.gmra.mrb[0].mxu0 %v3981
        %v4168 = vpop.f32.mrb[0].mxu0
        %v4169 = vadd.f32 0.0, %v4168
        %v4170 = vpop.f32.mrb[0].mxu0
        %4171 = vmatprep.mubr.f32.mxu0 0.0
        %4172 = vmatmul.mubr.f32.gmra.mrb[0].mxu0 %v3982
        %v4173 = vpop.f32.mrb[0].mxu0
        %v4174 = vadd.f32 0.0, %v4173
        %v4175 = vpop.f32.mrb[0].mxu0
        %4176 = vmatprep.mubr.f32.mxu0 0.0
        %4177 = vmatmul.mubr.f32.gmra.mrb[0].mxu0 %v3983
        %v4178 = vpop.f32.mrb[0].mxu0
        %v4179 = vadd.f32 0.0, %v4178
        %v4180 = vpop.f32.mrb[0].mxu0
        %4181 = vmatprep.mubr.f32.mxu0 0.0
        %4182 = vmatmul.mubr.f32.gmra.mrb[0].mxu0 %v3984
        %v4183 = vpop.f32.mrb[0].mxu0
        %v4184 = vadd.f32 0.0, %v4183
        %v4185 = vpop.f32.mrb[0].mxu0
        %4186 = vmatprep.mubr.f32.mxu0 0.0
        %4187 = vmatmul.mubr.f32.gmra.mrb[0].mxu0 %v3985
        %v4188 = vpop.f32.mrb[0].mxu0
        %v4189 = vadd.f32 0.0, %v4188
        %v4190 = vpop.f32.mrb[0].mxu0
        %4191 = vmatprep.mubr.f32.mxu0 0.0
        %4192 = vmatmul.mubr.f32.gmra.mrb[0].mxu0 %v3986
        %v4193 = vpop.f32.mrb[0].mxu0
        %v4194 = vadd.f32 0.0, %v4193
        %v4195 = vpop.f32.mrb[0].mxu0
        %4196 = vmatprep.mubr.f32.mxu0 0.0
        %4197 = vmatmul.mubr.f32.gmra.mrb[0].mxu0 %v3987
        %v4198 = vpop.f32.mrb[0].mxu0
        %v4199 = vadd.f32 0.0, %v4198
        %v4200 = vpop.f32.mrb[0].mxu0
        %4201 = vmatprep.mubr.f32.mxu0 0.0
        %4202 = vmatmul.mubr.f32.gmra.mrb[0].mxu0 %v3988
        %v4203 = vpop.f32.mrb[0].mxu0
        %v4204 = vadd.f32 0.0, %v4203
        %v4205 = vpop.f32.mrb[0].mxu0
        %4206 = vmatprep.mubr.f32.mxu0 0.0
        %4207 = vmatmul.mubr.f32.gmra.mrb[0].mxu0 %v3989
        %v4208 = vpop.f32.mrb[0].mxu0
        %v4209 = vadd.f32 0.0, %v4208
        %v4210 = vpop.f32.mrb[0].mxu0
        %4211 = vmatprep.mubr.f32.mxu0 0.0
        %4212 = vmatmul.mubr.f32.gmra.mrb[0].mxu0 %v3990
        %v4213 = vpop.f32.mrb[0].mxu0
        %v4214 = vadd.f32 0.0, %v4213
        %v4215 = vpop.f32.mrb[0].mxu0
        %4216 = vmatprep.mubr.f32.mxu0 0.0
        %4217 = vmatmul.mubr.f32.gmra.mrb[0].mxu0 %v3991
        %v4218 = vpop.f32.mrb[0].mxu0
        %v4219 = vadd.f32 0.0, %v4218
        %v4220 = vpop.f32.mrb[0].mxu0
        %4221 = vmatprep.mubr.f32.mxu0 0.0
        %4222 = vmatmul.mubr.f32.gmra.mrb[0].mxu0 %v3992
        %v4223 = vpop.f32.mrb[0].mxu0
        %v4224 = vadd.f32 0.0, %v4223
        %v4225 = vpop.f32.mrb[0].mxu0
        %4226 = vmatprep.mubr.f32.mxu0 0.0
        %4227 = vmatmul.mubr.f32.gmra.mrb[0].mxu0 %v3993
        %v4228 = vpop.f32.mrb[0].mxu0
        %v4229 = vadd.f32 0.0, %v4228
        %v4230 = vpop.f32.mrb[0].mxu0
        %4231 = vmatprep.mubr.f32.mxu0 0.0
        %4232 = vmatmul.mubr.f32.gmra.mrb[0].mxu0 %v3994
        %v4233 = vpop.f32.mrb[0].mxu0
        %v4234 = vadd.f32 0.0, %v4233
        %v4235 = vpop.f32.mrb[0].mxu0
        %4236 = vdwg.mxu0
        %v4237 = vadd.f32 %v3931, %v4079
        %v4238 = vadd.f32 %v3932, %v4084
        %v4239 = vadd.f32 %v3933, %v4089
        %v4240 = vadd.f32 %v3934, %v4094
        %v4241 = vadd.f32 %v3935, %v4099
        %v4242 = vadd.f32 %v3936, %v4104
        %v4243 = vadd.f32 %v3937, %v4109
        %v4244 = vadd.f32 %v3938, %v4114
        %v4245 = vadd.f32 %v3939, %v4119
        %v4246 = vadd.f32 %v3940, %v4124
        %v4247 = vadd.f32 %v3941, %v4129
        %v4248 = vadd.f32 %v3942, %v4134
        %v4249 = vadd.f32 %v3943, %v4139
        %v4250 = vadd.f32 %v3944, %v4144
        %v4251 = vadd.f32 %v3945, %v4149
        %v4252 = vadd.f32 %v3946, %v4154
        %v4253 = vadd.f32 %v3947, %v4159
        %v4254 = vadd.f32 %v3948, %v4164
        %v4255 = vadd.f32 %v3949, %v4169
        %v4256 = vadd.f32 %v3950, %v4174
        %v4257 = vadd.f32 %v3951, %v4179
        %v4258 = vadd.f32 %v3952, %v4184
        %v4259 = vadd.f32 %v3953, %v4189
        %v4260 = vadd.f32 %v3954, %v4194
        %v4261 = vadd.f32 %v3955, %v4199
        %v4262 = vadd.f32 %v3956, %v4204
        %v4263 = vadd.f32 %v3957, %v4209
        %v4264 = vadd.f32 %v3958, %v4214
        %v4265 = vadd.f32 %v3959, %v4219
        %v4266 = vadd.f32 %v3960, %v4224
        %v4267 = vadd.f32 %v3961, %v4229
        %v4268 = vadd.f32 %v3962, %v4234
        %s4269 = scalar_lea.vmem [#allocation2], 64
        %v4270 = vld [vmem:[%s4269] sm:$0xff]
        %v4271 = vld [vmem:[%s4269 + $0x8] sm:$0xff]
        %v4272 = vld [vmem:[%s4269 + $0x20] sm:$0xff]
        %v4273 = vld [vmem:[%s4269 + $0x28] sm:$0xff]
        %v4274 = vld [vmem:[%s4269 + $0x40] sm:$0xff]
        %v4275 = vld [vmem:[%s4269 + $0x48] sm:$0xff]
        %v4276 = vld [vmem:[%s4269 + $0x60] sm:$0xff]
        %v4277 = vld [vmem:[%s4269 + $0x68] sm:$0xff]
        %v4278 = vld [vmem:[%s4269 + $0x80] sm:$0xff]
        %v4279 = vld [vmem:[%s4269 + $0x88] sm:$0xff]
        %v4280 = vld [vmem:[%s4269 + $0xa0] sm:$0xff]
        %v4281 = vld [vmem:[%s4269 + $0xa8] sm:$0xff]
        %v4282 = vld [vmem:[%s4269 + $0xc0] sm:$0xff]
        %v4283 = vld [vmem:[%s4269 + $0xc8] sm:$0xff]
        %v4284 = vld [vmem:[%s4269 + $0xe0] sm:$0xff]
        %v4285 = vld [vmem:[%s4269 + $0xe8] sm:$0xff]
        %v4286 = vld [vmem:[%s4269 + $0x100] sm:$0xff]
        %v4287 = vld [vmem:[%s4269 + $0x108] sm:$0xff]
        %v4288 = vld [vmem:[%s4269 + $0x120] sm:$0xff]
        %v4289 = vld [vmem:[%s4269 + $0x128] sm:$0xff]
        %v4290 = vld [vmem:[%s4269 + $0x140] sm:$0xff]
        %v4291 = vld [vmem:[%s4269 + $0x148] sm:$0xff]
        %v4292 = vld [vmem:[%s4269 + $0x160] sm:$0xff]
        %v4293 = vld [vmem:[%s4269 + $0x168] sm:$0xff]
        %v4294 = vld [vmem:[%s4269 + $0x180] sm:$0xff]
        %v4295 = vld [vmem:[%s4269 + $0x188] sm:$0xff]
        %v4296 = vld [vmem:[%s4269 + $0x1a0] sm:$0xff]
        %v4297 = vld [vmem:[%s4269 + $0x1a8] sm:$0xff]
        %v4298 = vld [vmem:[%s4269 + $0x1c0] sm:$0xff]
        %v4299 = vld [vmem:[%s4269 + $0x1c8] sm:$0xff]
        %v4300 = vld [vmem:[%s4269 + $0x1e0] sm:$0xff]
        %v4301 = vld [vmem:[%s4269 + $0x1e8] sm:$0xff]
        %s4302 = scalar_lea.vmem %s3, 768
        %v4303 = vld [vmem:[%s4302] sm:$0xff]
        %v4304 = vld [vmem:[%s4302 + $0x8] sm:$0xff]
        %v4305 = vld [vmem:[%s4302 + $0x10] sm:$0xff]
        %v4306 = vld [vmem:[%s4302 + $0x18] sm:$0xff]
        %v4307 = vld [vmem:[%s4302 + $0x20] sm:$0xff]
        %v4308 = vld [vmem:[%s4302 + $0x28] sm:$0xff]
        %v4309 = vld [vmem:[%s4302 + $0x30] sm:$0xff]
        %v4310 = vld [vmem:[%s4302 + $0x38] sm:$0xff]
        %v4311 = vld [vmem:[%s4302 + $0x40] sm:$0xff]
        %v4312 = vld [vmem:[%s4302 + $0x48] sm:$0xff]
        %v4313 = vld [vmem:[%s4302 + $0x50] sm:$0xff]
        %v4314 = vld [vmem:[%s4302 + $0x58] sm:$0xff]
        %v4315 = vld [vmem:[%s4302 + $0x60] sm:$0xff]
        %v4316 = vld [vmem:[%s4302 + $0x68] sm:$0xff]
        %v4317 = vld [vmem:[%s4302 + $0x70] sm:$0xff]
        %v4318 = vld [vmem:[%s4302 + $0x78] sm:$0xff]
        %4319 = vmatprep.subr.mxu0 0.0
        %4320 = vmatpush1.msra.mxu0 %v4303
        %4321 = vmatprep.subr.mxu0 0.0
        %4322 = vmatpush1.msra.mxu0 %v4304
        %4323 = vmatprep.subr.mxu0 0.0
        %4324 = vmatpush1.msra.mxu0 %v4305
        %4325 = vmatprep.subr.mxu0 0.0
        %4326 = vmatpush1.msra.mxu0 %v4306
        %4327 = vmatprep.subr.mxu0 0.0
        %4328 = vmatpush1.msra.mxu0 %v4307
        %4329 = vmatprep.subr.mxu0 0.0
        %4330 = vmatpush1.msra.mxu0 %v4308
        %4331 = vmatprep.subr.mxu0 0.0
        %4332 = vmatpush1.msra.mxu0 %v4309
        %4333 = vmatprep.subr.mxu0 0.0
        %4334 = vmatpush1.msra.mxu0 %v4310
        %4335 = vmatprep.subr.mxu0 0.0
        %4336 = vmatpush1.msra.mxu0 %v4311
        %4337 = vmatprep.subr.mxu0 0.0
        %4338 = vmatpush1.msra.mxu0 %v4312
        %4339 = vmatprep.subr.mxu0 0.0
        %4340 = vmatpush1.msra.mxu0 %v4313
        %4341 = vmatprep.subr.mxu0 0.0
        %4342 = vmatpush1.msra.mxu0 %v4314
        %4343 = vmatprep.subr.mxu0 0.0
        %4344 = vmatpush1.msra.mxu0 %v4315
        %4345 = vmatprep.subr.mxu0 0.0
        %4346 = vmatpush1.msra.mxu0 %v4316
        %4347 = vmatprep.subr.mxu0 0.0
        %4348 = vmatpush1.msra.mxu0 %v4317
        %4349 = vmatprep.subr.mxu0 0.0
        %4350 = vmatpush1.msra.mxu0 %v4318
        %4351 = vmatprep.subr.mxu0 0.0
        %4352 = vmatpush1.msra.mxu0 0.0
        %4353 = vmatprep.subr.mxu0 0.0
        %4354 = vmatpush1.msra.mxu0 0.0
        %4355 = vmatprep.subr.mxu0 0.0
        %4356 = vmatpush1.msra.mxu0 0.0
        %4357 = vmatprep.subr.mxu0 0.0
        %4358 = vmatpush1.msra.mxu0 0.0
        %4359 = vmatprep.subr.mxu0 0.0
        %4360 = vmatpush1.msra.mxu0 0.0
        %4361 = vmatprep.subr.mxu0 0.0
        %4362 = vmatpush1.msra.mxu0 0.0
        %4363 = vmatprep.subr.mxu0 0.0
        %4364 = vmatpush1.msra.mxu0 0.0
        %4365 = vmatprep.subr.mxu0 0.0
        %4366 = vmatpush1.msra.mxu0 0.0
        %4367 = vmatprep.subr.mxu0 0.0
        %4368 = vmatpush1.msra.mxu0 0.0
        %4369 = vmatprep.subr.mxu0 0.0
        %4370 = vmatpush1.msra.mxu0 0.0
        %4371 = vmatprep.subr.mxu0 0.0
        %4372 = vmatpush1.msra.mxu0 0.0
        %4373 = vmatprep.subr.mxu0 0.0
        %4374 = vmatpush1.msra.mxu0 0.0
        %4375 = vmatprep.subr.mxu0 0.0
        %4376 = vmatpush1.msra.mxu0 0.0
        %4377 = vmatprep.subr.mxu0 0.0
        %4378 = vmatpush1.msra.mxu0 0.0
        %4379 = vmatprep.subr.mxu0 0.0
        %4380 = vmatpush1.msra.mxu0 0.0
        %4381 = vmatprep.subr.mxu0 0.0
        %4382 = vmatpush1.msra.mxu0 0.0
        %4383 = vmatprep.mubr.f32.mxu0 0.0
        %4384 = vmatmul.mubr.f32.gmra.mrb[0].mxu0 %v4270
        %v4385 = vpop.f32.mrb[0].mxu0
        %v4386 = vadd.f32 0.0, %v4385
        %v4387 = vpop.f32.mrb[0].mxu0
        %4388 = vmatprep.mubr.f32.mxu0 0.0
        %4389 = vmatmul.mubr.f32.gmra.mrb[0].mxu0 %v4271
        %v4390 = vpop.f32.mrb[0].mxu0
        %v4391 = vadd.f32 0.0, %v4390
        %v4392 = vpop.f32.mrb[0].mxu0
        %4393 = vmatprep.mubr.f32.mxu0 0.0
        %4394 = vmatmul.mubr.f32.gmra.mrb[0].mxu0 %v4272
        %v4395 = vpop.f32.mrb[0].mxu0
        %v4396 = vadd.f32 0.0, %v4395
        %v4397 = vpop.f32.mrb[0].mxu0
        %4398 = vmatprep.mubr.f32.mxu0 0.0
        %4399 = vmatmul.mubr.f32.gmra.mrb[0].mxu0 %v4273
        %v4400 = vpop.f32.mrb[0].mxu0
        %v4401 = vadd.f32 0.0, %v4400
        %v4402 = vpop.f32.mrb[0].mxu0
        %4403 = vmatprep.mubr.f32.mxu0 0.0
        %4404 = vmatmul.mubr.f32.gmra.mrb[0].mxu0 %v4274
        %v4405 = vpop.f32.mrb[0].mxu0
        %v4406 = vadd.f32 0.0, %v4405
        %v4407 = vpop.f32.mrb[0].mxu0
        %4408 = vmatprep.mubr.f32.mxu0 0.0
        %4409 = vmatmul.mubr.f32.gmra.mrb[0].mxu0 %v4275
        %v4410 = vpop.f32.mrb[0].mxu0
        %v4411 = vadd.f32 0.0, %v4410
        %v4412 = vpop.f32.mrb[0].mxu0
        %4413 = vmatprep.mubr.f32.mxu0 0.0
        %4414 = vmatmul.mubr.f32.gmra.mrb[0].mxu0 %v4276
        %v4415 = vpop.f32.mrb[0].mxu0
        %v4416 = vadd.f32 0.0, %v4415
        %v4417 = vpop.f32.mrb[0].mxu0
        %4418 = vmatprep.mubr.f32.mxu0 0.0
        %4419 = vmatmul.mubr.f32.gmra.mrb[0].mxu0 %v4277
        %v4420 = vpop.f32.mrb[0].mxu0
        %v4421 = vadd.f32 0.0, %v4420
        %v4422 = vpop.f32.mrb[0].mxu0
        %4423 = vmatprep.mubr.f32.mxu0 0.0
        %4424 = vmatmul.mubr.f32.gmra.mrb[0].mxu0 %v4278
        %v4425 = vpop.f32.mrb[0].mxu0
        %v4426 = vadd.f32 0.0, %v4425
        %v4427 = vpop.f32.mrb[0].mxu0
        %4428 = vmatprep.mubr.f32.mxu0 0.0
        %4429 = vmatmul.mubr.f32.gmra.mrb[0].mxu0 %v4279
        %v4430 = vpop.f32.mrb[0].mxu0
        %v4431 = vadd.f32 0.0, %v4430
        %v4432 = vpop.f32.mrb[0].mxu0
        %4433 = vmatprep.mubr.f32.mxu0 0.0
        %4434 = vmatmul.mubr.f32.gmra.mrb[0].mxu0 %v4280
        %v4435 = vpop.f32.mrb[0].mxu0
        %v4436 = vadd.f32 0.0, %v4435
        %v4437 = vpop.f32.mrb[0].mxu0
        %4438 = vmatprep.mubr.f32.mxu0 0.0
        %4439 = vmatmul.mubr.f32.gmra.mrb[0].mxu0 %v4281
        %v4440 = vpop.f32.mrb[0].mxu0
        %v4441 = vadd.f32 0.0, %v4440
        %v4442 = vpop.f32.mrb[0].mxu0
        %4443 = vmatprep.mubr.f32.mxu0 0.0
        %4444 = vmatmul.mubr.f32.gmra.mrb[0].mxu0 %v4282
        %v4445 = vpop.f32.mrb[0].mxu0
        %v4446 = vadd.f32 0.0, %v4445
        %v4447 = vpop.f32.mrb[0].mxu0
        %4448 = vmatprep.mubr.f32.mxu0 0.0
        %4449 = vmatmul.mubr.f32.gmra.mrb[0].mxu0 %v4283
        %v4450 = vpop.f32.mrb[0].mxu0
        %v4451 = vadd.f32 0.0, %v4450
        %v4452 = vpop.f32.mrb[0].mxu0
        %4453 = vmatprep.mubr.f32.mxu0 0.0
        %4454 = vmatmul.mubr.f32.gmra.mrb[0].mxu0 %v4284
        %v4455 = vpop.f32.mrb[0].mxu0
        %v4456 = vadd.f32 0.0, %v4455
        %v4457 = vpop.f32.mrb[0].mxu0
        %4458 = vmatprep.mubr.f32.mxu0 0.0
        %4459 = vmatmul.mubr.f32.gmra.mrb[0].mxu0 %v4285
        %v4460 = vpop.f32.mrb[0].mxu0
        %v4461 = vadd.f32 0.0, %v4460
        %v4462 = vpop.f32.mrb[0].mxu0
        %4463 = vmatprep.mubr.f32.mxu0 0.0
        %4464 = vmatmul.mubr.f32.gmra.mrb[0].mxu0 %v4286
        %v4465 = vpop.f32.mrb[0].mxu0
        %v4466 = vadd.f32 0.0, %v4465
        %v4467 = vpop.f32.mrb[0].mxu0
        %4468 = vmatprep.mubr.f32.mxu0 0.0
        %4469 = vmatmul.mubr.f32.gmra.mrb[0].mxu0 %v4287
        %v4470 = vpop.f32.mrb[0].mxu0
        %v4471 = vadd.f32 0.0, %v4470
        %v4472 = vpop.f32.mrb[0].mxu0
        %4473 = vmatprep.mubr.f32.mxu0 0.0
        %4474 = vmatmul.mubr.f32.gmra.mrb[0].mxu0 %v4288
        %v4475 = vpop.f32.mrb[0].mxu0
        %v4476 = vadd.f32 0.0, %v4475
        %v4477 = vpop.f32.mrb[0].mxu0
        %4478 = vmatprep.mubr.f32.mxu0 0.0
        %4479 = vmatmul.mubr.f32.gmra.mrb[0].mxu0 %v4289
        %v4480 = vpop.f32.mrb[0].mxu0
        %v4481 = vadd.f32 0.0, %v4480
        %v4482 = vpop.f32.mrb[0].mxu0
        %4483 = vmatprep.mubr.f32.mxu0 0.0
        %4484 = vmatmul.mubr.f32.gmra.mrb[0].mxu0 %v4290
        %v4485 = vpop.f32.mrb[0].mxu0
        %v4486 = vadd.f32 0.0, %v4485
        %v4487 = vpop.f32.mrb[0].mxu0
        %4488 = vmatprep.mubr.f32.mxu0 0.0
        %4489 = vmatmul.mubr.f32.gmra.mrb[0].mxu0 %v4291
        %v4490 = vpop.f32.mrb[0].mxu0
        %v4491 = vadd.f32 0.0, %v4490
        %v4492 = vpop.f32.mrb[0].mxu0
        %4493 = vmatprep.mubr.f32.mxu0 0.0
        %4494 = vmatmul.mubr.f32.gmra.mrb[0].mxu0 %v4292
        %v4495 = vpop.f32.mrb[0].mxu0
        %v4496 = vadd.f32 0.0, %v4495
        %v4497 = vpop.f32.mrb[0].mxu0
        %4498 = vmatprep.mubr.f32.mxu0 0.0
        %4499 = vmatmul.mubr.f32.gmra.mrb[0].mxu0 %v4293
        %v4500 = vpop.f32.mrb[0].mxu0
        %v4501 = vadd.f32 0.0, %v4500
        %v4502 = vpop.f32.mrb[0].mxu0
        %4503 = vmatprep.mubr.f32.mxu0 0.0
        %4504 = vmatmul.mubr.f32.gmra.mrb[0].mxu0 %v4294
        %v4505 = vpop.f32.mrb[0].mxu0
        %v4506 = vadd.f32 0.0, %v4505
        %v4507 = vpop.f32.mrb[0].mxu0
        %4508 = vmatprep.mubr.f32.mxu0 0.0
        %4509 = vmatmul.mubr.f32.gmra.mrb[0].mxu0 %v4295
        %v4510 = vpop.f32.mrb[0].mxu0
        %v4511 = vadd.f32 0.0, %v4510
        %v4512 = vpop.f32.mrb[0].mxu0
        %4513 = vmatprep.mubr.f32.mxu0 0.0
        %4514 = vmatmul.mubr.f32.gmra.mrb[0].mxu0 %v4296
        %v4515 = vpop.f32.mrb[0].mxu0
        %v4516 = vadd.f32 0.0, %v4515
        %v4517 = vpop.f32.mrb[0].mxu0
        %4518 = vmatprep.mubr.f32.mxu0 0.0
        %4519 = vmatmul.mubr.f32.gmra.mrb[0].mxu0 %v4297
        %v4520 = vpop.f32.mrb[0].mxu0
        %v4521 = vadd.f32 0.0, %v4520
        %v4522 = vpop.f32.mrb[0].mxu0
        %4523 = vmatprep.mubr.f32.mxu0 0.0
        %4524 = vmatmul.mubr.f32.gmra.mrb[0].mxu0 %v4298
        %v4525 = vpop.f32.mrb[0].mxu0
        %v4526 = vadd.f32 0.0, %v4525
        %v4527 = vpop.f32.mrb[0].mxu0
        %4528 = vmatprep.mubr.f32.mxu0 0.0
        %4529 = vmatmul.mubr.f32.gmra.mrb[0].mxu0 %v4299
        %v4530 = vpop.f32.mrb[0].mxu0
        %v4531 = vadd.f32 0.0, %v4530
        %v4532 = vpop.f32.mrb[0].mxu0
        %4533 = vmatprep.mubr.f32.mxu0 0.0
        %4534 = vmatmul.mubr.f32.gmra.mrb[0].mxu0 %v4300
        %v4535 = vpop.f32.mrb[0].mxu0
        %v4536 = vadd.f32 0.0, %v4535
        %v4537 = vpop.f32.mrb[0].mxu0
        %4538 = vmatprep.mubr.f32.mxu0 0.0
        %4539 = vmatmul.mubr.f32.gmra.mrb[0].mxu0 %v4301
        %v4540 = vpop.f32.mrb[0].mxu0
        %v4541 = vadd.f32 0.0, %v4540
        %v4542 = vpop.f32.mrb[0].mxu0
        %4543 = vdwg.mxu0
        %v4544 = vadd.f32 %v4237, %v4386
        %v4545 = vadd.f32 %v4238, %v4391
        %v4546 = vadd.f32 %v4239, %v4396
        %v4547 = vadd.f32 %v4240, %v4401
        %v4548 = vadd.f32 %v4241, %v4406
        %v4549 = vadd.f32 %v4242, %v4411
        %v4550 = vadd.f32 %v4243, %v4416
        %v4551 = vadd.f32 %v4244, %v4421
        %v4552 = vadd.f32 %v4245, %v4426
        %v4553 = vadd.f32 %v4246, %v4431
        %v4554 = vadd.f32 %v4247, %v4436
        %v4555 = vadd.f32 %v4248, %v4441
        %v4556 = vadd.f32 %v4249, %v4446
        %v4557 = vadd.f32 %v4250, %v4451
        %v4558 = vadd.f32 %v4251, %v4456
        %v4559 = vadd.f32 %v4252, %v4461
        %v4560 = vadd.f32 %v4253, %v4466
        %v4561 = vadd.f32 %v4254, %v4471
        %v4562 = vadd.f32 %v4255, %v4476
        %v4563 = vadd.f32 %v4256, %v4481
        %v4564 = vadd.f32 %v4257, %v4486
        %v4565 = vadd.f32 %v4258, %v4491
        %v4566 = vadd.f32 %v4259, %v4496
        %v4567 = vadd.f32 %v4260, %v4501
        %v4568 = vadd.f32 %v4261, %v4506
        %v4569 = vadd.f32 %v4262, %v4511
        %v4570 = vadd.f32 %v4263, %v4516
        %v4571 = vadd.f32 %v4264, %v4521
        %v4572 = vadd.f32 %v4265, %v4526
        %v4573 = vadd.f32 %v4266, %v4531
        %v4574 = vadd.f32 %v4267, %v4536
        %v4575 = vadd.f32 %v4268, %v4541
        %v4576 = vld [vmem:[%s4269 + $0x1] sm:$0xff]
        %v4577 = vld [vmem:[%s4269 + $0x9] sm:$0xff]
        %v4578 = vld [vmem:[%s4269 + $0x21] sm:$0xff]
        %v4579 = vld [vmem:[%s4269 + $0x29] sm:$0xff]
        %v4580 = vld [vmem:[%s4269 + $0x41] sm:$0xff]
        %v4581 = vld [vmem:[%s4269 + $0x49] sm:$0xff]
        %v4582 = vld [vmem:[%s4269 + $0x61] sm:$0xff]
        %v4583 = vld [vmem:[%s4269 + $0x69] sm:$0xff]
        %v4584 = vld [vmem:[%s4269 + $0x81] sm:$0xff]
        %v4585 = vld [vmem:[%s4269 + $0x89] sm:$0xff]
        %v4586 = vld [vmem:[%s4269 + $0xa1] sm:$0xff]
        %v4587 = vld [vmem:[%s4269 + $0xa9] sm:$0xff]
        %v4588 = vld [vmem:[%s4269 + $0xc1] sm:$0xff]
        %v4589 = vld [vmem:[%s4269 + $0xc9] sm:$0xff]
        %v4590 = vld [vmem:[%s4269 + $0xe1] sm:$0xff]
        %v4591 = vld [vmem:[%s4269 + $0xe9] sm:$0xff]
        %v4592 = vld [vmem:[%s4269 + $0x101] sm:$0xff]
        %v4593 = vld [vmem:[%s4269 + $0x109] sm:$0xff]
        %v4594 = vld [vmem:[%s4269 + $0x121] sm:$0xff]
        %v4595 = vld [vmem:[%s4269 + $0x129] sm:$0xff]
        %v4596 = vld [vmem:[%s4269 + $0x141] sm:$0xff]
        %v4597 = vld [vmem:[%s4269 + $0x149] sm:$0xff]
        %v4598 = vld [vmem:[%s4269 + $0x161] sm:$0xff]
        %v4599 = vld [vmem:[%s4269 + $0x169] sm:$0xff]
        %v4600 = vld [vmem:[%s4269 + $0x181] sm:$0xff]
        %v4601 = vld [vmem:[%s4269 + $0x189] sm:$0xff]
        %v4602 = vld [vmem:[%s4269 + $0x1a1] sm:$0xff]
        %v4603 = vld [vmem:[%s4269 + $0x1a9] sm:$0xff]
        %v4604 = vld [vmem:[%s4269 + $0x1c1] sm:$0xff]
        %v4605 = vld [vmem:[%s4269 + $0x1c9] sm:$0xff]
        %v4606 = vld [vmem:[%s4269 + $0x1e1] sm:$0xff]
        %v4607 = vld [vmem:[%s4269 + $0x1e9] sm:$0xff]
        %s4608 = scalar_lea.vmem %s3, 896
        %v4609 = vld [vmem:[%s4608] sm:$0xff]
        %v4610 = vld [vmem:[%s4608 + $0x8] sm:$0xff]
        %v4611 = vld [vmem:[%s4608 + $0x10] sm:$0xff]
        %v4612 = vld [vmem:[%s4608 + $0x18] sm:$0xff]
        %v4613 = vld [vmem:[%s4608 + $0x20] sm:$0xff]
        %v4614 = vld [vmem:[%s4608 + $0x28] sm:$0xff]
        %v4615 = vld [vmem:[%s4608 + $0x30] sm:$0xff]
        %v4616 = vld [vmem:[%s4608 + $0x38] sm:$0xff]
        %v4617 = vld [vmem:[%s4608 + $0x40] sm:$0xff]
        %v4618 = vld [vmem:[%s4608 + $0x48] sm:$0xff]
        %v4619 = vld [vmem:[%s4608 + $0x50] sm:$0xff]
        %v4620 = vld [vmem:[%s4608 + $0x58] sm:$0xff]
        %v4621 = vld [vmem:[%s4608 + $0x60] sm:$0xff]
        %v4622 = vld [vmem:[%s4608 + $0x68] sm:$0xff]
        %v4623 = vld [vmem:[%s4608 + $0x70] sm:$0xff]
        %v4624 = vld [vmem:[%s4608 + $0x78] sm:$0xff]
        %4625 = vmatprep.subr.mxu0 0.0
        %4626 = vmatpush1.msra.mxu0 %v4609
        %4627 = vmatprep.subr.mxu0 0.0
        %4628 = vmatpush1.msra.mxu0 %v4610
        %4629 = vmatprep.subr.mxu0 0.0
        %4630 = vmatpush1.msra.mxu0 %v4611
        %4631 = vmatprep.subr.mxu0 0.0
        %4632 = vmatpush1.msra.mxu0 %v4612
        %4633 = vmatprep.subr.mxu0 0.0
        %4634 = vmatpush1.msra.mxu0 %v4613
        %4635 = vmatprep.subr.mxu0 0.0
        %4636 = vmatpush1.msra.mxu0 %v4614
        %4637 = vmatprep.subr.mxu0 0.0
        %4638 = vmatpush1.msra.mxu0 %v4615
        %4639 = vmatprep.subr.mxu0 0.0
        %4640 = vmatpush1.msra.mxu0 %v4616
        %4641 = vmatprep.subr.mxu0 0.0
        %4642 = vmatpush1.msra.mxu0 %v4617
        %4643 = vmatprep.subr.mxu0 0.0
        %4644 = vmatpush1.msra.mxu0 %v4618
        %4645 = vmatprep.subr.mxu0 0.0
        %4646 = vmatpush1.msra.mxu0 %v4619
        %4647 = vmatprep.subr.mxu0 0.0
        %4648 = vmatpush1.msra.mxu0 %v4620
        %4649 = vmatprep.subr.mxu0 0.0
        %4650 = vmatpush1.msra.mxu0 %v4621
        %4651 = vmatprep.subr.mxu0 0.0
        %4652 = vmatpush1.msra.mxu0 %v4622
        %4653 = vmatprep.subr.mxu0 0.0
        %4654 = vmatpush1.msra.mxu0 %v4623
        %4655 = vmatprep.subr.mxu0 0.0
        %4656 = vmatpush1.msra.mxu0 %v4624
        %4657 = vmatprep.subr.mxu0 0.0
        %4658 = vmatpush1.msra.mxu0 0.0
        %4659 = vmatprep.subr.mxu0 0.0
        %4660 = vmatpush1.msra.mxu0 0.0
        %4661 = vmatprep.subr.mxu0 0.0
        %4662 = vmatpush1.msra.mxu0 0.0
        %4663 = vmatprep.subr.mxu0 0.0
        %4664 = vmatpush1.msra.mxu0 0.0
        %4665 = vmatprep.subr.mxu0 0.0
        %4666 = vmatpush1.msra.mxu0 0.0
        %4667 = vmatprep.subr.mxu0 0.0
        %4668 = vmatpush1.msra.mxu0 0.0
        %4669 = vmatprep.subr.mxu0 0.0
        %4670 = vmatpush1.msra.mxu0 0.0
        %4671 = vmatprep.subr.mxu0 0.0
        %4672 = vmatpush1.msra.mxu0 0.0
        %4673 = vmatprep.subr.mxu0 0.0
        %4674 = vmatpush1.msra.mxu0 0.0
        %4675 = vmatprep.subr.mxu0 0.0
        %4676 = vmatpush1.msra.mxu0 0.0
        %4677 = vmatprep.subr.mxu0 0.0
        %4678 = vmatpush1.msra.mxu0 0.0
        %4679 = vmatprep.subr.mxu0 0.0
        %4680 = vmatpush1.msra.mxu0 0.0
        %4681 = vmatprep.subr.mxu0 0.0
        %4682 = vmatpush1.msra.mxu0 0.0
        %4683 = vmatprep.subr.mxu0 0.0
        %4684 = vmatpush1.msra.mxu0 0.0
        %4685 = vmatprep.subr.mxu0 0.0
        %4686 = vmatpush1.msra.mxu0 0.0
        %4687 = vmatprep.subr.mxu0 0.0
        %4688 = vmatpush1.msra.mxu0 0.0
        %4689 = vmatprep.mubr.f32.mxu0 0.0
        %4690 = vmatmul.mubr.f32.gmra.mrb[0].mxu0 %v4576
        %v4691 = vpop.f32.mrb[0].mxu0
        %v4692 = vadd.f32 0.0, %v4691
        %v4693 = vpop.f32.mrb[0].mxu0
        %4694 = vmatprep.mubr.f32.mxu0 0.0
        %4695 = vmatmul.mubr.f32.gmra.mrb[0].mxu0 %v4577
        %v4696 = vpop.f32.mrb[0].mxu0
        %v4697 = vadd.f32 0.0, %v4696
        %v4698 = vpop.f32.mrb[0].mxu0
        %4699 = vmatprep.mubr.f32.mxu0 0.0
        %4700 = vmatmul.mubr.f32.gmra.mrb[0].mxu0 %v4578
        %v4701 = vpop.f32.mrb[0].mxu0
        %v4702 = vadd.f32 0.0, %v4701
        %v4703 = vpop.f32.mrb[0].mxu0
        %4704 = vmatprep.mubr.f32.mxu0 0.0
        %4705 = vmatmul.mubr.f32.gmra.mrb[0].mxu0 %v4579
        %v4706 = vpop.f32.mrb[0].mxu0
        %v4707 = vadd.f32 0.0, %v4706
        %v4708 = vpop.f32.mrb[0].mxu0
        %4709 = vmatprep.mubr.f32.mxu0 0.0
        %4710 = vmatmul.mubr.f32.gmra.mrb[0].mxu0 %v4580
        %v4711 = vpop.f32.mrb[0].mxu0
        %v4712 = vadd.f32 0.0, %v4711
        %v4713 = vpop.f32.mrb[0].mxu0
        %4714 = vmatprep.mubr.f32.mxu0 0.0
        %4715 = vmatmul.mubr.f32.gmra.mrb[0].mxu0 %v4581
        %v4716 = vpop.f32.mrb[0].mxu0
        %v4717 = vadd.f32 0.0, %v4716
        %v4718 = vpop.f32.mrb[0].mxu0
        %4719 = vmatprep.mubr.f32.mxu0 0.0
        %4720 = vmatmul.mubr.f32.gmra.mrb[0].mxu0 %v4582
        %v4721 = vpop.f32.mrb[0].mxu0
        %v4722 = vadd.f32 0.0, %v4721
        %v4723 = vpop.f32.mrb[0].mxu0
        %4724 = vmatprep.mubr.f32.mxu0 0.0
        %4725 = vmatmul.mubr.f32.gmra.mrb[0].mxu0 %v4583
        %v4726 = vpop.f32.mrb[0].mxu0
        %v4727 = vadd.f32 0.0, %v4726
        %v4728 = vpop.f32.mrb[0].mxu0
        %4729 = vmatprep.mubr.f32.mxu0 0.0
        %4730 = vmatmul.mubr.f32.gmra.mrb[0].mxu0 %v4584
        %v4731 = vpop.f32.mrb[0].mxu0
        %v4732 = vadd.f32 0.0, %v4731
        %v4733 = vpop.f32.mrb[0].mxu0
        %4734 = vmatprep.mubr.f32.mxu0 0.0
        %4735 = vmatmul.mubr.f32.gmra.mrb[0].mxu0 %v4585
        %v4736 = vpop.f32.mrb[0].mxu0
        %v4737 = vadd.f32 0.0, %v4736
        %v4738 = vpop.f32.mrb[0].mxu0
        %4739 = vmatprep.mubr.f32.mxu0 0.0
        %4740 = vmatmul.mubr.f32.gmra.mrb[0].mxu0 %v4586
        %v4741 = vpop.f32.mrb[0].mxu0
        %v4742 = vadd.f32 0.0, %v4741
        %v4743 = vpop.f32.mrb[0].mxu0
        %4744 = vmatprep.mubr.f32.mxu0 0.0
        %4745 = vmatmul.mubr.f32.gmra.mrb[0].mxu0 %v4587
        %v4746 = vpop.f32.mrb[0].mxu0
        %v4747 = vadd.f32 0.0, %v4746
        %v4748 = vpop.f32.mrb[0].mxu0
        %4749 = vmatprep.mubr.f32.mxu0 0.0
        %4750 = vmatmul.mubr.f32.gmra.mrb[0].mxu0 %v4588
        %v4751 = vpop.f32.mrb[0].mxu0
        %v4752 = vadd.f32 0.0, %v4751
        %v4753 = vpop.f32.mrb[0].mxu0
        %4754 = vmatprep.mubr.f32.mxu0 0.0
        %4755 = vmatmul.mubr.f32.gmra.mrb[0].mxu0 %v4589
        %v4756 = vpop.f32.mrb[0].mxu0
        %v4757 = vadd.f32 0.0, %v4756
        %v4758 = vpop.f32.mrb[0].mxu0
        %4759 = vmatprep.mubr.f32.mxu0 0.0
        %4760 = vmatmul.mubr.f32.gmra.mrb[0].mxu0 %v4590
        %v4761 = vpop.f32.mrb[0].mxu0
        %v4762 = vadd.f32 0.0, %v4761
        %v4763 = vpop.f32.mrb[0].mxu0
        %4764 = vmatprep.mubr.f32.mxu0 0.0
        %4765 = vmatmul.mubr.f32.gmra.mrb[0].mxu0 %v4591
        %v4766 = vpop.f32.mrb[0].mxu0
        %v4767 = vadd.f32 0.0, %v4766
        %v4768 = vpop.f32.mrb[0].mxu0
        %4769 = vmatprep.mubr.f32.mxu0 0.0
        %4770 = vmatmul.mubr.f32.gmra.mrb[0].mxu0 %v4592
        %v4771 = vpop.f32.mrb[0].mxu0
        %v4772 = vadd.f32 0.0, %v4771
        %v4773 = vpop.f32.mrb[0].mxu0
        %4774 = vmatprep.mubr.f32.mxu0 0.0
        %4775 = vmatmul.mubr.f32.gmra.mrb[0].mxu0 %v4593
        %v4776 = vpop.f32.mrb[0].mxu0
        %v4777 = vadd.f32 0.0, %v4776
        %v4778 = vpop.f32.mrb[0].mxu0
        %4779 = vmatprep.mubr.f32.mxu0 0.0
        %4780 = vmatmul.mubr.f32.gmra.mrb[0].mxu0 %v4594
        %v4781 = vpop.f32.mrb[0].mxu0
        %v4782 = vadd.f32 0.0, %v4781
        %v4783 = vpop.f32.mrb[0].mxu0
        %4784 = vmatprep.mubr.f32.mxu0 0.0
        %4785 = vmatmul.mubr.f32.gmra.mrb[0].mxu0 %v4595
        %v4786 = vpop.f32.mrb[0].mxu0
        %v4787 = vadd.f32 0.0, %v4786
        %v4788 = vpop.f32.mrb[0].mxu0
        %4789 = vmatprep.mubr.f32.mxu0 0.0
        %4790 = vmatmul.mubr.f32.gmra.mrb[0].mxu0 %v4596
        %v4791 = vpop.f32.mrb[0].mxu0
        %v4792 = vadd.f32 0.0, %v4791
        %v4793 = vpop.f32.mrb[0].mxu0
        %4794 = vmatprep.mubr.f32.mxu0 0.0
        %4795 = vmatmul.mubr.f32.gmra.mrb[0].mxu0 %v4597
        %v4796 = vpop.f32.mrb[0].mxu0
        %v4797 = vadd.f32 0.0, %v4796
        %v4798 = vpop.f32.mrb[0].mxu0
        %4799 = vmatprep.mubr.f32.mxu0 0.0
        %4800 = vmatmul.mubr.f32.gmra.mrb[0].mxu0 %v4598
        %v4801 = vpop.f32.mrb[0].mxu0
        %v4802 = vadd.f32 0.0, %v4801
        %v4803 = vpop.f32.mrb[0].mxu0
        %4804 = vmatprep.mubr.f32.mxu0 0.0
        %4805 = vmatmul.mubr.f32.gmra.mrb[0].mxu0 %v4599
        %v4806 = vpop.f32.mrb[0].mxu0
        %v4807 = vadd.f32 0.0, %v4806
        %v4808 = vpop.f32.mrb[0].mxu0
        %4809 = vmatprep.mubr.f32.mxu0 0.0
        %4810 = vmatmul.mubr.f32.gmra.mrb[0].mxu0 %v4600
        %v4811 = vpop.f32.mrb[0].mxu0
        %v4812 = vadd.f32 0.0, %v4811
        %v4813 = vpop.f32.mrb[0].mxu0
        %4814 = vmatprep.mubr.f32.mxu0 0.0
        %4815 = vmatmul.mubr.f32.gmra.mrb[0].mxu0 %v4601
        %v4816 = vpop.f32.mrb[0].mxu0
        %v4817 = vadd.f32 0.0, %v4816
        %v4818 = vpop.f32.mrb[0].mxu0
        %4819 = vmatprep.mubr.f32.mxu0 0.0
        %4820 = vmatmul.mubr.f32.gmra.mrb[0].mxu0 %v4602
        %v4821 = vpop.f32.mrb[0].mxu0
        %v4822 = vadd.f32 0.0, %v4821
        %v4823 = vpop.f32.mrb[0].mxu0
        %4824 = vmatprep.mubr.f32.mxu0 0.0
        %4825 = vmatmul.mubr.f32.gmra.mrb[0].mxu0 %v4603
        %v4826 = vpop.f32.mrb[0].mxu0
        %v4827 = vadd.f32 0.0, %v4826
        %v4828 = vpop.f32.mrb[0].mxu0
        %4829 = vmatprep.mubr.f32.mxu0 0.0
        %4830 = vmatmul.mubr.f32.gmra.mrb[0].mxu0 %v4604
        %v4831 = vpop.f32.mrb[0].mxu0
        %v4832 = vadd.f32 0.0, %v4831
        %v4833 = vpop.f32.mrb[0].mxu0
        %4834 = vmatprep.mubr.f32.mxu0 0.0
        %4835 = vmatmul.mubr.f32.gmra.mrb[0].mxu0 %v4605
        %v4836 = vpop.f32.mrb[0].mxu0
        %v4837 = vadd.f32 0.0, %v4836
        %v4838 = vpop.f32.mrb[0].mxu0
        %4839 = vmatprep.mubr.f32.mxu0 0.0
        %4840 = vmatmul.mubr.f32.gmra.mrb[0].mxu0 %v4606
        %v4841 = vpop.f32.mrb[0].mxu0
        %v4842 = vadd.f32 0.0, %v4841
        %v4843 = vpop.f32.mrb[0].mxu0
        %4844 = vmatprep.mubr.f32.mxu0 0.0
        %4845 = vmatmul.mubr.f32.gmra.mrb[0].mxu0 %v4607
        %v4846 = vpop.f32.mrb[0].mxu0
        %v4847 = vadd.f32 0.0, %v4846
        %v4848 = vpop.f32.mrb[0].mxu0
        %4849 = vdwg.mxu0
        %v4850 = vadd.f32 %v4544, %v4692
        %v4851 = vadd.f32 %v4545, %v4697
        %v4852 = vadd.f32 %v4546, %v4702
        %v4853 = vadd.f32 %v4547, %v4707
        %v4854 = vadd.f32 %v4548, %v4712
        %v4855 = vadd.f32 %v4549, %v4717
        %v4856 = vadd.f32 %v4550, %v4722
        %v4857 = vadd.f32 %v4551, %v4727
        %v4858 = vadd.f32 %v4552, %v4732
        %v4859 = vadd.f32 %v4553, %v4737
        %v4860 = vadd.f32 %v4554, %v4742
        %v4861 = vadd.f32 %v4555, %v4747
        %v4862 = vadd.f32 %v4556, %v4752
        %v4863 = vadd.f32 %v4557, %v4757
        %v4864 = vadd.f32 %v4558, %v4762
        %v4865 = vadd.f32 %v4559, %v4767
        %v4866 = vadd.f32 %v4560, %v4772
        %v4867 = vadd.f32 %v4561, %v4777
        %v4868 = vadd.f32 %v4562, %v4782
        %v4869 = vadd.f32 %v4563, %v4787
        %v4870 = vadd.f32 %v4564, %v4792
        %v4871 = vadd.f32 %v4565, %v4797
        %v4872 = vadd.f32 %v4566, %v4802
        %v4873 = vadd.f32 %v4567, %v4807
        %v4874 = vadd.f32 %v4568, %v4812
        %v4875 = vadd.f32 %v4569, %v4817
        %v4876 = vadd.f32 %v4570, %v4822
        %v4877 = vadd.f32 %v4571, %v4827
        %v4878 = vadd.f32 %v4572, %v4832
        %v4879 = vadd.f32 %v4573, %v4837
        %v4880 = vadd.f32 %v4574, %v4842
        %v4881 = vadd.f32 %v4575, %v4847
        %v4882 = vld [vmem:[%s4269 + $0x2] sm:$0xff]
        %v4883 = vld [vmem:[%s4269 + $0xa] sm:$0xff]
        %v4884 = vld [vmem:[%s4269 + $0x22] sm:$0xff]
        %v4885 = vld [vmem:[%s4269 + $0x2a] sm:$0xff]
        %v4886 = vld [vmem:[%s4269 + $0x42] sm:$0xff]
        %v4887 = vld [vmem:[%s4269 + $0x4a] sm:$0xff]
        %v4888 = vld [vmem:[%s4269 + $0x62] sm:$0xff]
        %v4889 = vld [vmem:[%s4269 + $0x6a] sm:$0xff]
        %v4890 = vld [vmem:[%s4269 + $0x82] sm:$0xff]
        %v4891 = vld [vmem:[%s4269 + $0x8a] sm:$0xff]
        %v4892 = vld [vmem:[%s4269 + $0xa2] sm:$0xff]
        %v4893 = vld [vmem:[%s4269 + $0xaa] sm:$0xff]
        %v4894 = vld [vmem:[%s4269 + $0xc2] sm:$0xff]
        %v4895 = vld [vmem:[%s4269 + $0xca] sm:$0xff]
        %v4896 = vld [vmem:[%s4269 + $0xe2] sm:$0xff]
        %v4897 = vld [vmem:[%s4269 + $0xea] sm:$0xff]
        %v4898 = vld [vmem:[%s4269 + $0x102] sm:$0xff]
        %v4899 = vld [vmem:[%s4269 + $0x10a] sm:$0xff]
        %v4900 = vld [vmem:[%s4269 + $0x122] sm:$0xff]
        %v4901 = vld [vmem:[%s4269 + $0x12a] sm:$0xff]
        %v4902 = vld [vmem:[%s4269 + $0x142] sm:$0xff]
        %v4903 = vld [vmem:[%s4269 + $0x14a] sm:$0xff]
        %v4904 = vld [vmem:[%s4269 + $0x162] sm:$0xff]
        %v4905 = vld [vmem:[%s4269 + $0x16a] sm:$0xff]
        %v4906 = vld [vmem:[%s4269 + $0x182] sm:$0xff]
        %v4907 = vld [vmem:[%s4269 + $0x18a] sm:$0xff]
        %v4908 = vld [vmem:[%s4269 + $0x1a2] sm:$0xff]
        %v4909 = vld [vmem:[%s4269 + $0x1aa] sm:$0xff]
        %v4910 = vld [vmem:[%s4269 + $0x1c2] sm:$0xff]
        %v4911 = vld [vmem:[%s4269 + $0x1ca] sm:$0xff]
        %v4912 = vld [vmem:[%s4269 + $0x1e2] sm:$0xff]
        %v4913 = vld [vmem:[%s4269 + $0x1ea] sm:$0xff]
        %s4914 = scalar_lea.vmem %s3, 1024
        %v4915 = vld [vmem:[%s4914] sm:$0xff]
        %v4916 = vld [vmem:[%s4914 + $0x8] sm:$0xff]
        %v4917 = vld [vmem:[%s4914 + $0x10] sm:$0xff]
        %v4918 = vld [vmem:[%s4914 + $0x18] sm:$0xff]
        %v4919 = vld [vmem:[%s4914 + $0x20] sm:$0xff]
        %v4920 = vld [vmem:[%s4914 + $0x28] sm:$0xff]
        %v4921 = vld [vmem:[%s4914 + $0x30] sm:$0xff]
        %v4922 = vld [vmem:[%s4914 + $0x38] sm:$0xff]
        %v4923 = vld [vmem:[%s4914 + $0x40] sm:$0xff]
        %v4924 = vld [vmem:[%s4914 + $0x48] sm:$0xff]
        %v4925 = vld [vmem:[%s4914 + $0x50] sm:$0xff]
        %v4926 = vld [vmem:[%s4914 + $0x58] sm:$0xff]
        %v4927 = vld [vmem:[%s4914 + $0x60] sm:$0xff]
        %v4928 = vld [vmem:[%s4914 + $0x68] sm:$0xff]
        %v4929 = vld [vmem:[%s4914 + $0x70] sm:$0xff]
        %v4930 = vld [vmem:[%s4914 + $0x78] sm:$0xff]
        %4931 = vmatprep.subr.mxu0 0.0
        %4932 = vmatpush1.msra.mxu0 %v4915
        %4933 = vmatprep.subr.mxu0 0.0
        %4934 = vmatpush1.msra.mxu0 %v4916
        %4935 = vmatprep.subr.mxu0 0.0
        %4936 = vmatpush1.msra.mxu0 %v4917
        %4937 = vmatprep.subr.mxu0 0.0
        %4938 = vmatpush1.msra.mxu0 %v4918
        %4939 = vmatprep.subr.mxu0 0.0
        %4940 = vmatpush1.msra.mxu0 %v4919
        %4941 = vmatprep.subr.mxu0 0.0
        %4942 = vmatpush1.msra.mxu0 %v4920
        %4943 = vmatprep.subr.mxu0 0.0
        %4944 = vmatpush1.msra.mxu0 %v4921
        %4945 = vmatprep.subr.mxu0 0.0
        %4946 = vmatpush1.msra.mxu0 %v4922
        %4947 = vmatprep.subr.mxu0 0.0
        %4948 = vmatpush1.msra.mxu0 %v4923
        %4949 = vmatprep.subr.mxu0 0.0
        %4950 = vmatpush1.msra.mxu0 %v4924
        %4951 = vmatprep.subr.mxu0 0.0
        %4952 = vmatpush1.msra.mxu0 %v4925
        %4953 = vmatprep.subr.mxu0 0.0
        %4954 = vmatpush1.msra.mxu0 %v4926
        %4955 = vmatprep.subr.mxu0 0.0
        %4956 = vmatpush1.msra.mxu0 %v4927
        %4957 = vmatprep.subr.mxu0 0.0
        %4958 = vmatpush1.msra.mxu0 %v4928
        %4959 = vmatprep.subr.mxu0 0.0
        %4960 = vmatpush1.msra.mxu0 %v4929
        %4961 = vmatprep.subr.mxu0 0.0
        %4962 = vmatpush1.msra.mxu0 %v4930
        %4963 = vmatprep.subr.mxu0 0.0
        %4964 = vmatpush1.msra.mxu0 0.0
        %4965 = vmatprep.subr.mxu0 0.0
        %4966 = vmatpush1.msra.mxu0 0.0
        %4967 = vmatprep.subr.mxu0 0.0
        %4968 = vmatpush1.msra.mxu0 0.0
        %4969 = vmatprep.subr.mxu0 0.0
        %4970 = vmatpush1.msra.mxu0 0.0
        %4971 = vmatprep.subr.mxu0 0.0
        %4972 = vmatpush1.msra.mxu0 0.0
        %4973 = vmatprep.subr.mxu0 0.0
        %4974 = vmatpush1.msra.mxu0 0.0
        %4975 = vmatprep.subr.mxu0 0.0
        %4976 = vmatpush1.msra.mxu0 0.0
        %4977 = vmatprep.subr.mxu0 0.0
        %4978 = vmatpush1.msra.mxu0 0.0
        %4979 = vmatprep.subr.mxu0 0.0
        %4980 = vmatpush1.msra.mxu0 0.0
        %4981 = vmatprep.subr.mxu0 0.0
        %4982 = vmatpush1.msra.mxu0 0.0
        %4983 = vmatprep.subr.mxu0 0.0
        %4984 = vmatpush1.msra.mxu0 0.0
        %4985 = vmatprep.subr.mxu0 0.0
        %4986 = vmatpush1.msra.mxu0 0.0
        %4987 = vmatprep.subr.mxu0 0.0
        %4988 = vmatpush1.msra.mxu0 0.0
        %4989 = vmatprep.subr.mxu0 0.0
        %4990 = vmatpush1.msra.mxu0 0.0
        %4991 = vmatprep.subr.mxu0 0.0
        %4992 = vmatpush1.msra.mxu0 0.0
        %4993 = vmatprep.subr.mxu0 0.0
        %4994 = vmatpush1.msra.mxu0 0.0
        %4995 = vmatprep.mubr.f32.mxu0 0.0
        %4996 = vmatmul.mubr.f32.gmra.mrb[0].mxu0 %v4882
        %v4997 = vpop.f32.mrb[0].mxu0
        %v4998 = vadd.f32 0.0, %v4997
        %v4999 = vpop.f32.mrb[0].mxu0
        %5000 = vmatprep.mubr.f32.mxu0 0.0
        %5001 = vmatmul.mubr.f32.gmra.mrb[0].mxu0 %v4883
        %v5002 = vpop.f32.mrb[0].mxu0
        %v5003 = vadd.f32 0.0, %v5002
        %v5004 = vpop.f32.mrb[0].mxu0
        %5005 = vmatprep.mubr.f32.mxu0 0.0
        %5006 = vmatmul.mubr.f32.gmra.mrb[0].mxu0 %v4884
        %v5007 = vpop.f32.mrb[0].mxu0
        %v5008 = vadd.f32 0.0, %v5007
        %v5009 = vpop.f32.mrb[0].mxu0
        %5010 = vmatprep.mubr.f32.mxu0 0.0
        %5011 = vmatmul.mubr.f32.gmra.mrb[0].mxu0 %v4885
        %v5012 = vpop.f32.mrb[0].mxu0
        %v5013 = vadd.f32 0.0, %v5012
        %v5014 = vpop.f32.mrb[0].mxu0
        %5015 = vmatprep.mubr.f32.mxu0 0.0
        %5016 = vmatmul.mubr.f32.gmra.mrb[0].mxu0 %v4886
        %v5017 = vpop.f32.mrb[0].mxu0
        %v5018 = vadd.f32 0.0, %v5017
        %v5019 = vpop.f32.mrb[0].mxu0
        %5020 = vmatprep.mubr.f32.mxu0 0.0
        %5021 = vmatmul.mubr.f32.gmra.mrb[0].mxu0 %v4887
        %v5022 = vpop.f32.mrb[0].mxu0
        %v5023 = vadd.f32 0.0, %v5022
        %v5024 = vpop.f32.mrb[0].mxu0
        %5025 = vmatprep.mubr.f32.mxu0 0.0
        %5026 = vmatmul.mubr.f32.gmra.mrb[0].mxu0 %v4888
        %v5027 = vpop.f32.mrb[0].mxu0
        %v5028 = vadd.f32 0.0, %v5027
        %v5029 = vpop.f32.mrb[0].mxu0
        %5030 = vmatprep.mubr.f32.mxu0 0.0
        %5031 = vmatmul.mubr.f32.gmra.mrb[0].mxu0 %v4889
        %v5032 = vpop.f32.mrb[0].mxu0
        %v5033 = vadd.f32 0.0, %v5032
        %v5034 = vpop.f32.mrb[0].mxu0
        %5035 = vmatprep.mubr.f32.mxu0 0.0
        %5036 = vmatmul.mubr.f32.gmra.mrb[0].mxu0 %v4890
        %v5037 = vpop.f32.mrb[0].mxu0
        %v5038 = vadd.f32 0.0, %v5037
        %v5039 = vpop.f32.mrb[0].mxu0
        %5040 = vmatprep.mubr.f32.mxu0 0.0
        %5041 = vmatmul.mubr.f32.gmra.mrb[0].mxu0 %v4891
        %v5042 = vpop.f32.mrb[0].mxu0
        %v5043 = vadd.f32 0.0, %v5042
        %v5044 = vpop.f32.mrb[0].mxu0
        %5045 = vmatprep.mubr.f32.mxu0 0.0
        %5046 = vmatmul.mubr.f32.gmra.mrb[0].mxu0 %v4892
        %v5047 = vpop.f32.mrb[0].mxu0
        %v5048 = vadd.f32 0.0, %v5047
        %v5049 = vpop.f32.mrb[0].mxu0
        %5050 = vmatprep.mubr.f32.mxu0 0.0
        %5051 = vmatmul.mubr.f32.gmra.mrb[0].mxu0 %v4893
        %v5052 = vpop.f32.mrb[0].mxu0
        %v5053 = vadd.f32 0.0, %v5052
        %v5054 = vpop.f32.mrb[0].mxu0
        %5055 = vmatprep.mubr.f32.mxu0 0.0
        %5056 = vmatmul.mubr.f32.gmra.mrb[0].mxu0 %v4894
        %v5057 = vpop.f32.mrb[0].mxu0
        %v5058 = vadd.f32 0.0, %v5057
        %v5059 = vpop.f32.mrb[0].mxu0
        %5060 = vmatprep.mubr.f32.mxu0 0.0
        %5061 = vmatmul.mubr.f32.gmra.mrb[0].mxu0 %v4895
        %v5062 = vpop.f32.mrb[0].mxu0
        %v5063 = vadd.f32 0.0, %v5062
        %v5064 = vpop.f32.mrb[0].mxu0
        %5065 = vmatprep.mubr.f32.mxu0 0.0
        %5066 = vmatmul.mubr.f32.gmra.mrb[0].mxu0 %v4896
        %v5067 = vpop.f32.mrb[0].mxu0
        %v5068 = vadd.f32 0.0, %v5067
        %v5069 = vpop.f32.mrb[0].mxu0
        %5070 = vmatprep.mubr.f32.mxu0 0.0
        %5071 = vmatmul.mubr.f32.gmra.mrb[0].mxu0 %v4897
        %v5072 = vpop.f32.mrb[0].mxu0
        %v5073 = vadd.f32 0.0, %v5072
        %v5074 = vpop.f32.mrb[0].mxu0
        %5075 = vmatprep.mubr.f32.mxu0 0.0
        %5076 = vmatmul.mubr.f32.gmra.mrb[0].mxu0 %v4898
        %v5077 = vpop.f32.mrb[0].mxu0
        %v5078 = vadd.f32 0.0, %v5077
        %v5079 = vpop.f32.mrb[0].mxu0
        %5080 = vmatprep.mubr.f32.mxu0 0.0
        %5081 = vmatmul.mubr.f32.gmra.mrb[0].mxu0 %v4899
        %v5082 = vpop.f32.mrb[0].mxu0
        %v5083 = vadd.f32 0.0, %v5082
        %v5084 = vpop.f32.mrb[0].mxu0
        %5085 = vmatprep.mubr.f32.mxu0 0.0
        %5086 = vmatmul.mubr.f32.gmra.mrb[0].mxu0 %v4900
        %v5087 = vpop.f32.mrb[0].mxu0
        %v5088 = vadd.f32 0.0, %v5087
        %v5089 = vpop.f32.mrb[0].mxu0
        %5090 = vmatprep.mubr.f32.mxu0 0.0
        %5091 = vmatmul.mubr.f32.gmra.mrb[0].mxu0 %v4901
        %v5092 = vpop.f32.mrb[0].mxu0
        %v5093 = vadd.f32 0.0, %v5092
        %v5094 = vpop.f32.mrb[0].mxu0
        %5095 = vmatprep.mubr.f32.mxu0 0.0
        %5096 = vmatmul.mubr.f32.gmra.mrb[0].mxu0 %v4902
        %v5097 = vpop.f32.mrb[0].mxu0
        %v5098 = vadd.f32 0.0, %v5097
        %v5099 = vpop.f32.mrb[0].mxu0
        %5100 = vmatprep.mubr.f32.mxu0 0.0
        %5101 = vmatmul.mubr.f32.gmra.mrb[0].mxu0 %v4903
        %v5102 = vpop.f32.mrb[0].mxu0
        %v5103 = vadd.f32 0.0, %v5102
        %v5104 = vpop.f32.mrb[0].mxu0
        %5105 = vmatprep.mubr.f32.mxu0 0.0
        %5106 = vmatmul.mubr.f32.gmra.mrb[0].mxu0 %v4904
        %v5107 = vpop.f32.mrb[0].mxu0
        %v5108 = vadd.f32 0.0, %v5107
        %v5109 = vpop.f32.mrb[0].mxu0
        %5110 = vmatprep.mubr.f32.mxu0 0.0
        %5111 = vmatmul.mubr.f32.gmra.mrb[0].mxu0 %v4905
        %v5112 = vpop.f32.mrb[0].mxu0
        %v5113 = vadd.f32 0.0, %v5112
        %v5114 = vpop.f32.mrb[0].mxu0
        %5115 = vmatprep.mubr.f32.mxu0 0.0
        %5116 = vmatmul.mubr.f32.gmra.mrb[0].mxu0 %v4906
        %v5117 = vpop.f32.mrb[0].mxu0
        %v5118 = vadd.f32 0.0, %v5117
        %v5119 = vpop.f32.mrb[0].mxu0
        %5120 = vmatprep.mubr.f32.mxu0 0.0
        %5121 = vmatmul.mubr.f32.gmra.mrb[0].mxu0 %v4907
        %v5122 = vpop.f32.mrb[0].mxu0
        %v5123 = vadd.f32 0.0, %v5122
        %v5124 = vpop.f32.mrb[0].mxu0
        %5125 = vmatprep.mubr.f32.mxu0 0.0
        %5126 = vmatmul.mubr.f32.gmra.mrb[0].mxu0 %v4908
        %v5127 = vpop.f32.mrb[0].mxu0
        %v5128 = vadd.f32 0.0, %v5127
        %v5129 = vpop.f32.mrb[0].mxu0
        %5130 = vmatprep.mubr.f32.mxu0 0.0
        %5131 = vmatmul.mubr.f32.gmra.mrb[0].mxu0 %v4909
        %v5132 = vpop.f32.mrb[0].mxu0
        %v5133 = vadd.f32 0.0, %v5132
        %v5134 = vpop.f32.mrb[0].mxu0
        %5135 = vmatprep.mubr.f32.mxu0 0.0
        %5136 = vmatmul.mubr.f32.gmra.mrb[0].mxu0 %v4910
        %v5137 = vpop.f32.mrb[0].mxu0
        %v5138 = vadd.f32 0.0, %v5137
        %v5139 = vpop.f32.mrb[0].mxu0
        %5140 = vmatprep.mubr.f32.mxu0 0.0
        %5141 = vmatmul.mubr.f32.gmra.mrb[0].mxu0 %v4911
        %v5142 = vpop.f32.mrb[0].mxu0
        %v5143 = vadd.f32 0.0, %v5142
        %v5144 = vpop.f32.mrb[0].mxu0
        %5145 = vmatprep.mubr.f32.mxu0 0.0
        %5146 = vmatmul.mubr.f32.gmra.mrb[0].mxu0 %v4912
        %v5147 = vpop.f32.mrb[0].mxu0
        %v5148 = vadd.f32 0.0, %v5147
        %v5149 = vpop.f32.mrb[0].mxu0
        %5150 = vmatprep.mubr.f32.mxu0 0.0
        %5151 = vmatmul.mubr.f32.gmra.mrb[0].mxu0 %v4913
        %v5152 = vpop.f32.mrb[0].mxu0
        %v5153 = vadd.f32 0.0, %v5152
        %v5154 = vpop.f32.mrb[0].mxu0
        %5155 = vdwg.mxu0
        %v5156 = vadd.f32 %v4850, %v4998
        %v5157 = vadd.f32 %v4851, %v5003
        %v5158 = vadd.f32 %v4852, %v5008
        %v5159 = vadd.f32 %v4853, %v5013
        %v5160 = vadd.f32 %v4854, %v5018
        %v5161 = vadd.f32 %v4855, %v5023
        %v5162 = vadd.f32 %v4856, %v5028
        %v5163 = vadd.f32 %v4857, %v5033
        %v5164 = vadd.f32 %v4858, %v5038
        %v5165 = vadd.f32 %v4859, %v5043
        %v5166 = vadd.f32 %v4860, %v5048
        %v5167 = vadd.f32 %v4861, %v5053
        %v5168 = vadd.f32 %v4862, %v5058
        %v5169 = vadd.f32 %v4863, %v5063
        %v5170 = vadd.f32 %v4864, %v5068
        %v5171 = vadd.f32 %v4865, %v5073
        %v5172 = vadd.f32 %v4866, %v5078
        %v5173 = vadd.f32 %v4867, %v5083
        %v5174 = vadd.f32 %v4868, %v5088
        %v5175 = vadd.f32 %v4869, %v5093
        %v5176 = vadd.f32 %v4870, %v5098
        %v5177 = vadd.f32 %v4871, %v5103
        %v5178 = vadd.f32 %v4872, %v5108
        %v5179 = vadd.f32 %v4873, %v5113
        %v5180 = vadd.f32 %v4874, %v5118
        %v5181 = vadd.f32 %v4875, %v5123
        %v5182 = vadd.f32 %v4876, %v5128
        %v5183 = vadd.f32 %v4877, %v5133
        %v5184 = vadd.f32 %v4878, %v5138
        %v5185 = vadd.f32 %v4879, %v5143
        %v5186 = vadd.f32 %v4880, %v5148
        %v5187 = vadd.f32 %v4881, %v5153
        %v5188 = vld [vmem:[%s6] sm:$0x1]
        %v5190 = vlaneseq
        %v5191 = vshrl.u32 %v5190, 7
        %v5192 = vsub.s32 0, %v5191
        %v5193 = vrot.slane %v5188, %v5192
        %v5195 = vadd.f32 %v5156, %v5193
        %v5196 = vadd.f32 %v5157, %v5193
        %v5197 = vadd.f32 %v5158, %v5193
        %v5198 = vadd.f32 %v5159, %v5193
        %v5199 = vadd.f32 %v5160, %v5193
        %v5200 = vadd.f32 %v5161, %v5193
        %v5201 = vadd.f32 %v5162, %v5193
        %v5202 = vadd.f32 %v5163, %v5193
        %v5203 = vadd.f32 %v5164, %v5193
        %v5204 = vadd.f32 %v5165, %v5193
        %v5205 = vadd.f32 %v5166, %v5193
        %v5206 = vadd.f32 %v5167, %v5193
        %v5207 = vadd.f32 %v5168, %v5193
        %v5208 = vadd.f32 %v5169, %v5193
        %v5209 = vadd.f32 %v5170, %v5193
        %v5210 = vadd.f32 %v5171, %v5193
        %v5211 = vadd.f32 %v5172, %v5193
        %v5212 = vadd.f32 %v5173, %v5193
        %v5213 = vadd.f32 %v5174, %v5193
        %v5214 = vadd.f32 %v5175, %v5193
        %v5215 = vadd.f32 %v5176, %v5193
        %v5216 = vadd.f32 %v5177, %v5193
        %v5217 = vadd.f32 %v5178, %v5193
        %v5218 = vadd.f32 %v5179, %v5193
        %v5219 = vadd.f32 %v5180, %v5193
        %v5220 = vadd.f32 %v5181, %v5193
        %v5221 = vadd.f32 %v5182, %v5193
        %v5222 = vadd.f32 %v5183, %v5193
        %v5223 = vadd.f32 %v5184, %v5193
        %v5224 = vadd.f32 %v5185, %v5193
        %v5225 = vadd.f32 %v5186, %v5193
        %v5226 = vadd.f32 %v5187, %v5193
        %v5227 = vmax.f32 %v5195, 0.0
        %v5228 = vmax.f32 %v5196, 0.0
        %v5229 = vmax.f32 %v5197, 0.0
        %v5230 = vmax.f32 %v5198, 0.0
        %v5231 = vmax.f32 %v5199, 0.0
        %v5232 = vmax.f32 %v5200, 0.0
        %v5233 = vmax.f32 %v5201, 0.0
        %v5234 = vmax.f32 %v5202, 0.0
        %v5235 = vmax.f32 %v5203, 0.0
        %v5236 = vmax.f32 %v5204, 0.0
        %v5237 = vmax.f32 %v5205, 0.0
        %v5238 = vmax.f32 %v5206, 0.0
        %v5239 = vmax.f32 %v5207, 0.0
        %v5240 = vmax.f32 %v5208, 0.0
        %v5241 = vmax.f32 %v5209, 0.0
        %v5242 = vmax.f32 %v5210, 0.0
        %v5243 = vmax.f32 %v5211, 0.0
        %v5244 = vmax.f32 %v5212, 0.0
        %v5245 = vmax.f32 %v5213, 0.0
        %v5246 = vmax.f32 %v5214, 0.0
        %v5247 = vmax.f32 %v5215, 0.0
        %v5248 = vmax.f32 %v5216, 0.0
        %v5249 = vmax.f32 %v5217, 0.0
        %v5250 = vmax.f32 %v5218, 0.0
        %v5251 = vmax.f32 %v5219, 0.0
        %v5252 = vmax.f32 %v5220, 0.0
        %v5253 = vmax.f32 %v5221, 0.0
        %v5254 = vmax.f32 %v5222, 0.0
        %v5255 = vmax.f32 %v5223, 0.0
        %v5256 = vmax.f32 %v5224, 0.0
        %v5257 = vmax.f32 %v5225, 0.0
        %v5258 = vmax.f32 %v5226, 0.0
        %5259 = vst [vmem:[%s286] sm:$0xff] %v5227
        %5260 = vst [vmem:[%s286 + $0x8] sm:$0xff] %v5228
        %5261 = vst [vmem:[%s286 + $0x10] sm:$0xff] %v5229
        %5262 = vst [vmem:[%s286 + $0x18] sm:$0xff] %v5230
        %5263 = vst [vmem:[%s286 + $0x20] sm:$0xff] %v5231
        %5264 = vst [vmem:[%s286 + $0x28] sm:$0xff] %v5232
        %5265 = vst [vmem:[%s286 + $0x30] sm:$0xff] %v5233
        %5266 = vst [vmem:[%s286 + $0x38] sm:$0xff] %v5234
        %5267 = vst [vmem:[%s286 + $0x40] sm:$0xff] %v5235
        %5268 = vst [vmem:[%s286 + $0x48] sm:$0xff] %v5236
        %5269 = vst [vmem:[%s286 + $0x50] sm:$0xff] %v5237
        %5270 = vst [vmem:[%s286 + $0x58] sm:$0xff] %v5238
        %5271 = vst [vmem:[%s286 + $0x60] sm:$0xff] %v5239
        %5272 = vst [vmem:[%s286 + $0x68] sm:$0xff] %v5240
        %5273 = vst [vmem:[%s286 + $0x70] sm:$0xff] %v5241
        %5274 = vst [vmem:[%s286 + $0x78] sm:$0xff] %v5242
        %5275 = vst [vmem:[%s286 + $0x80] sm:$0xff] %v5243
        %5276 = vst [vmem:[%s286 + $0x88] sm:$0xff] %v5244
        %5277 = vst [vmem:[%s286 + $0x90] sm:$0xff] %v5245
        %5278 = vst [vmem:[%s286 + $0x98] sm:$0xff] %v5246
        %5279 = vst [vmem:[%s286 + $0xa0] sm:$0xff] %v5247
        %5280 = vst [vmem:[%s286 + $0xa8] sm:$0xff] %v5248
        %5281 = vst [vmem:[%s286 + $0xb0] sm:$0xff] %v5249
        %5282 = vst [vmem:[%s286 + $0xb8] sm:$0xff] %v5250
        %5283 = vst [vmem:[%s286 + $0xc0] sm:$0xff] %v5251
        %5284 = vst [vmem:[%s286 + $0xc8] sm:$0xff] %v5252
        %5285 = vst [vmem:[%s286 + $0xd0] sm:$0xff] %v5253
        %5286 = vst [vmem:[%s286 + $0xd8] sm:$0xff] %v5254
        %5287 = vst [vmem:[%s286 + $0xe0] sm:$0xff] %v5255
        %5288 = vst [vmem:[%s286 + $0xe8] sm:$0xff] %v5256
        %5289 = vst [vmem:[%s286 + $0xf0] sm:$0xff] %v5257
        %5290 = vst [vmem:[%s286 + $0xf8] sm:$0xff] %v5258
        %s5291 = sand.u32 %s186, 1
        %s5292 = scalar_lea.sflag [#allocation4], %s5291
        %s5293 = sand.u32 %s186, 1
        %s5294 = smul.addr %s5293, 256
        %s5295 = scalar_lea.vmem [#allocation3], %s5294
        // Predicated region
        $region49: #{basic_block_forward.1} parent=47 // pred_check
          %p5296 = pneg %p196
        $region50: #{basic_block_forward.1} parent=47 // pred_check_branch
          %5298 = sbr.rel (%p5296) target = $region52
        $region51: #{basic_block_forward.1} parent=47 // pred_region
          %s5300 = ssub.s32 4096, 4096
          %5301 = vsyncadd %s5292, %s5300
          %s5302 = smul.addr %s21, 32
          %s5303 = smul.addr %s5302, 128
          %s5304 = scalar_lea.hbm %s7, %s5303
          %s5305 = sshll.u32 %s5295, 4
          %s5306 = int_to_ptr.vmem [resolvable:$true] %s5305
          %5311 = dma.vmem_to_hbm [thread:$0]  %s5306, 4096, %s5304, %s5292, 128, 128, 8
        $region52: #{basic_block_forward.1} parent=47 // pred_fallthru
          _
      $region48: #{basic_block_forward.1} parent=5 // pred_fallthru
        _
      %p5312 = scmp.le.s32.totalorder 2, %s16
      // Predicated region
      $region53: #{basic_block_forward.1} parent=5 // pred_check
        %p5313 = pneg %p5312
      $region54: #{basic_block_forward.1} parent=5 // pred_check_branch
        %5315 = sbr.rel (%p5313) target = $region56
      $region55: #{basic_block_forward.1} parent=5 // pred_region
        %s5316 = ssub.s32 %s16, 2
        // Predicated region
        $region57: #{basic_block_forward.1} parent=55 // pred_check
          %p5317 = pneg %p202
        $region58: #{basic_block_forward.1} parent=55 // pred_check_branch
          %5319 = sbr.rel (%p5317) target = $region60
        $region59: #{basic_block_forward.1} parent=55 // pred_region
          %s5320 = sand.u32 %s187, 1
          %s5321 = scalar_lea.sflag [#allocation4], %s5320
          %s5322 = sand.u32 %s187, 1
          %s5323 = smul.addr %s5322, 256
          %s5324 = scalar_lea.vmem [#allocation3], %s5323
          %5325 = dma.done %s5321, 4096
        $region60: #{basic_block_forward.1} parent=55 // pred_fallthru
          _
      $region56: #{basic_block_forward.1} parent=5 // pred_fallthru
        _
    $region6: #{basic_block_forward.1} parent=1 // loop_footer
      %s20 = sadd.s32 1, %s16
    $region7: #{basic_block_forward.1} parent=1 // loop_footer_branch
      %15 = sbr.rel target = $region3
    $region8: #{basic_block_forward.1} parent=1 // loop_exit
      _
    %5326 = vsyncpa [#allocation4], 1
    %s5327 = scalar_lea.sflag [#allocation4], 1
    %5328 = vsyncpa %s5327, 1

</llo_original>
